<compile_context>
chip_gen: v6e
topology: v6e:2x2x1
jax: 0.10.0
libtpu: 0.0.40
codegen_flags: <defaults>
</compile_context>

<pallas_src>
import functools

import numpy as np

import jax
import jax.numpy as jnp
from jax.experimental import pallas as pl
from jax.experimental.pallas import tpu as pltpu


LANE = 128  # TPU lane width; channel dims are zero-padded to this


# ------------------------------ Pallas kernel -------------------------------

def _make_layer_kernel(xs2d_ref, wd_ref, wres_ref, aff_ref, o_ref, pad_ref,
                       *, n, hp, wp, residual):
    """Whole MakeLayer forward on VMEM-resident data.

    xs2d_ref : (n, hp+1, wp+1, 4*cin)  space-to-depth padded input
    wd_ref   : (4, 4*cin, 4*LANE)      fused conv1+pool "super conv" weights
    wres_ref : (2, 9, LANE, LANE)      residual conv weights (BN scale folded in)
    aff_ref  : (4, LANE)               [down scale, down shift, res1 shift, res2 shift]
    o_ref    : (n*hp*wp, LANE)         output (lane-dense)
    pad_ref  : (n, hp+2, wp+2, LANE)   scratch: zero-padded activation for res convs
    """
    lane = o_ref.shape[-1]
    m = n * hp * wp
    cin4 = xs2d_ref.shape[-1]

    # --- DownsampleLayer: conv(3x3, s1, p1) + maxpool(2) as a stride-2 super
    #     conv over the space-to-depth input.  Lane block q = 2*pi + pj of the
    #     accumulator holds the conv output at pool offset (pi, pj).
    acc = jnp.zeros((m, 4 * lane), jnp.float32)
    for ta in range(2):
        for tb in range(2):
            patch = xs2d_ref[:, ta:ta + hp, tb:tb + wp, :].reshape(m, cin4)
            acc = acc + jnp.dot(patch, wd_ref[2 * ta + tb, :, :],
                                preferred_element_type=jnp.float32)

    # maxpool(2x2) == max over the 4 lane blocks (slices at multiples of 128).
    pooled = jnp.maximum(
        jnp.maximum(acc[:, 0:lane], acc[:, lane:2 * lane]),
        jnp.maximum(acc[:, 2 * lane:3 * lane], acc[:, 3 * lane:4 * lane]))

    # eval-mode BN (scale applied post-pool; bias folded into shift) + ReLU.
    y0 = jnp.maximum(pooled * aff_ref[0:1, :] + aff_ref[1:2, :], 0.0)

    if not residual:
        o_ref[...] = y0
        return

    # --- ResidualBlock: two ConvBlocks (conv -> BN -> ReLU), then += residual.
    pad_ref[...] = jnp.zeros_like(pad_ref)          # zero border, once
    y = y0
    for r in range(2):
        pad_ref[:, 1:1 + hp, 1:1 + wp, :] = y.reshape(n, hp, wp, lane)
        acc_r = jnp.zeros((m, lane), jnp.float32)
        for ki in range(3):
            for kj in range(3):
                patch = pad_ref[:, ki:ki + hp, kj:kj + wp, :].reshape(m, lane)
                acc_r = acc_r + jnp.dot(patch, wres_ref[r, ki * 3 + kj, :, :],
                                        preferred_element_type=jnp.float32)
        y = jnp.maximum(acc_r + aff_ref[2 + r:3 + r, :], 0.0)

    o_ref[...] = y + y0


# --------------------------- parameter packing (host) ------------------------

def _bn_scale_shift(p, eps=1e-5):
    s = np.asarray(p["gamma"], np.float32) / np.sqrt(
        np.asarray(p["var"], np.float32) + eps)
    t = (np.asarray(p["b"], np.float32) - np.asarray(p["mean"], np.float32)) * s \
        + np.asarray(p["beta"], np.float32)
    return s, t


def pack_params(params, residual_block=True):
    """One-time host-side folding/packing (kernel_size=3, stride=1, padding=1)."""
    pd = params["down"]
    w = np.asarray(pd["w"], np.float32)                  # (3, 3, cin, cout) HWIO
    kh, kw, cin, cout = w.shape
    assert (kh, kw) == (3, 3) and cout <= LANE

    # DownsampleLayer: fuse conv + maxpool into a stride-2 4x4 "super conv"
    # acting on the space-to-depth input; pool candidate q=2*pi+pj goes to lane
    # block [q*LANE, q*LANE+cout).
    w_down = np.zeros((4, 4 * cin, 4 * LANE), np.float32)
    for pi in range(2):
        for pj in range(2):
            q = 2 * pi + pj
            for ta in range(2):
                for tb in range(2):
                    for da in range(2):
                        for db in range(2):
                            ki, kj = 2 * ta + da - pi, 2 * tb + db - pj
                            if 0 <= ki < 3 and 0 <= kj < 3:
                                r0 = da * 2 * cin + db * cin
                                w_down[2 * ta + tb, r0:r0 + cin,
                                       q * LANE:q * LANE + cout] = w[ki, kj]
    s_d, t_d = _bn_scale_shift(pd)

    w_res = np.zeros((2, 9, LANE, LANE), np.float32)
    affine = np.zeros((4, LANE), np.float32)
    affine[0, :] = 1.0                 # padded channels: scale 1, shift 0 -> stay 0
    affine[0, :cout] = s_d
    affine[1, :cout] = t_d
    if residual_block:
        for r, name in enumerate(("res1", "res2")):
            pr = params[name]
            wr = np.asarray(pr["w"], np.float32)          # (3, 3, cout, cout)
            s_r, t_r = _bn_scale_shift(pr)
            w_res[r, :, :cout, :cout] = (
                wr * s_r[None, None, None, :]).reshape(9, cout, cout)
            affine[2 + r, :cout] = t_r

    return {"w_down": jnp.asarray(w_down),
            "w_res": jnp.asarray(w_res),
            "affine": jnp.asarray(affine)}


# ------------------------------- forward wrapper -----------------------------

def make_layer_forward(x_nchw, packed, *, cout, residual_block=True):
    """MakeLayer forward (eval mode). Expects packed params from pack_params."""
    x = jnp.transpose(x_nchw, (0, 2, 3, 1)).astype(jnp.float32)   # NHWC
    n, h, w, cin = x.shape
    assert h % 2 == 0 and w % 2 == 0
    hp, wp = h // 2, w // 2

    # pad=1 then space-to-depth(2): (n, h+2, w+2, cin) -> (n, hp+1, wp+1, 4*cin)
    xp = jnp.pad(x, ((0, 0), (1, 1), (1, 1), (0, 0)))
    xs2d = xp.reshape(n, hp + 1, 2, wp + 1, 2, cin)
    xs2d = xs2d.transpose(0, 1, 3, 2, 4, 5).reshape(n, hp + 1, wp + 1, 4 * cin)

    m = n * hp * wp
    kernel = functools.partial(_make_layer_kernel, n=n, hp=hp, wp=wp,
                               residual=residual_block)
    out2d = pl.pallas_call(
        kernel,
        out_shape=jax.ShapeDtypeStruct((m, LANE), jnp.float32),
        in_specs=[pl.BlockSpec(memory_space=pltpu.MemorySpace.VMEM)] * 4,
        out_specs=pl.BlockSpec(memory_space=pltpu.MemorySpace.VMEM),
        scratch_shapes=[pltpu.VMEM((n, hp + 2, wp + 2, LANE), jnp.float32)],
    )(xs2d, packed["w_down"], packed["w_res"], packed["affine"])

    y = out2d[:, :cout].reshape(n, hp, wp, cout)
    return jnp.transpose(y, (0, 3, 1, 2))                         # back to NCHW


# -------------------------- parameter construction --------------------------

def _make_conv_bn_params(key, cin, cout, k):
    k1, k2, k3, k4, k5, k6 = jax.random.split(key, 6)
    return {
        "w": 0.1 * jax.random.normal(k1, (k, k, cin, cout), jnp.float32),
        "b": 0.1 * jax.random.normal(k2, (cout,), jnp.float32),
        "gamma": 1.0 + 0.1 * jax.random.normal(k3, (cout,), jnp.float32),
        "beta": 0.1 * jax.random.normal(k4, (cout,), jnp.float32),
        "mean": 0.1 * jax.random.normal(k5, (cout,), jnp.float32),
        "var": jnp.abs(jax.random.normal(k6, (cout,), jnp.float32)) + 0.5,
    }


# --------------------------- pure-JAX reference -----------------------------

def _ref_conv(x, p, stride, padding):
    return jax.lax.conv_general_dilated(
        x, p["w"], window_strides=(stride, stride),
        padding=[(padding, padding), (padding, padding)],
        dimension_numbers=("NHWC", "HWIO", "NHWC")) + p["b"]


def _ref_bn_relu(x, p, eps=1e-5):
    y = (x - p["mean"]) / jnp.sqrt(p["var"] + eps) * p["gamma"] + p["beta"]
    return jnp.maximum(y, 0.0)


def make_layer_reference(x_nchw, params, stride, padding, residual_block=True):
    x = jnp.transpose(x_nchw, (0, 2, 3, 1)).astype(jnp.float32)
    y = _ref_conv(x, params["down"], stride, padding)
    y = jax.lax.reduce_window(y, -jnp.inf, jax.lax.max,
                              (1, 2, 2, 1), (1, 2, 2, 1), "VALID")
    y = _ref_bn_relu(y, params["down"])
    if residual_block:
        r = y
        o = _ref_bn_relu(_ref_conv(y, params["res1"], stride, padding), params["res1"])
        o = _ref_bn_relu(_ref_conv(o, params["res2"], stride, padding), params["res2"])
        y = o + r
    return jnp.transpose(y, (0, 3, 1, 2))


# --------------------------------- main -------------------------------------

if __name__ == "__main__":
    # MakeLayer(in_channels=4, out_channels=8, kernel_size=3, stride=1,
    #           padding=1, residual_block=True)
    N, CIN, H, W = 2, 4, 16, 16
    COUT, K, STRIDE, PAD = 8, 3, 1, 1

    key = jax.random.PRNGKey(0)
    kx, kd, kr1, kr2 = jax.random.split(key, 4)
    x = jax.random.normal(kx, (N, CIN, H, W), jnp.float32)

    params = {
        "down": _make_conv_bn_params(kd, CIN, COUT, K),
        "res1": _make_conv_bn_params(kr1, COUT, COUT, K),
        "res2": _make_conv_bn_params(kr2, COUT, COUT, K),
    }

    packed = pack_params(params, residual_block=True)   # one-time host-side prep
    fwd = jax.jit(functools.partial(make_layer_forward,
                                    cout=COUT, residual_block=True))
    out = fwd(x, packed)
    jax.block_until_ready(out)

    ref = make_layer_reference(x, params, STRIDE, PAD, residual_block=True)
    assert out.shape == (N, COUT, H // 2, W // 2), out.shape
    assert jnp.allclose(out, ref, atol=1e-4, rtol=1e-4), \
        float(jnp.max(jnp.abs(out - ref)))

    print("KERNEL_OK")
</pallas_src>

<mosaic_0001>
module attributes {stable_mosaic.version = 11 : i64} {
  func.func @_make_layer_kernel(%arg0: memref<2x9x9x16xf32, #tpu.memory_space<vmem>>, %arg1: memref<4x16x512xf32, #tpu.memory_space<vmem>>, %arg2: memref<2x9x128x128xf32, #tpu.memory_space<vmem>>, %arg3: memref<4x128xf32, #tpu.memory_space<vmem>>, %arg4: memref<128x128xf32, #tpu.memory_space<vmem>>, %arg5: memref<2x10x10x128xf32, #tpu.memory_space<vmem>>) attributes {dimension_semantics = [], scalar_prefetch = 0 : i64, scratch_operands = 1 : i64, tpu.core_type = #tpu.core_type<tc>} {
    %cst = arith.constant 0.000000e+00 : f32
    %0 = vector.broadcast %cst : f32 to vector<128x512xf32>
    %c0 = arith.constant 0 : index
    %c0_0 = arith.constant 0 : index
    %c0_1 = arith.constant 0 : index
    %c0_2 = arith.constant 0 : index
    %1 = vector.load %arg0[%c0, %c0_0, %c0_1, %c0_2] : memref<2x9x9x16xf32, #tpu.memory_space<vmem>>, vector<2x8x8x16xf32>
    %2 = vector.shape_cast %1 : vector<2x8x8x16xf32> to vector<128x16xf32>
    %c0_3 = arith.constant 0 : index
    %c0_4 = arith.constant 0 : index
    %c0_5 = arith.constant 0 : index
    %3 = vector.load %arg1[%c0_3, %c0_4, %c0_5] : memref<4x16x512xf32, #tpu.memory_space<vmem>>, vector<1x16x512xf32>
    %4 = vector.shape_cast %3 : vector<1x16x512xf32> to vector<16x512xf32>
    %cst_6 = arith.constant dense<0.000000e+00> : vector<128x512xf32>
    %5 = tpu.matmul %2, %4, %cst_6 {dimension_numbers = #tpu.dot_dimension_numbers<[1], [0], [0], [1], [0, 0, 1, 1], [], []>} : vector<128x16xf32>, vector<16x512xf32>, vector<128x512xf32> -> vector<128x512xf32>
    %6 = arith.addf %0, %5 : vector<128x512xf32>
    %c0_7 = arith.constant 0 : index
    %c0_8 = arith.constant 0 : index
    %c1 = arith.constant 1 : index
    %c0_9 = arith.constant 0 : index
    %7 = vector.load %arg0[%c0_7, %c0_8, %c1, %c0_9] : memref<2x9x9x16xf32, #tpu.memory_space<vmem>>, vector<2x8x8x16xf32>
    %8 = vector.shape_cast %7 : vector<2x8x8x16xf32> to vector<128x16xf32>
    %c1_10 = arith.constant 1 : index
    %c0_11 = arith.constant 0 : index
    %c0_12 = arith.constant 0 : index
    %9 = vector.load %arg1[%c1_10, %c0_11, %c0_12] : memref<4x16x512xf32, #tpu.memory_space<vmem>>, vector<1x16x512xf32>
    %10 = vector.shape_cast %9 : vector<1x16x512xf32> to vector<16x512xf32>
    %cst_13 = arith.constant dense<0.000000e+00> : vector<128x512xf32>
    %11 = tpu.matmul %8, %10, %cst_13 {dimension_numbers = #tpu.dot_dimension_numbers<[1], [0], [0], [1], [0, 0, 1, 1], [], []>} : vector<128x16xf32>, vector<16x512xf32>, vector<128x512xf32> -> vector<128x512xf32>
    %12 = arith.addf %6, %11 : vector<128x512xf32>
    %c0_14 = arith.constant 0 : index
    %c1_15 = arith.constant 1 : index
    %c0_16 = arith.constant 0 : index
    %c0_17 = arith.constant 0 : index
    %13 = vector.load %arg0[%c0_14, %c1_15, %c0_16, %c0_17] : memref<2x9x9x16xf32, #tpu.memory_space<vmem>>, vector<2x8x8x16xf32>
    %14 = vector.shape_cast %13 : vector<2x8x8x16xf32> to vector<128x16xf32>
    %c2 = arith.constant 2 : index
    %c0_18 = arith.constant 0 : index
    %c0_19 = arith.constant 0 : index
    %15 = vector.load %arg1[%c2, %c0_18, %c0_19] : memref<4x16x512xf32, #tpu.memory_space<vmem>>, vector<1x16x512xf32>
    %16 = vector.shape_cast %15 : vector<1x16x512xf32> to vector<16x512xf32>
    %cst_20 = arith.constant dense<0.000000e+00> : vector<128x512xf32>
    %17 = tpu.matmul %14, %16, %cst_20 {dimension_numbers = #tpu.dot_dimension_numbers<[1], [0], [0], [1], [0, 0, 1, 1], [], []>} : vector<128x16xf32>, vector<16x512xf32>, vector<128x512xf32> -> vector<128x512xf32>
    %18 = arith.addf %12, %17 : vector<128x512xf32>
    %c0_21 = arith.constant 0 : index
    %c1_22 = arith.constant 1 : index
    %c1_23 = arith.constant 1 : index
    %c0_24 = arith.constant 0 : index
    %19 = vector.load %arg0[%c0_21, %c1_22, %c1_23, %c0_24] : memref<2x9x9x16xf32, #tpu.memory_space<vmem>>, vector<2x8x8x16xf32>
    %20 = vector.shape_cast %19 : vector<2x8x8x16xf32> to vector<128x16xf32>
    %c3 = arith.constant 3 : index
    %c0_25 = arith.constant 0 : index
    %c0_26 = arith.constant 0 : index
    %21 = vector.load %arg1[%c3, %c0_25, %c0_26] : memref<4x16x512xf32, #tpu.memory_space<vmem>>, vector<1x16x512xf32>
    %22 = vector.shape_cast %21 : vector<1x16x512xf32> to vector<16x512xf32>
    %cst_27 = arith.constant dense<0.000000e+00> : vector<128x512xf32>
    %23 = tpu.matmul %20, %22, %cst_27 {dimension_numbers = #tpu.dot_dimension_numbers<[1], [0], [0], [1], [0, 0, 1, 1], [], []>} : vector<128x16xf32>, vector<16x512xf32>, vector<128x512xf32> -> vector<128x512xf32>
    %24 = arith.addf %18, %23 : vector<128x512xf32>
    %25 = vector.extract_strided_slice %24 {offsets = [0, 0], sizes = [128, 128], strides = [1, 1]} : vector<128x512xf32> to vector<128x128xf32>
    %26 = vector.extract_strided_slice %24 {offsets = [0, 128], sizes = [128, 128], strides = [1, 1]} : vector<128x512xf32> to vector<128x128xf32>
    %27 = arith.maximumf %25, %26 : vector<128x128xf32>
    %28 = vector.extract_strided_slice %24 {offsets = [0, 256], sizes = [128, 128], strides = [1, 1]} : vector<128x512xf32> to vector<128x128xf32>
    %29 = vector.extract_strided_slice %24 {offsets = [0, 384], sizes = [128, 128], strides = [1, 1]} : vector<128x512xf32> to vector<128x128xf32>
    %30 = arith.maximumf %28, %29 : vector<128x128xf32>
    %31 = arith.maximumf %27, %30 : vector<128x128xf32>
    %c0_28 = arith.constant 0 : index
    %c0_29 = arith.constant 0 : index
    %32 = vector.load %arg3[%c0_28, %c0_29] : memref<4x128xf32, #tpu.memory_space<vmem>>, vector<1x128xf32>
    %33 = vector.broadcast %32 : vector<1x128xf32> to vector<128x128xf32>
    %34 = arith.mulf %31, %33 : vector<128x128xf32>
    %c1_30 = arith.constant 1 : index
    %c0_31 = arith.constant 0 : index
    %35 = vector.load %arg3[%c1_30, %c0_31] : memref<4x128xf32, #tpu.memory_space<vmem>>, vector<1x128xf32>
    %36 = vector.broadcast %35 : vector<1x128xf32> to vector<128x128xf32>
    %37 = arith.addf %34, %36 : vector<128x128xf32>
    %cst_32 = arith.constant 0.000000e+00 : f32
    %38 = vector.broadcast %cst_32 : f32 to vector<128x128xf32>
    %39 = arith.maximumf %37, %38 : vector<128x128xf32>
    %cst_33 = arith.constant 0.000000e+00 : f32
    %40 = vector.broadcast %cst_33 : f32 to vector<2x10x10x128xf32>
    %c0_34 = arith.constant 0 : index
    %c0_35 = arith.constant 0 : index
    %c0_36 = arith.constant 0 : index
    %c0_37 = arith.constant 0 : index
    %41 = vector.load %arg5[%c0_34, %c0_35, %c0_36, %c0_37] : memref<2x10x10x128xf32, #tpu.memory_space<vmem>>, vector<2x10x10x128xf32>
    tpu.vector_store %arg5[%c0_34, %c0_35, %c0_36, %c0_37], %40 {strides = array<i32>} : memref<2x10x10x128xf32, #tpu.memory_space<vmem>>, vector<2x10x10x128xf32>,
    %42 = vector.shape_cast %39 : vector<128x128xf32> to vector<2x8x8x128xf32>
    %c0_38 = arith.constant 0 : index
    %c1_39 = arith.constant 1 : index
    %c1_40 = arith.constant 1 : index
    %c0_41 = arith.constant 0 : index
    %43 = vector.load %arg5[%c0_38, %c1_39, %c1_40, %c0_41] : memref<2x10x10x128xf32, #tpu.memory_space<vmem>>, vector<2x8x8x128xf32>
    tpu.vector_store %arg5[%c0_38, %c1_39, %c1_40, %c0_41], %42 {strides = array<i32>} : memref<2x10x10x128xf32, #tpu.memory_space<vmem>>, vector<2x8x8x128xf32>,
    %cst_42 = arith.constant 0.000000e+00 : f32
    %44 = vector.broadcast %cst_42 : f32 to vector<128x128xf32>
    %c0_43 = arith.constant 0 : index
    %c0_44 = arith.constant 0 : index
    %c0_45 = arith.constant 0 : index
    %c0_46 = arith.constant 0 : index
    %45 = vector.load %arg5[%c0_43, %c0_44, %c0_45, %c0_46] : memref<2x10x10x128xf32, #tpu.memory_space<vmem>>, vector<2x8x8x128xf32>
    %46 = vector.shape_cast %45 : vector<2x8x8x128xf32> to vector<128x128xf32>
    %c0_47 = arith.constant 0 : index
    %c0_48 = arith.constant 0 : index
    %c0_49 = arith.constant 0 : index
    %c0_50 = arith.constant 0 : index
    %47 = vector.load %arg2[%c0_47, %c0_48, %c0_49, %c0_50] : memref<2x9x128x128xf32, #tpu.memory_space<vmem>>, vector<1x1x128x128xf32>
    %48 = vector.shape_cast %47 : vector<1x1x128x128xf32> to vector<128x128xf32>
    %cst_51 = arith.constant dense<0.000000e+00> : vector<128x128xf32>
    %49 = tpu.matmul %46, %48, %cst_51 {dimension_numbers = #tpu.dot_dimension_numbers<[1], [0], [0], [1], [0, 0, 1, 1], [], []>} : vector<128x128xf32>, vector<128x128xf32>, vector<128x128xf32> -> vector<128x128xf32>
    %50 = arith.addf %44, %49 : vector<128x128xf32>
    %c0_52 = arith.constant 0 : index
    %c0_53 = arith.constant 0 : index
    %c1_54 = arith.constant 1 : index
    %c0_55 = arith.constant 0 : index
    %51 = vector.load %arg5[%c0_52, %c0_53, %c1_54, %c0_55] : memref<2x10x10x128xf32, #tpu.memory_space<vmem>>, vector<2x8x8x128xf32>
    %52 = vector.shape_cast %51 : vector<2x8x8x128xf32> to vector<128x128xf32>
    %c0_56 = arith.constant 0 : index
    %c1_57 = arith.constant 1 : index
    %c0_58 = arith.constant 0 : index
    %c0_59 = arith.constant 0 : index
    %53 = vector.load %arg2[%c0_56, %c1_57, %c0_58, %c0_59] : memref<2x9x128x128xf32, #tpu.memory_space<vmem>>, vector<1x1x128x128xf32>
    %54 = vector.shape_cast %53 : vector<1x1x128x128xf32> to vector<128x128xf32>
    %cst_60 = arith.constant dense<0.000000e+00> : vector<128x128xf32>
    %55 = tpu.matmul %52, %54, %cst_60 {dimension_numbers = #tpu.dot_dimension_numbers<[1], [0], [0], [1], [0, 0, 1, 1], [], []>} : vector<128x128xf32>, vector<128x128xf32>, vector<128x128xf32> -> vector<128x128xf32>
    %56 = arith.addf %50, %55 : vector<128x128xf32>
    %c0_61 = arith.constant 0 : index
    %c0_62 = arith.constant 0 : index
    %c2_63 = arith.constant 2 : index
    %c0_64 = arith.constant 0 : index
    %57 = vector.load %arg5[%c0_61, %c0_62, %c2_63, %c0_64] : memref<2x10x10x128xf32, #tpu.memory_space<vmem>>, vector<2x8x8x128xf32>
    %58 = vector.shape_cast %57 : vector<2x8x8x128xf32> to vector<128x128xf32>
    %c0_65 = arith.constant 0 : index
    %c2_66 = arith.constant 2 : index
    %c0_67 = arith.constant 0 : index
    %c0_68 = arith.constant 0 : index
    %59 = vector.load %arg2[%c0_65, %c2_66, %c0_67, %c0_68] : memref<2x9x128x128xf32, #tpu.memory_space<vmem>>, vector<1x1x128x128xf32>
    %60 = vector.shape_cast %59 : vector<1x1x128x128xf32> to vector<128x128xf32>
    %cst_69 = arith.constant dense<0.000000e+00> : vector<128x128xf32>
    %61 = tpu.matmul %58, %60, %cst_69 {dimension_numbers = #tpu.dot_dimension_numbers<[1], [0], [0], [1], [0, 0, 1, 1], [], []>} : vector<128x128xf32>, vector<128x128xf32>, vector<128x128xf32> -> vector<128x128xf32>
    %62 = arith.addf %56, %61 : vector<128x128xf32>
    %c0_70 = arith.constant 0 : index
    %c1_71 = arith.constant 1 : index
    %c0_72 = arith.constant 0 : index
    %c0_73 = arith.constant 0 : index
    %63 = vector.load %arg5[%c0_70, %c1_71, %c0_72, %c0_73] : memref<2x10x10x128xf32, #tpu.memory_space<vmem>>, vector<2x8x8x128xf32>
    %64 = vector.shape_cast %63 : vector<2x8x8x128xf32> to vector<128x128xf32>
    %c0_74 = arith.constant 0 : index
    %c3_75 = arith.constant 3 : index
    %c0_76 = arith.constant 0 : index
    %c0_77 = arith.constant 0 : index
    %65 = vector.load %arg2[%c0_74, %c3_75, %c0_76, %c0_77] : memref<2x9x128x128xf32, #tpu.memory_space<vmem>>, vector<1x1x128x128xf32>
    %66 = vector.shape_cast %65 : vector<1x1x128x128xf32> to vector<128x128xf32>
    %cst_78 = arith.constant dense<0.000000e+00> : vector<128x128xf32>
    %67 = tpu.matmul %64, %66, %cst_78 {dimension_numbers = #tpu.dot_dimension_numbers<[1], [0], [0], [1], [0, 0, 1, 1], [], []>} : vector<128x128xf32>, vector<128x128xf32>, vector<128x128xf32> -> vector<128x128xf32>
    %68 = arith.addf %62, %67 : vector<128x128xf32>
    %c0_79 = arith.constant 0 : index
    %c1_80 = arith.constant 1 : index
    %c1_81 = arith.constant 1 : index
    %c0_82 = arith.constant 0 : index
    %69 = vector.load %arg5[%c0_79, %c1_80, %c1_81, %c0_82] : memref<2x10x10x128xf32, #tpu.memory_space<vmem>>, vector<2x8x8x128xf32>
    %70 = vector.shape_cast %69 : vector<2x8x8x128xf32> to vector<128x128xf32>
    %c0_83 = arith.constant 0 : index
    %c4 = arith.constant 4 : index
    %c0_84 = arith.constant 0 : index
    %c0_85 = arith.constant 0 : index
    %71 = vector.load %arg2[%c0_83, %c4, %c0_84, %c0_85] : memref<2x9x128x128xf32, #tpu.memory_space<vmem>>, vector<1x1x128x128xf32>
    %72 = vector.shape_cast %71 : vector<1x1x128x128xf32> to vector<128x128xf32>
    %cst_86 = arith.constant dense<0.000000e+00> : vector<128x128xf32>
    %73 = tpu.matmul %70, %72, %cst_86 {dimension_numbers = #tpu.dot_dimension_numbers<[1], [0], [0], [1], [0, 0, 1, 1], [], []>} : vector<128x128xf32>, vector<128x128xf32>, vector<128x128xf32> -> vector<128x128xf32>
    %74 = arith.addf %68, %73 : vector<128x128xf32>
    %c0_87 = arith.constant 0 : index
    %c1_88 = arith.constant 1 : index
    %c2_89 = arith.constant 2 : index
    %c0_90 = arith.constant 0 : index
    %75 = vector.load %arg5[%c0_87, %c1_88, %c2_89, %c0_90] : memref<2x10x10x128xf32, #tpu.memory_space<vmem>>, vector<2x8x8x128xf32>
    %76 = vector.shape_cast %75 : vector<2x8x8x128xf32> to vector<128x128xf32>
    %c0_91 = arith.constant 0 : index
    %c5 = arith.constant 5 : index
    %c0_92 = arith.constant 0 : index
    %c0_93 = arith.constant 0 : index
    %77 = vector.load %arg2[%c0_91, %c5, %c0_92, %c0_93] : memref<2x9x128x128xf32, #tpu.memory_space<vmem>>, vector<1x1x128x128xf32>
    %78 = vector.shape_cast %77 : vector<1x1x128x128xf32> to vector<128x128xf32>
    %cst_94 = arith.constant dense<0.000000e+00> : vector<128x128xf32>
    %79 = tpu.matmul %76, %78, %cst_94 {dimension_numbers = #tpu.dot_dimension_numbers<[1], [0], [0], [1], [0, 0, 1, 1], [], []>} : vector<128x128xf32>, vector<128x128xf32>, vector<128x128xf32> -> vector<128x128xf32>
    %80 = arith.addf %74, %79 : vector<128x128xf32>
    %c0_95 = arith.constant 0 : index
    %c2_96 = arith.constant 2 : index
    %c0_97 = arith.constant 0 : index
    %c0_98 = arith.constant 0 : index
    %81 = vector.load %arg5[%c0_95, %c2_96, %c0_97, %c0_98] : memref<2x10x10x128xf32, #tpu.memory_space<vmem>>, vector<2x8x8x128xf32>
    %82 = vector.shape_cast %81 : vector<2x8x8x128xf32> to vector<128x128xf32>
    %c0_99 = arith.constant 0 : index
    %c6 = arith.constant 6 : index
    %c0_100 = arith.constant 0 : index
    %c0_101 = arith.constant 0 : index
    %83 = vector.load %arg2[%c0_99, %c6, %c0_100, %c0_101] : memref<2x9x128x128xf32, #tpu.memory_space<vmem>>, vector<1x1x128x128xf32>
    %84 = vector.shape_cast %83 : vector<1x1x128x128xf32> to vector<128x128xf32>
    %cst_102 = arith.constant dense<0.000000e+00> : vector<128x128xf32>
    %85 = tpu.matmul %82, %84, %cst_102 {dimension_numbers = #tpu.dot_dimension_numbers<[1], [0], [0], [1], [0, 0, 1, 1], [], []>} : vector<128x128xf32>, vector<128x128xf32>, vector<128x128xf32> -> vector<128x128xf32>
    %86 = arith.addf %80, %85 : vector<128x128xf32>
    %c0_103 = arith.constant 0 : index
    %c2_104 = arith.constant 2 : index
    %c1_105 = arith.constant 1 : index
    %c0_106 = arith.constant 0 : index
    %87 = vector.load %arg5[%c0_103, %c2_104, %c1_105, %c0_106] : memref<2x10x10x128xf32, #tpu.memory_space<vmem>>, vector<2x8x8x128xf32>
    %88 = vector.shape_cast %87 : vector<2x8x8x128xf32> to vector<128x128xf32>
    %c0_107 = arith.constant 0 : index
    %c7 = arith.constant 7 : index
    %c0_108 = arith.constant 0 : index
    %c0_109 = arith.constant 0 : index
    %89 = vector.load %arg2[%c0_107, %c7, %c0_108, %c0_109] : memref<2x9x128x128xf32, #tpu.memory_space<vmem>>, vector<1x1x128x128xf32>
    %90 = vector.shape_cast %89 : vector<1x1x128x128xf32> to vector<128x128xf32>
    %cst_110 = arith.constant dense<0.000000e+00> : vector<128x128xf32>
    %91 = tpu.matmul %88, %90, %cst_110 {dimension_numbers = #tpu.dot_dimension_numbers<[1], [0], [0], [1], [0, 0, 1, 1], [], []>} : vector<128x128xf32>, vector<128x128xf32>, vector<128x128xf32> -> vector<128x128xf32>
    %92 = arith.addf %86, %91 : vector<128x128xf32>
    %c0_111 = arith.constant 0 : index
    %c2_112 = arith.constant 2 : index
    %c2_113 = arith.constant 2 : index
    %c0_114 = arith.constant 0 : index
    %93 = vector.load %arg5[%c0_111, %c2_112, %c2_113, %c0_114] : memref<2x10x10x128xf32, #tpu.memory_space<vmem>>, vector<2x8x8x128xf32>
    %94 = vector.shape_cast %93 : vector<2x8x8x128xf32> to vector<128x128xf32>
    %c0_115 = arith.constant 0 : index
    %c8 = arith.constant 8 : index
    %c0_116 = arith.constant 0 : index
    %c0_117 = arith.constant 0 : index
    %95 = vector.load %arg2[%c0_115, %c8, %c0_116, %c0_117] : memref<2x9x128x128xf32, #tpu.memory_space<vmem>>, vector<1x1x128x128xf32>
    %96 = vector.shape_cast %95 : vector<1x1x128x128xf32> to vector<128x128xf32>
    %cst_118 = arith.constant dense<0.000000e+00> : vector<128x128xf32>
    %97 = tpu.matmul %94, %96, %cst_118 {dimension_numbers = #tpu.dot_dimension_numbers<[1], [0], [0], [1], [0, 0, 1, 1], [], []>} : vector<128x128xf32>, vector<128x128xf32>, vector<128x128xf32> -> vector<128x128xf32>
    %98 = arith.addf %92, %97 : vector<128x128xf32>
    %c2_119 = arith.constant 2 : index
    %c0_120 = arith.constant 0 : index
    %99 = vector.load %arg3[%c2_119, %c0_120] : memref<4x128xf32, #tpu.memory_space<vmem>>, vector<1x128xf32>
    %100 = vector.broadcast %99 : vector<1x128xf32> to vector<128x128xf32>
    %101 = arith.addf %98, %100 : vector<128x128xf32>
    %cst_121 = arith.constant 0.000000e+00 : f32
    %102 = vector.broadcast %cst_121 : f32 to vector<128x128xf32>
    %103 = arith.maximumf %101, %102 : vector<128x128xf32>
    %104 = vector.shape_cast %103 : vector<128x128xf32> to vector<2x8x8x128xf32>
    %c0_122 = arith.constant 0 : index
    %c1_123 = arith.constant 1 : index
    %c1_124 = arith.constant 1 : index
    %c0_125 = arith.constant 0 : index
    %105 = vector.load %arg5[%c0_122, %c1_123, %c1_124, %c0_125] : memref<2x10x10x128xf32, #tpu.memory_space<vmem>>, vector<2x8x8x128xf32>
    tpu.vector_store %arg5[%c0_122, %c1_123, %c1_124, %c0_125], %104 {strides = array<i32>} : memref<2x10x10x128xf32, #tpu.memory_space<vmem>>, vector<2x8x8x128xf32>,
    %cst_126 = arith.constant 0.000000e+00 : f32
    %106 = vector.broadcast %cst_126 : f32 to vector<128x128xf32>
    %c0_127 = arith.constant 0 : index
    %c0_128 = arith.constant 0 : index
    %c0_129 = arith.constant 0 : index
    %c0_130 = arith.constant 0 : index
    %107 = vector.load %arg5[%c0_127, %c0_128, %c0_129, %c0_130] : memref<2x10x10x128xf32, #tpu.memory_space<vmem>>, vector<2x8x8x128xf32>
    %108 = vector.shape_cast %107 : vector<2x8x8x128xf32> to vector<128x128xf32>
    %c1_131 = arith.constant 1 : index
    %c0_132 = arith.constant 0 : index
    %c0_133 = arith.constant 0 : index
    %c0_134 = arith.constant 0 : index
    %109 = vector.load %arg2[%c1_131, %c0_132, %c0_133, %c0_134] : memref<2x9x128x128xf32, #tpu.memory_space<vmem>>, vector<1x1x128x128xf32>
    %110 = vector.shape_cast %109 : vector<1x1x128x128xf32> to vector<128x128xf32>
    %cst_135 = arith.constant dense<0.000000e+00> : vector<128x128xf32>
    %111 = tpu.matmul %108, %110, %cst_135 {dimension_numbers = #tpu.dot_dimension_numbers<[1], [0], [0], [1], [0, 0, 1, 1], [], []>} : vector<128x128xf32>, vector<128x128xf32>, vector<128x128xf32> -> vector<128x128xf32>
    %112 = arith.addf %106, %111 : vector<128x128xf32>
    %c0_136 = arith.constant 0 : index
    %c0_137 = arith.constant 0 : index
    %c1_138 = arith.constant 1 : index
    %c0_139 = arith.constant 0 : index
    %113 = vector.load %arg5[%c0_136, %c0_137, %c1_138, %c0_139] : memref<2x10x10x128xf32, #tpu.memory_space<vmem>>, vector<2x8x8x128xf32>
    %114 = vector.shape_cast %113 : vector<2x8x8x128xf32> to vector<128x128xf32>
    %c1_140 = arith.constant 1 : index
    %c1_141 = arith.constant 1 : index
    %c0_142 = arith.constant 0 : index
    %c0_143 = arith.constant 0 : index
    %115 = vector.load %arg2[%c1_140, %c1_141, %c0_142, %c0_143] : memref<2x9x128x128xf32, #tpu.memory_space<vmem>>, vector<1x1x128x128xf32>
    %116 = vector.shape_cast %115 : vector<1x1x128x128xf32> to vector<128x128xf32>
    %cst_144 = arith.constant dense<0.000000e+00> : vector<128x128xf32>
    %117 = tpu.matmul %114, %116, %cst_144 {dimension_numbers = #tpu.dot_dimension_numbers<[1], [0], [0], [1], [0, 0, 1, 1], [], []>} : vector<128x128xf32>, vector<128x128xf32>, vector<128x128xf32> -> vector<128x128xf32>
    %118 = arith.addf %112, %117 : vector<128x128xf32>
    %c0_145 = arith.constant 0 : index
    %c0_146 = arith.constant 0 : index
    %c2_147 = arith.constant 2 : index
    %c0_148 = arith.constant 0 : index
    %119 = vector.load %arg5[%c0_145, %c0_146, %c2_147, %c0_148] : memref<2x10x10x128xf32, #tpu.memory_space<vmem>>, vector<2x8x8x128xf32>
    %120 = vector.shape_cast %119 : vector<2x8x8x128xf32> to vector<128x128xf32>
    %c1_149 = arith.constant 1 : index
    %c2_150 = arith.constant 2 : index
    %c0_151 = arith.constant 0 : index
    %c0_152 = arith.constant 0 : index
    %121 = vector.load %arg2[%c1_149, %c2_150, %c0_151, %c0_152] : memref<2x9x128x128xf32, #tpu.memory_space<vmem>>, vector<1x1x128x128xf32>
    %122 = vector.shape_cast %121 : vector<1x1x128x128xf32> to vector<128x128xf32>
    %cst_153 = arith.constant dense<0.000000e+00> : vector<128x128xf32>
    %123 = tpu.matmul %120, %122, %cst_153 {dimension_numbers = #tpu.dot_dimension_numbers<[1], [0], [0], [1], [0, 0, 1, 1], [], []>} : vector<128x128xf32>, vector<128x128xf32>, vector<128x128xf32> -> vector<128x128xf32>
    %124 = arith.addf %118, %123 : vector<128x128xf32>
    %c0_154 = arith.constant 0 : index
    %c1_155 = arith.constant 1 : index
    %c0_156 = arith.constant 0 : index
    %c0_157 = arith.constant 0 : index
    %125 = vector.load %arg5[%c0_154, %c1_155, %c0_156, %c0_157] : memref<2x10x10x128xf32, #tpu.memory_space<vmem>>, vector<2x8x8x128xf32>
    %126 = vector.shape_cast %125 : vector<2x8x8x128xf32> to vector<128x128xf32>
    %c1_158 = arith.constant 1 : index
    %c3_159 = arith.constant 3 : index
    %c0_160 = arith.constant 0 : index
    %c0_161 = arith.constant 0 : index
    %127 = vector.load %arg2[%c1_158, %c3_159, %c0_160, %c0_161] : memref<2x9x128x128xf32, #tpu.memory_space<vmem>>, vector<1x1x128x128xf32>
    %128 = vector.shape_cast %127 : vector<1x1x128x128xf32> to vector<128x128xf32>
    %cst_162 = arith.constant dense<0.000000e+00> : vector<128x128xf32>
    %129 = tpu.matmul %126, %128, %cst_162 {dimension_numbers = #tpu.dot_dimension_numbers<[1], [0], [0], [1], [0, 0, 1, 1], [], []>} : vector<128x128xf32>, vector<128x128xf32>, vector<128x128xf32> -> vector<128x128xf32>
    %130 = arith.addf %124, %129 : vector<128x128xf32>
    %c0_163 = arith.constant 0 : index
    %c1_164 = arith.constant 1 : index
    %c1_165 = arith.constant 1 : index
    %c0_166 = arith.constant 0 : index
    %131 = vector.load %arg5[%c0_163, %c1_164, %c1_165, %c0_166] : memref<2x10x10x128xf32, #tpu.memory_space<vmem>>, vector<2x8x8x128xf32>
    %132 = vector.shape_cast %131 : vector<2x8x8x128xf32> to vector<128x128xf32>
    %c1_167 = arith.constant 1 : index
    %c4_168 = arith.constant 4 : index
    %c0_169 = arith.constant 0 : index
    %c0_170 = arith.constant 0 : index
    %133 = vector.load %arg2[%c1_167, %c4_168, %c0_169, %c0_170] : memref<2x9x128x128xf32, #tpu.memory_space<vmem>>, vector<1x1x128x128xf32>
    %134 = vector.shape_cast %133 : vector<1x1x128x128xf32> to vector<128x128xf32>
    %cst_171 = arith.constant dense<0.000000e+00> : vector<128x128xf32>
    %135 = tpu.matmul %132, %134, %cst_171 {dimension_numbers = #tpu.dot_dimension_numbers<[1], [0], [0], [1], [0, 0, 1, 1], [], []>} : vector<128x128xf32>, vector<128x128xf32>, vector<128x128xf32> -> vector<128x128xf32>
    %136 = arith.addf %130, %135 : vector<128x128xf32>
    %c0_172 = arith.constant 0 : index
    %c1_173 = arith.constant 1 : index
    %c2_174 = arith.constant 2 : index
    %c0_175 = arith.constant 0 : index
    %137 = vector.load %arg5[%c0_172, %c1_173, %c2_174, %c0_175] : memref<2x10x10x128xf32, #tpu.memory_space<vmem>>, vector<2x8x8x128xf32>
    %138 = vector.shape_cast %137 : vector<2x8x8x128xf32> to vector<128x128xf32>
    %c1_176 = arith.constant 1 : index
    %c5_177 = arith.constant 5 : index
    %c0_178 = arith.constant 0 : index
    %c0_179 = arith.constant 0 : index
    %139 = vector.load %arg2[%c1_176, %c5_177, %c0_178, %c0_179] : memref<2x9x128x128xf32, #tpu.memory_space<vmem>>, vector<1x1x128x128xf32>
    %140 = vector.shape_cast %139 : vector<1x1x128x128xf32> to vector<128x128xf32>
    %cst_180 = arith.constant dense<0.000000e+00> : vector<128x128xf32>
    %141 = tpu.matmul %138, %140, %cst_180 {dimension_numbers = #tpu.dot_dimension_numbers<[1], [0], [0], [1], [0, 0, 1, 1], [], []>} : vector<128x128xf32>, vector<128x128xf32>, vector<128x128xf32> -> vector<128x128xf32>
    %142 = arith.addf %136, %141 : vector<128x128xf32>
    %c0_181 = arith.constant 0 : index
    %c2_182 = arith.constant 2 : index
    %c0_183 = arith.constant 0 : index
    %c0_184 = arith.constant 0 : index
    %143 = vector.load %arg5[%c0_181, %c2_182, %c0_183, %c0_184] : memref<2x10x10x128xf32, #tpu.memory_space<vmem>>, vector<2x8x8x128xf32>
    %144 = vector.shape_cast %143 : vector<2x8x8x128xf32> to vector<128x128xf32>
    %c1_185 = arith.constant 1 : index
    %c6_186 = arith.constant 6 : index
    %c0_187 = arith.constant 0 : index
    %c0_188 = arith.constant 0 : index
    %145 = vector.load %arg2[%c1_185, %c6_186, %c0_187, %c0_188] : memref<2x9x128x128xf32, #tpu.memory_space<vmem>>, vector<1x1x128x128xf32>
    %146 = vector.shape_cast %145 : vector<1x1x128x128xf32> to vector<128x128xf32>
    %cst_189 = arith.constant dense<0.000000e+00> : vector<128x128xf32>
    %147 = tpu.matmul %144, %146, %cst_189 {dimension_numbers = #tpu.dot_dimension_numbers<[1], [0], [0], [1], [0, 0, 1, 1], [], []>} : vector<128x128xf32>, vector<128x128xf32>, vector<128x128xf32> -> vector<128x128xf32>
    %148 = arith.addf %142, %147 : vector<128x128xf32>
    %c0_190 = arith.constant 0 : index
    %c2_191 = arith.constant 2 : index
    %c1_192 = arith.constant 1 : index
    %c0_193 = arith.constant 0 : index
    %149 = vector.load %arg5[%c0_190, %c2_191, %c1_192, %c0_193] : memref<2x10x10x128xf32, #tpu.memory_space<vmem>>, vector<2x8x8x128xf32>
    %150 = vector.shape_cast %149 : vector<2x8x8x128xf32> to vector<128x128xf32>
    %c1_194 = arith.constant 1 : index
    %c7_195 = arith.constant 7 : index
    %c0_196 = arith.constant 0 : index
    %c0_197 = arith.constant 0 : index
    %151 = vector.load %arg2[%c1_194, %c7_195, %c0_196, %c0_197] : memref<2x9x128x128xf32, #tpu.memory_space<vmem>>, vector<1x1x128x128xf32>
    %152 = vector.shape_cast %151 : vector<1x1x128x128xf32> to vector<128x128xf32>
    %cst_198 = arith.constant dense<0.000000e+00> : vector<128x128xf32>
    %153 = tpu.matmul %150, %152, %cst_198 {dimension_numbers = #tpu.dot_dimension_numbers<[1], [0], [0], [1], [0, 0, 1, 1], [], []>} : vector<128x128xf32>, vector<128x128xf32>, vector<128x128xf32> -> vector<128x128xf32>
    %154 = arith.addf %148, %153 : vector<128x128xf32>
    %c0_199 = arith.constant 0 : index
    %c2_200 = arith.constant 2 : index
    %c2_201 = arith.constant 2 : index
    %c0_202 = arith.constant 0 : index
    %155 = vector.load %arg5[%c0_199, %c2_200, %c2_201, %c0_202] : memref<2x10x10x128xf32, #tpu.memory_space<vmem>>, vector<2x8x8x128xf32>
    %156 = vector.shape_cast %155 : vector<2x8x8x128xf32> to vector<128x128xf32>
    %c1_203 = arith.constant 1 : index
    %c8_204 = arith.constant 8 : index
    %c0_205 = arith.constant 0 : index
    %c0_206 = arith.constant 0 : index
    %157 = vector.load %arg2[%c1_203, %c8_204, %c0_205, %c0_206] : memref<2x9x128x128xf32, #tpu.memory_space<vmem>>, vector<1x1x128x128xf32>
    %158 = vector.shape_cast %157 : vector<1x1x128x128xf32> to vector<128x128xf32>
    %cst_207 = arith.constant dense<0.000000e+00> : vector<128x128xf32>
    %159 = tpu.matmul %156, %158, %cst_207 {dimension_numbers = #tpu.dot_dimension_numbers<[1], [0], [0], [1], [0, 0, 1, 1], [], []>} : vector<128x128xf32>, vector<128x128xf32>, vector<128x128xf32> -> vector<128x128xf32>
    %160 = arith.addf %154, %159 : vector<128x128xf32>
    %c3_208 = arith.constant 3 : index
    %c0_209 = arith.constant 0 : index
    %161 = vector.load %arg3[%c3_208, %c0_209] : memref<4x128xf32, #tpu.memory_space<vmem>>, vector<1x128xf32>
    %162 = vector.broadcast %161 : vector<1x128xf32> to vector<128x128xf32>
    %163 = arith.addf %160, %162 : vector<128x128xf32>
    %cst_210 = arith.constant 0.000000e+00 : f32
    %164 = vector.broadcast %cst_210 : f32 to vector<128x128xf32>
    %165 = arith.maximumf %163, %164 : vector<128x128xf32>
    %166 = arith.addf %165, %39 : vector<128x128xf32>
    %c0_211 = arith.constant 0 : index
    %c0_212 = arith.constant 0 : index
    %167 = vector.load %arg4[%c0_211, %c0_212] : memref<128x128xf32, #tpu.memory_space<vmem>>, vector<128x128xf32>
    tpu.vector_store %arg4[%c0_211, %c0_212], %166 {strides = array<i32>} : memref<128x128xf32, #tpu.memory_space<vmem>>, vector<128x128xf32>,
    return
  }
}

</mosaic_0001>

<llo_original>
// kernel: make_layer_forward.1
$region0: #{make_layer_forward.1}
  #allocation0 [shape = 'u32[]', space=smem, size = 0x4, offset = 0x4, fixed_abs, tag = 'smem constant byte address 0x4 - core index']
  #allocation1 [shape = 'u32[144,128]{1,0:T(1,128)}', space=vmem, size = 0x12000, scoped, tag = 'internal scratch']
  #allocation2 [shape = 'f32[2,10,10,128]{3,2,1,0:T(8,128)}', space=vmem, size = 0x28000, scoped, tag = 'scratch operand']
  %s0 = inlined_call_operand.vmem [shape: f32[2,9,9,16], index: 0, kind: input, shape index: {}]
  %s1 = inlined_call_operand.vmem [shape: f32[4,16,512], index: 1, kind: input, shape index: {}]
  %s2 = inlined_call_operand.vmem [shape: f32[2,9,128,128], index: 2, kind: input, shape index: {}]
  %s3 = inlined_call_operand.vmem [shape: f32[4,128], index: 3, kind: input, shape index: {}]
  %s4 = inlined_call_operand.vmem [shape: f32[128,128], index: 4, kind: output, shape index: {}]
  %s5 = sld [smem:[#allocation0]]
  $region26: #{make_layer_forward.1} parent=0
    _
  %s7 = ssub.s32 1, %s5
  %s8 = scalar_select 0, %s7, %s5
  // Predicated region
  $region2: #{make_layer_forward.1} parent=0 // pred_check
    _
  $region3: #{make_layer_forward.1} parent=0 // pred_check_branch
    %10 = sbr.rel (0) target = $region5
  $region4: #{make_layer_forward.1} parent=0 // pred_region
    _
  $region5: #{make_layer_forward.1} parent=0 // pred_fallthru
    _
  // Predicated region
  $region6: #{make_layer_forward.1} parent=0 // pred_check
    _
  $region7: #{make_layer_forward.1} parent=0 // pred_check_branch
    %12 = sbr.rel (0) target = $region9
  $region8: #{make_layer_forward.1} parent=0 // pred_region
    _
  $region9: #{make_layer_forward.1} parent=0 // pred_fallthru
    _
  // Predicated region
  $region10: #{make_layer_forward.1} parent=0 // pred_check
    _
  $region11: #{make_layer_forward.1} parent=0 // pred_check_branch
    %14 = sbr.rel (0) target = $region13
  $region12: #{make_layer_forward.1} parent=0 // pred_region
    _
  $region13: #{make_layer_forward.1} parent=0 // pred_fallthru
    _
  // Predicated region
  $region14: #{make_layer_forward.1} parent=0 // pred_check
    _
  $region15: #{make_layer_forward.1} parent=0 // pred_check_branch
    %16 = sbr.rel (0) target = $region17
  $region16: #{make_layer_forward.1} parent=0 // pred_region
    _
  $region17: #{make_layer_forward.1} parent=0 // pred_fallthru
    _
  %v17 = vld [vmem:[%s0] sm:$0xff]
  %v18 = vld [vmem:[%s0 + $0x10] sm:$0xff]
  %v19 = vld [vmem:[%s0 + $0x20] sm:$0xff]
  %v20 = vld [vmem:[%s0 + $0x30] sm:$0xff]
  %v21 = vld [vmem:[%s0 + $0x40] sm:$0xff]
  %v22 = vld [vmem:[%s0 + $0x50] sm:$0xff]
  %v23 = vld [vmem:[%s0 + $0x60] sm:$0xff]
  %v24 = vld [vmem:[%s0 + $0x70] sm:$0xff]
  %v25 = vld [vmem:[%s0 + $0x90] sm:$0xff]
  %v26 = vld [vmem:[%s0 + $0xa0] sm:$0xff]
  %v27 = vld [vmem:[%s0 + $0xb0] sm:$0xff]
  %v28 = vld [vmem:[%s0 + $0xc0] sm:$0xff]
  %v29 = vld [vmem:[%s0 + $0xd0] sm:$0xff]
  %v30 = vld [vmem:[%s0 + $0xe0] sm:$0xff]
  %v31 = vld [vmem:[%s0 + $0xf0] sm:$0xff]
  %v32 = vld [vmem:[%s0 + $0x100] sm:$0xff]
  %v33 = vld [vmem:[%s1] sm:$0xff]
  %v34 = vld [vmem:[%s1 + $0x8] sm:$0xff]
  %v35 = vld [vmem:[%s1 + $0x10] sm:$0xff]
  %v36 = vld [vmem:[%s1 + $0x18] sm:$0xff]
  %v37 = vld [vmem:[%s1 + $0x20] sm:$0xff]
  %v38 = vld [vmem:[%s1 + $0x28] sm:$0xff]
  %v39 = vld [vmem:[%s1 + $0x30] sm:$0xff]
  %v40 = vld [vmem:[%s1 + $0x38] sm:$0xff]
  %v41 = vld [vmem:[%s0 + $0x1] sm:$0xff]
  %v42 = vld [vmem:[%s0 + $0x11] sm:$0xff]
  %v43 = vld [vmem:[%s0 + $0x21] sm:$0xff]
  %v44 = vld [vmem:[%s0 + $0x31] sm:$0xff]
  %v45 = vld [vmem:[%s0 + $0x41] sm:$0xff]
  %v46 = vld [vmem:[%s0 + $0x51] sm:$0xff]
  %v47 = vld [vmem:[%s0 + $0x61] sm:$0xff]
  %v48 = vld [vmem:[%s0 + $0x71] sm:$0xff]
  %v49 = vld [vmem:[%s0 + $0x91] sm:$0xff]
  %v50 = vld [vmem:[%s0 + $0xa1] sm:$0xff]
  %v51 = vld [vmem:[%s0 + $0xb1] sm:$0xff]
  %v52 = vld [vmem:[%s0 + $0xc1] sm:$0xff]
  %v53 = vld [vmem:[%s0 + $0xd1] sm:$0xff]
  %v54 = vld [vmem:[%s0 + $0xe1] sm:$0xff]
  %v55 = vld [vmem:[%s0 + $0xf1] sm:$0xff]
  %v56 = vld [vmem:[%s0 + $0x101] sm:$0xff]
  %s57 = scalar_lea.vmem %s1, 64
  %v58 = vld [vmem:[%s57] sm:$0xff]
  %v59 = vld [vmem:[%s57 + $0x8] sm:$0xff]
  %v60 = vld [vmem:[%s57 + $0x10] sm:$0xff]
  %v61 = vld [vmem:[%s57 + $0x18] sm:$0xff]
  %v62 = vld [vmem:[%s57 + $0x20] sm:$0xff]
  %v63 = vld [vmem:[%s57 + $0x28] sm:$0xff]
  %v64 = vld [vmem:[%s57 + $0x30] sm:$0xff]
  %v65 = vld [vmem:[%s57 + $0x38] sm:$0xff]
  %vm66 = vcmask 130048
  %v68 = vsel %vm66, %v41, 0
  %v71 = vsel %vm66, %v42, 0
  %v74 = vsel %vm66, %v43, 0
  %v77 = vsel %vm66, %v44, 0
  %v80 = vsel %vm66, %v45, 0
  %v83 = vsel %vm66, %v46, 0
  %v86 = vsel %vm66, %v47, 0
  %v89 = vsel %vm66, %v48, 0
  %v92 = vsel %vm66, %v49, 0
  %v95 = vsel %vm66, %v50, 0
  %v98 = vsel %vm66, %v51, 0
  %v101 = vsel %vm66, %v52, 0
  %v104 = vsel %vm66, %v53, 0
  %v107 = vsel %vm66, %v54, 0
  %v110 = vsel %vm66, %v55, 0
  %v113 = vsel %vm66, %v56, 0
  %115 = vmatprep.subr.mxu0 0.0
  %116 = vmatpush1.msra.mxu0 0.0
  %117 = vmatprep.subr.mxu0 0.0
  %118 = vmatpush1.msra.mxu0 0.0
  %119 = vmatprep.subr.mxu0 0.0
  %120 = vmatpush1.msra.mxu0 0.0
  %121 = vmatprep.subr.mxu0 0.0
  %122 = vmatpush1.msra.mxu0 0.0
  %123 = vmatprep.subr.mxu0 0.0
  %124 = vmatpush1.msra.mxu0 0.0
  %125 = vmatprep.subr.mxu0 0.0
  %126 = vmatpush1.msra.mxu0 0.0
  %127 = vmatprep.subr.mxu0 0.0
  %128 = vmatpush1.msra.mxu0 0.0
  %129 = vmatprep.subr.mxu0 0.0
  %130 = vmatpush1.msra.mxu0 0.0
  %131 = vmatprep.subr.mxu0 0.0
  %132 = vmatpush1.msra.mxu0 0.0
  %133 = vmatprep.subr.mxu0 0.0
  %134 = vmatpush1.msra.mxu0 0.0
  %135 = vmatprep.subr.mxu0 0.0
  %136 = vmatpush1.msra.mxu0 0.0
  %137 = vmatprep.subr.mxu0 0.0
  %138 = vmatpush1.msra.mxu0 0.0
  %139 = vmatprep.subr.mxu0 0.0
  %140 = vmatpush1.msra.mxu0 0.0
  %141 = vmatprep.subr.mxu0 0.0
  %142 = vmatpush1.msra.mxu0 0.0
  %143 = vmatprep.subr.mxu0 %v63
  %144 = vmatpush1.msra.mxu0 %v62
  %145 = vmatprep.subr.mxu0 %v59
  %146 = vmatpush1.msra.mxu0 %v58
  %147 = vmatprep.subr.mxu0 0.0
  %148 = vmatpush2.msra.mxu0 0.0
  %149 = vmatprep.subr.mxu0 0.0
  %150 = vmatpush2.msra.mxu0 0.0
  %151 = vmatprep.subr.mxu0 0.0
  %152 = vmatpush2.msra.mxu0 0.0
  %153 = vmatprep.subr.mxu0 0.0
  %154 = vmatpush2.msra.mxu0 0.0
  %155 = vmatprep.subr.mxu0 0.0
  %156 = vmatpush2.msra.mxu0 0.0
  %157 = vmatprep.subr.mxu0 0.0
  %158 = vmatpush2.msra.mxu0 0.0
  %159 = vmatprep.subr.mxu0 0.0
  %160 = vmatpush2.msra.mxu0 0.0
  %161 = vmatprep.subr.mxu0 0.0
  %162 = vmatpush2.msra.mxu0 0.0
  %163 = vmatprep.subr.mxu0 0.0
  %164 = vmatpush2.msra.mxu0 0.0
  %165 = vmatprep.subr.mxu0 0.0
  %166 = vmatpush2.msra.mxu0 0.0
  %167 = vmatprep.subr.mxu0 0.0
  %168 = vmatpush2.msra.mxu0 0.0
  %169 = vmatprep.subr.mxu0 0.0
  %170 = vmatpush2.msra.mxu0 0.0
  %171 = vmatprep.subr.mxu0 0.0
  %172 = vmatpush2.msra.mxu0 0.0
  %173 = vmatprep.subr.mxu0 0.0
  %174 = vmatpush2.msra.mxu0 0.0
  %175 = vmatprep.subr.mxu0 0.0
  %176 = vmatpush2.msra.mxu0 0.0
  %177 = vmatprep.subr.mxu0 0.0
  %178 = vmatpush2.msra.mxu0 0.0
  %179 = vmatprep.mubr.f32.mxu0 0.0
  %180 = vmatmul.mubr.f32.gmra.mxu0 %v68
  %v181 = vpop.f32.mrf.mxu0
  %v182 = vadd.f32 0.0, %v181
  %v183 = vpop.f32.mrf.mxu0
  %v184 = vadd.f32 0.0, %v183
  %185 = vmatprep.mubr.f32.mxu0 0.0
  %186 = vmatmul.mubr.f32.gmra.mxu0 %v71
  %v187 = vpop.f32.mrf.mxu0
  %v188 = vadd.f32 0.0, %v187
  %v189 = vpop.f32.mrf.mxu0
  %v190 = vadd.f32 0.0, %v189
  %191 = vmatprep.mubr.f32.mxu0 0.0
  %192 = vmatmul.mubr.f32.gmra.mxu0 %v74
  %v193 = vpop.f32.mrf.mxu0
  %v194 = vadd.f32 0.0, %v193
  %v195 = vpop.f32.mrf.mxu0
  %v196 = vadd.f32 0.0, %v195
  %197 = vmatprep.mubr.f32.mxu0 0.0
  %198 = vmatmul.mubr.f32.gmra.mxu0 %v77
  %v199 = vpop.f32.mrf.mxu0
  %v200 = vadd.f32 0.0, %v199
  %v201 = vpop.f32.mrf.mxu0
  %v202 = vadd.f32 0.0, %v201
  %203 = vmatprep.mubr.f32.mxu0 0.0
  %204 = vmatmul.mubr.f32.gmra.mxu0 %v80
  %v205 = vpop.f32.mrf.mxu0
  %v206 = vadd.f32 0.0, %v205
  %v207 = vpop.f32.mrf.mxu0
  %v208 = vadd.f32 0.0, %v207
  %209 = vmatprep.mubr.f32.mxu0 0.0
  %210 = vmatmul.mubr.f32.gmra.mxu0 %v83
  %v211 = vpop.f32.mrf.mxu0
  %v212 = vadd.f32 0.0, %v211
  %v213 = vpop.f32.mrf.mxu0
  %v214 = vadd.f32 0.0, %v213
  %215 = vmatprep.mubr.f32.mxu0 0.0
  %216 = vmatmul.mubr.f32.gmra.mxu0 %v86
  %v217 = vpop.f32.mrf.mxu0
  %v218 = vadd.f32 0.0, %v217
  %v219 = vpop.f32.mrf.mxu0
  %v220 = vadd.f32 0.0, %v219
  %221 = vmatprep.mubr.f32.mxu0 0.0
  %222 = vmatmul.mubr.f32.gmra.mxu0 %v89
  %v223 = vpop.f32.mrf.mxu0
  %v224 = vadd.f32 0.0, %v223
  %v225 = vpop.f32.mrf.mxu0
  %v226 = vadd.f32 0.0, %v225
  %227 = vmatprep.mubr.f32.mxu0 0.0
  %228 = vmatmul.mubr.f32.gmra.mxu0 %v92
  %v229 = vpop.f32.mrf.mxu0
  %v230 = vadd.f32 0.0, %v229
  %v231 = vpop.f32.mrf.mxu0
  %v232 = vadd.f32 0.0, %v231
  %233 = vmatprep.mubr.f32.mxu0 0.0
  %234 = vmatmul.mubr.f32.gmra.mxu0 %v95
  %v235 = vpop.f32.mrf.mxu0
  %v236 = vadd.f32 0.0, %v235
  %v237 = vpop.f32.mrf.mxu0
  %v238 = vadd.f32 0.0, %v237
  %239 = vmatprep.mubr.f32.mxu0 0.0
  %240 = vmatmul.mubr.f32.gmra.mxu0 %v98
  %v241 = vpop.f32.mrf.mxu0
  %v242 = vadd.f32 0.0, %v241
  %v243 = vpop.f32.mrf.mxu0
  %v244 = vadd.f32 0.0, %v243
  %245 = vmatprep.mubr.f32.mxu0 0.0
  %246 = vmatmul.mubr.f32.gmra.mxu0 %v101
  %v247 = vpop.f32.mrf.mxu0
  %v248 = vadd.f32 0.0, %v247
  %v249 = vpop.f32.mrf.mxu0
  %v250 = vadd.f32 0.0, %v249
  %251 = vmatprep.mubr.f32.mxu0 0.0
  %252 = vmatmul.mubr.f32.gmra.mxu0 %v104
  %v253 = vpop.f32.mrf.mxu0
  %v254 = vadd.f32 0.0, %v253
  %v255 = vpop.f32.mrf.mxu0
  %v256 = vadd.f32 0.0, %v255
  %257 = vmatprep.mubr.f32.mxu0 0.0
  %258 = vmatmul.mubr.f32.gmra.mxu0 %v107
  %v259 = vpop.f32.mrf.mxu0
  %v260 = vadd.f32 0.0, %v259
  %v261 = vpop.f32.mrf.mxu0
  %v262 = vadd.f32 0.0, %v261
  %263 = vmatprep.mubr.f32.mxu0 0.0
  %264 = vmatmul.mubr.f32.gmra.mxu0 %v110
  %v265 = vpop.f32.mrf.mxu0
  %v266 = vadd.f32 0.0, %v265
  %v267 = vpop.f32.mrf.mxu0
  %v268 = vadd.f32 0.0, %v267
  %269 = vmatprep.mubr.f32.mxu0 0.0
  %270 = vmatmul.mubr.f32.gmra.mxu0 %v113
  %v271 = vpop.f32.mrf.mxu0
  %v272 = vadd.f32 0.0, %v271
  %v273 = vpop.f32.mrf.mxu0
  %v274 = vadd.f32 0.0, %v273
  %275 = vdwg.mxu0
  %276 = vmatprep.subr.mxu0 0.0
  %277 = vmatpush1.msra.mxu0 0.0
  %278 = vmatprep.subr.mxu0 0.0
  %279 = vmatpush1.msra.mxu0 0.0
  %280 = vmatprep.subr.mxu0 0.0
  %281 = vmatpush1.msra.mxu0 0.0
  %282 = vmatprep.subr.mxu0 0.0
  %283 = vmatpush1.msra.mxu0 0.0
  %284 = vmatprep.subr.mxu0 0.0
  %285 = vmatpush1.msra.mxu0 0.0
  %286 = vmatprep.subr.mxu0 0.0
  %287 = vmatpush1.msra.mxu0 0.0
  %288 = vmatprep.subr.mxu0 0.0
  %289 = vmatpush1.msra.mxu0 0.0
  %290 = vmatprep.subr.mxu0 0.0
  %291 = vmatpush1.msra.mxu0 0.0
  %292 = vmatprep.subr.mxu0 0.0
  %293 = vmatpush1.msra.mxu0 0.0
  %294 = vmatprep.subr.mxu0 0.0
  %295 = vmatpush1.msra.mxu0 0.0
  %296 = vmatprep.subr.mxu0 0.0
  %297 = vmatpush1.msra.mxu0 0.0
  %298 = vmatprep.subr.mxu0 0.0
  %299 = vmatpush1.msra.mxu0 0.0
  %300 = vmatprep.subr.mxu0 0.0
  %301 = vmatpush1.msra.mxu0 0.0
  %302 = vmatprep.subr.mxu0 0.0
  %303 = vmatpush1.msra.mxu0 0.0
  %304 = vmatprep.subr.mxu0 %v65
  %305 = vmatpush1.msra.mxu0 %v64
  %306 = vmatprep.subr.mxu0 %v61
  %307 = vmatpush1.msra.mxu0 %v60
  %308 = vmatprep.subr.mxu0 0.0
  %309 = vmatpush2.msra.mxu0 0.0
  %310 = vmatprep.subr.mxu0 0.0
  %311 = vmatpush2.msra.mxu0 0.0
  %312 = vmatprep.subr.mxu0 0.0
  %313 = vmatpush2.msra.mxu0 0.0
  %314 = vmatprep.subr.mxu0 0.0
  %315 = vmatpush2.msra.mxu0 0.0
  %316 = vmatprep.subr.mxu0 0.0
  %317 = vmatpush2.msra.mxu0 0.0
  %318 = vmatprep.subr.mxu0 0.0
  %319 = vmatpush2.msra.mxu0 0.0
  %320 = vmatprep.subr.mxu0 0.0
  %321 = vmatpush2.msra.mxu0 0.0
  %322 = vmatprep.subr.mxu0 0.0
  %323 = vmatpush2.msra.mxu0 0.0
  %324 = vmatprep.subr.mxu0 0.0
  %325 = vmatpush2.msra.mxu0 0.0
  %326 = vmatprep.subr.mxu0 0.0
  %327 = vmatpush2.msra.mxu0 0.0
  %328 = vmatprep.subr.mxu0 0.0
  %329 = vmatpush2.msra.mxu0 0.0
  %330 = vmatprep.subr.mxu0 0.0
  %331 = vmatpush2.msra.mxu0 0.0
  %332 = vmatprep.subr.mxu0 0.0
  %333 = vmatpush2.msra.mxu0 0.0
  %334 = vmatprep.subr.mxu0 0.0
  %335 = vmatpush2.msra.mxu0 0.0
  %336 = vmatprep.subr.mxu0 0.0
  %337 = vmatpush2.msra.mxu0 0.0
  %338 = vmatprep.subr.mxu0 0.0
  %339 = vmatpush2.msra.mxu0 0.0
  %340 = vmatprep.mubr.f32.mxu0 0.0
  %341 = vmatmul.mubr.f32.gmra.mxu0 %v68
  %v342 = vpop.f32.mrf.mxu0
  %v343 = vadd.f32 0.0, %v342
  %v344 = vpop.f32.mrf.mxu0
  %v345 = vadd.f32 0.0, %v344
  %346 = vmatprep.mubr.f32.mxu0 0.0
  %347 = vmatmul.mubr.f32.gmra.mxu0 %v71
  %v348 = vpop.f32.mrf.mxu0
  %v349 = vadd.f32 0.0, %v348
  %v350 = vpop.f32.mrf.mxu0
  %v351 = vadd.f32 0.0, %v350
  %352 = vmatprep.mubr.f32.mxu0 0.0
  %353 = vmatmul.mubr.f32.gmra.mxu0 %v74
  %v354 = vpop.f32.mrf.mxu0
  %v355 = vadd.f32 0.0, %v354
  %v356 = vpop.f32.mrf.mxu0
  %v357 = vadd.f32 0.0, %v356
  %358 = vmatprep.mubr.f32.mxu0 0.0
  %359 = vmatmul.mubr.f32.gmra.mxu0 %v77
  %v360 = vpop.f32.mrf.mxu0
  %v361 = vadd.f32 0.0, %v360
  %v362 = vpop.f32.mrf.mxu0
  %v363 = vadd.f32 0.0, %v362
  %364 = vmatprep.mubr.f32.mxu0 0.0
  %365 = vmatmul.mubr.f32.gmra.mxu0 %v80
  %v366 = vpop.f32.mrf.mxu0
  %v367 = vadd.f32 0.0, %v366
  %v368 = vpop.f32.mrf.mxu0
  %v369 = vadd.f32 0.0, %v368
  %370 = vmatprep.mubr.f32.mxu0 0.0
  %371 = vmatmul.mubr.f32.gmra.mxu0 %v83
  %v372 = vpop.f32.mrf.mxu0
  %v373 = vadd.f32 0.0, %v372
  %v374 = vpop.f32.mrf.mxu0
  %v375 = vadd.f32 0.0, %v374
  %376 = vmatprep.mubr.f32.mxu0 0.0
  %377 = vmatmul.mubr.f32.gmra.mxu0 %v86
  %v378 = vpop.f32.mrf.mxu0
  %v379 = vadd.f32 0.0, %v378
  %v380 = vpop.f32.mrf.mxu0
  %v381 = vadd.f32 0.0, %v380
  %382 = vmatprep.mubr.f32.mxu0 0.0
  %383 = vmatmul.mubr.f32.gmra.mxu0 %v89
  %v384 = vpop.f32.mrf.mxu0
  %v385 = vadd.f32 0.0, %v384
  %v386 = vpop.f32.mrf.mxu0
  %v387 = vadd.f32 0.0, %v386
  %388 = vmatprep.mubr.f32.mxu0 0.0
  %389 = vmatmul.mubr.f32.gmra.mxu0 %v92
  %v390 = vpop.f32.mrf.mxu0
  %v391 = vadd.f32 0.0, %v390
  %v392 = vpop.f32.mrf.mxu0
  %v393 = vadd.f32 0.0, %v392
  %394 = vmatprep.mubr.f32.mxu0 0.0
  %395 = vmatmul.mubr.f32.gmra.mxu0 %v95
  %v396 = vpop.f32.mrf.mxu0
  %v397 = vadd.f32 0.0, %v396
  %v398 = vpop.f32.mrf.mxu0
  %v399 = vadd.f32 0.0, %v398
  %400 = vmatprep.mubr.f32.mxu0 0.0
  %401 = vmatmul.mubr.f32.gmra.mxu0 %v98
  %v402 = vpop.f32.mrf.mxu0
  %v403 = vadd.f32 0.0, %v402
  %v404 = vpop.f32.mrf.mxu0
  %v405 = vadd.f32 0.0, %v404
  %406 = vmatprep.mubr.f32.mxu0 0.0
  %407 = vmatmul.mubr.f32.gmra.mxu0 %v101
  %v408 = vpop.f32.mrf.mxu0
  %v409 = vadd.f32 0.0, %v408
  %v410 = vpop.f32.mrf.mxu0
  %v411 = vadd.f32 0.0, %v410
  %412 = vmatprep.mubr.f32.mxu0 0.0
  %413 = vmatmul.mubr.f32.gmra.mxu0 %v104
  %v414 = vpop.f32.mrf.mxu0
  %v415 = vadd.f32 0.0, %v414
  %v416 = vpop.f32.mrf.mxu0
  %v417 = vadd.f32 0.0, %v416
  %418 = vmatprep.mubr.f32.mxu0 0.0
  %419 = vmatmul.mubr.f32.gmra.mxu0 %v107
  %v420 = vpop.f32.mrf.mxu0
  %v421 = vadd.f32 0.0, %v420
  %v422 = vpop.f32.mrf.mxu0
  %v423 = vadd.f32 0.0, %v422
  %424 = vmatprep.mubr.f32.mxu0 0.0
  %425 = vmatmul.mubr.f32.gmra.mxu0 %v110
  %v426 = vpop.f32.mrf.mxu0
  %v427 = vadd.f32 0.0, %v426
  %v428 = vpop.f32.mrf.mxu0
  %v429 = vadd.f32 0.0, %v428
  %430 = vmatprep.mubr.f32.mxu0 0.0
  %431 = vmatmul.mubr.f32.gmra.mxu0 %v113
  %v432 = vpop.f32.mrf.mxu0
  %v433 = vadd.f32 0.0, %v432
  %v434 = vpop.f32.mrf.mxu0
  %v435 = vadd.f32 0.0, %v434
  %436 = vdwg.mxu0
  %v438 = vsel %vm66, %v17, 0
  %v441 = vsel %vm66, %v18, 0
  %v444 = vsel %vm66, %v19, 0
  %v447 = vsel %vm66, %v20, 0
  %v450 = vsel %vm66, %v21, 0
  %v453 = vsel %vm66, %v22, 0
  %v456 = vsel %vm66, %v23, 0
  %v459 = vsel %vm66, %v24, 0
  %v462 = vsel %vm66, %v25, 0
  %v465 = vsel %vm66, %v26, 0
  %v468 = vsel %vm66, %v27, 0
  %v471 = vsel %vm66, %v28, 0
  %v474 = vsel %vm66, %v29, 0
  %v477 = vsel %vm66, %v30, 0
  %v480 = vsel %vm66, %v31, 0
  %v483 = vsel %vm66, %v32, 0
  %485 = vmatprep.subr.mxu0 0.0
  %486 = vmatpush1.msra.mxu0 0.0
  %487 = vmatprep.subr.mxu0 0.0
  %488 = vmatpush1.msra.mxu0 0.0
  %489 = vmatprep.subr.mxu0 0.0
  %490 = vmatpush1.msra.mxu0 0.0
  %491 = vmatprep.subr.mxu0 0.0
  %492 = vmatpush1.msra.mxu0 0.0
  %493 = vmatprep.subr.mxu0 0.0
  %494 = vmatpush1.msra.mxu0 0.0
  %495 = vmatprep.subr.mxu0 0.0
  %496 = vmatpush1.msra.mxu0 0.0
  %497 = vmatprep.subr.mxu0 0.0
  %498 = vmatpush1.msra.mxu0 0.0
  %499 = vmatprep.subr.mxu0 0.0
  %500 = vmatpush1.msra.mxu0 0.0
  %501 = vmatprep.subr.mxu0 0.0
  %502 = vmatpush1.msra.mxu0 0.0
  %503 = vmatprep.subr.mxu0 0.0
  %504 = vmatpush1.msra.mxu0 0.0
  %505 = vmatprep.subr.mxu0 0.0
  %506 = vmatpush1.msra.mxu0 0.0
  %507 = vmatprep.subr.mxu0 0.0
  %508 = vmatpush1.msra.mxu0 0.0
  %509 = vmatprep.subr.mxu0 0.0
  %510 = vmatpush1.msra.mxu0 0.0
  %511 = vmatprep.subr.mxu0 0.0
  %512 = vmatpush1.msra.mxu0 0.0
  %513 = vmatprep.subr.mxu0 %v38
  %514 = vmatpush1.msra.mxu0 %v37
  %515 = vmatprep.subr.mxu0 %v34
  %516 = vmatpush1.msra.mxu0 %v33
  %517 = vmatprep.subr.mxu0 0.0
  %518 = vmatpush2.msra.mxu0 0.0
  %519 = vmatprep.subr.mxu0 0.0
  %520 = vmatpush2.msra.mxu0 0.0
  %521 = vmatprep.subr.mxu0 0.0
  %522 = vmatpush2.msra.mxu0 0.0
  %523 = vmatprep.subr.mxu0 0.0
  %524 = vmatpush2.msra.mxu0 0.0
  %525 = vmatprep.subr.mxu0 0.0
  %526 = vmatpush2.msra.mxu0 0.0
  %527 = vmatprep.subr.mxu0 0.0
  %528 = vmatpush2.msra.mxu0 0.0
  %529 = vmatprep.subr.mxu0 0.0
  %530 = vmatpush2.msra.mxu0 0.0
  %531 = vmatprep.subr.mxu0 0.0
  %532 = vmatpush2.msra.mxu0 0.0
  %533 = vmatprep.subr.mxu0 0.0
  %534 = vmatpush2.msra.mxu0 0.0
  %535 = vmatprep.subr.mxu0 0.0
  %536 = vmatpush2.msra.mxu0 0.0
  %537 = vmatprep.subr.mxu0 0.0
  %538 = vmatpush2.msra.mxu0 0.0
  %539 = vmatprep.subr.mxu0 0.0
  %540 = vmatpush2.msra.mxu0 0.0
  %541 = vmatprep.subr.mxu0 0.0
  %542 = vmatpush2.msra.mxu0 0.0
  %543 = vmatprep.subr.mxu0 0.0
  %544 = vmatpush2.msra.mxu0 0.0
  %545 = vmatprep.subr.mxu0 0.0
  %546 = vmatpush2.msra.mxu0 0.0
  %547 = vmatprep.subr.mxu0 0.0
  %548 = vmatpush2.msra.mxu0 0.0
  %549 = vmatprep.mubr.f32.mxu0 0.0
  %550 = vmatmul.mubr.f32.gmra.mxu0 %v438
  %v551 = vpop.f32.mrf.mxu0
  %v552 = vadd.f32 %v182, %v551
  %v553 = vpop.f32.mrf.mxu0
  %v554 = vadd.f32 %v184, %v553
  %555 = vmatprep.mubr.f32.mxu0 0.0
  %556 = vmatmul.mubr.f32.gmra.mxu0 %v441
  %v557 = vpop.f32.mrf.mxu0
  %v558 = vadd.f32 %v188, %v557
  %v559 = vpop.f32.mrf.mxu0
  %v560 = vadd.f32 %v190, %v559
  %561 = vmatprep.mubr.f32.mxu0 0.0
  %562 = vmatmul.mubr.f32.gmra.mxu0 %v444
  %v563 = vpop.f32.mrf.mxu0
  %v564 = vadd.f32 %v194, %v563
  %v565 = vpop.f32.mrf.mxu0
  %v566 = vadd.f32 %v196, %v565
  %567 = vmatprep.mubr.f32.mxu0 0.0
  %568 = vmatmul.mubr.f32.gmra.mxu0 %v447
  %v569 = vpop.f32.mrf.mxu0
  %v570 = vadd.f32 %v200, %v569
  %v571 = vpop.f32.mrf.mxu0
  %v572 = vadd.f32 %v202, %v571
  %573 = vmatprep.mubr.f32.mxu0 0.0
  %574 = vmatmul.mubr.f32.gmra.mxu0 %v450
  %v575 = vpop.f32.mrf.mxu0
  %v576 = vadd.f32 %v206, %v575
  %v577 = vpop.f32.mrf.mxu0
  %v578 = vadd.f32 %v208, %v577
  %579 = vmatprep.mubr.f32.mxu0 0.0
  %580 = vmatmul.mubr.f32.gmra.mxu0 %v453
  %v581 = vpop.f32.mrf.mxu0
  %v582 = vadd.f32 %v212, %v581
  %v583 = vpop.f32.mrf.mxu0
  %v584 = vadd.f32 %v214, %v583
  %585 = vmatprep.mubr.f32.mxu0 0.0
  %586 = vmatmul.mubr.f32.gmra.mxu0 %v456
  %v587 = vpop.f32.mrf.mxu0
  %v588 = vadd.f32 %v218, %v587
  %v589 = vpop.f32.mrf.mxu0
  %v590 = vadd.f32 %v220, %v589
  %591 = vmatprep.mubr.f32.mxu0 0.0
  %592 = vmatmul.mubr.f32.gmra.mxu0 %v459
  %v593 = vpop.f32.mrf.mxu0
  %v594 = vadd.f32 %v224, %v593
  %v595 = vpop.f32.mrf.mxu0
  %v596 = vadd.f32 %v226, %v595
  %597 = vmatprep.mubr.f32.mxu0 0.0
  %598 = vmatmul.mubr.f32.gmra.mxu0 %v462
  %v599 = vpop.f32.mrf.mxu0
  %v600 = vadd.f32 %v230, %v599
  %v601 = vpop.f32.mrf.mxu0
  %v602 = vadd.f32 %v232, %v601
  %603 = vmatprep.mubr.f32.mxu0 0.0
  %604 = vmatmul.mubr.f32.gmra.mxu0 %v465
  %v605 = vpop.f32.mrf.mxu0
  %v606 = vadd.f32 %v236, %v605
  %v607 = vpop.f32.mrf.mxu0
  %v608 = vadd.f32 %v238, %v607
  %609 = vmatprep.mubr.f32.mxu0 0.0
  %610 = vmatmul.mubr.f32.gmra.mxu0 %v468
  %v611 = vpop.f32.mrf.mxu0
  %v612 = vadd.f32 %v242, %v611
  %v613 = vpop.f32.mrf.mxu0
  %v614 = vadd.f32 %v244, %v613
  %615 = vmatprep.mubr.f32.mxu0 0.0
  %616 = vmatmul.mubr.f32.gmra.mxu0 %v471
  %v617 = vpop.f32.mrf.mxu0
  %v618 = vadd.f32 %v248, %v617
  %v619 = vpop.f32.mrf.mxu0
  %v620 = vadd.f32 %v250, %v619
  %621 = vmatprep.mubr.f32.mxu0 0.0
  %622 = vmatmul.mubr.f32.gmra.mxu0 %v474
  %v623 = vpop.f32.mrf.mxu0
  %v624 = vadd.f32 %v254, %v623
  %v625 = vpop.f32.mrf.mxu0
  %v626 = vadd.f32 %v256, %v625
  %627 = vmatprep.mubr.f32.mxu0 0.0
  %628 = vmatmul.mubr.f32.gmra.mxu0 %v477
  %v629 = vpop.f32.mrf.mxu0
  %v630 = vadd.f32 %v260, %v629
  %v631 = vpop.f32.mrf.mxu0
  %v632 = vadd.f32 %v262, %v631
  %633 = vmatprep.mubr.f32.mxu0 0.0
  %634 = vmatmul.mubr.f32.gmra.mxu0 %v480
  %v635 = vpop.f32.mrf.mxu0
  %v636 = vadd.f32 %v266, %v635
  %v637 = vpop.f32.mrf.mxu0
  %v638 = vadd.f32 %v268, %v637
  %639 = vmatprep.mubr.f32.mxu0 0.0
  %640 = vmatmul.mubr.f32.gmra.mxu0 %v483
  %v641 = vpop.f32.mrf.mxu0
  %v642 = vadd.f32 %v272, %v641
  %v643 = vpop.f32.mrf.mxu0
  %v644 = vadd.f32 %v274, %v643
  %645 = vdwg.mxu0
  %646 = vmatprep.subr.mxu0 0.0
  %647 = vmatpush1.msra.mxu0 0.0
  %648 = vmatprep.subr.mxu0 0.0
  %649 = vmatpush1.msra.mxu0 0.0
  %650 = vmatprep.subr.mxu0 0.0
  %651 = vmatpush1.msra.mxu0 0.0
  %652 = vmatprep.subr.mxu0 0.0
  %653 = vmatpush1.msra.mxu0 0.0
  %654 = vmatprep.subr.mxu0 0.0
  %655 = vmatpush1.msra.mxu0 0.0
  %656 = vmatprep.subr.mxu0 0.0
  %657 = vmatpush1.msra.mxu0 0.0
  %658 = vmatprep.subr.mxu0 0.0
  %659 = vmatpush1.msra.mxu0 0.0
  %660 = vmatprep.subr.mxu0 0.0
  %661 = vmatpush1.msra.mxu0 0.0
  %662 = vmatprep.subr.mxu0 0.0
  %663 = vmatpush1.msra.mxu0 0.0
  %664 = vmatprep.subr.mxu0 0.0
  %665 = vmatpush1.msra.mxu0 0.0
  %666 = vmatprep.subr.mxu0 0.0
  %667 = vmatpush1.msra.mxu0 0.0
  %668 = vmatprep.subr.mxu0 0.0
  %669 = vmatpush1.msra.mxu0 0.0
  %670 = vmatprep.subr.mxu0 0.0
  %671 = vmatpush1.msra.mxu0 0.0
  %672 = vmatprep.subr.mxu0 0.0
  %673 = vmatpush1.msra.mxu0 0.0
  %674 = vmatprep.subr.mxu0 %v40
  %675 = vmatpush1.msra.mxu0 %v39
  %676 = vmatprep.subr.mxu0 %v36
  %677 = vmatpush1.msra.mxu0 %v35
  %678 = vmatprep.subr.mxu0 0.0
  %679 = vmatpush2.msra.mxu0 0.0
  %680 = vmatprep.subr.mxu0 0.0
  %681 = vmatpush2.msra.mxu0 0.0
  %682 = vmatprep.subr.mxu0 0.0
  %683 = vmatpush2.msra.mxu0 0.0
  %684 = vmatprep.subr.mxu0 0.0
  %685 = vmatpush2.msra.mxu0 0.0
  %686 = vmatprep.subr.mxu0 0.0
  %687 = vmatpush2.msra.mxu0 0.0
  %688 = vmatprep.subr.mxu0 0.0
  %689 = vmatpush2.msra.mxu0 0.0
  %690 = vmatprep.subr.mxu0 0.0
  %691 = vmatpush2.msra.mxu0 0.0
  %692 = vmatprep.subr.mxu0 0.0
  %693 = vmatpush2.msra.mxu0 0.0
  %694 = vmatprep.subr.mxu0 0.0
  %695 = vmatpush2.msra.mxu0 0.0
  %696 = vmatprep.subr.mxu0 0.0
  %697 = vmatpush2.msra.mxu0 0.0
  %698 = vmatprep.subr.mxu0 0.0
  %699 = vmatpush2.msra.mxu0 0.0
  %700 = vmatprep.subr.mxu0 0.0
  %701 = vmatpush2.msra.mxu0 0.0
  %702 = vmatprep.subr.mxu0 0.0
  %703 = vmatpush2.msra.mxu0 0.0
  %704 = vmatprep.subr.mxu0 0.0
  %705 = vmatpush2.msra.mxu0 0.0
  %706 = vmatprep.subr.mxu0 0.0
  %707 = vmatpush2.msra.mxu0 0.0
  %708 = vmatprep.subr.mxu0 0.0
  %709 = vmatpush2.msra.mxu0 0.0
  %710 = vmatprep.mubr.f32.mxu0 0.0
  %711 = vmatmul.mubr.f32.gmra.mxu0 %v438
  %v712 = vpop.f32.mrf.mxu0
  %v713 = vadd.f32 %v343, %v712
  %v714 = vpop.f32.mrf.mxu0
  %v715 = vadd.f32 %v345, %v714
  %716 = vmatprep.mubr.f32.mxu0 0.0
  %717 = vmatmul.mubr.f32.gmra.mxu0 %v441
  %v718 = vpop.f32.mrf.mxu0
  %v719 = vadd.f32 %v349, %v718
  %v720 = vpop.f32.mrf.mxu0
  %v721 = vadd.f32 %v351, %v720
  %722 = vmatprep.mubr.f32.mxu0 0.0
  %723 = vmatmul.mubr.f32.gmra.mxu0 %v444
  %v724 = vpop.f32.mrf.mxu0
  %v725 = vadd.f32 %v355, %v724
  %v726 = vpop.f32.mrf.mxu0
  %v727 = vadd.f32 %v357, %v726
  %728 = vmatprep.mubr.f32.mxu0 0.0
  %729 = vmatmul.mubr.f32.gmra.mxu0 %v447
  %v730 = vpop.f32.mrf.mxu0
  %v731 = vadd.f32 %v361, %v730
  %v732 = vpop.f32.mrf.mxu0
  %v733 = vadd.f32 %v363, %v732
  %734 = vmatprep.mubr.f32.mxu0 0.0
  %735 = vmatmul.mubr.f32.gmra.mxu0 %v450
  %v736 = vpop.f32.mrf.mxu0
  %v737 = vadd.f32 %v367, %v736
  %v738 = vpop.f32.mrf.mxu0
  %v739 = vadd.f32 %v369, %v738
  %740 = vmatprep.mubr.f32.mxu0 0.0
  %741 = vmatmul.mubr.f32.gmra.mxu0 %v453
  %v742 = vpop.f32.mrf.mxu0
  %v743 = vadd.f32 %v373, %v742
  %v744 = vpop.f32.mrf.mxu0
  %v745 = vadd.f32 %v375, %v744
  %746 = vmatprep.mubr.f32.mxu0 0.0
  %747 = vmatmul.mubr.f32.gmra.mxu0 %v456
  %v748 = vpop.f32.mrf.mxu0
  %v749 = vadd.f32 %v379, %v748
  %v750 = vpop.f32.mrf.mxu0
  %v751 = vadd.f32 %v381, %v750
  %752 = vmatprep.mubr.f32.mxu0 0.0
  %753 = vmatmul.mubr.f32.gmra.mxu0 %v459
  %v754 = vpop.f32.mrf.mxu0
  %v755 = vadd.f32 %v385, %v754
  %v756 = vpop.f32.mrf.mxu0
  %v757 = vadd.f32 %v387, %v756
  %758 = vmatprep.mubr.f32.mxu0 0.0
  %759 = vmatmul.mubr.f32.gmra.mxu0 %v462
  %v760 = vpop.f32.mrf.mxu0
  %v761 = vadd.f32 %v391, %v760
  %v762 = vpop.f32.mrf.mxu0
  %v763 = vadd.f32 %v393, %v762
  %764 = vmatprep.mubr.f32.mxu0 0.0
  %765 = vmatmul.mubr.f32.gmra.mxu0 %v465
  %v766 = vpop.f32.mrf.mxu0
  %v767 = vadd.f32 %v397, %v766
  %v768 = vpop.f32.mrf.mxu0
  %v769 = vadd.f32 %v399, %v768
  %770 = vmatprep.mubr.f32.mxu0 0.0
  %771 = vmatmul.mubr.f32.gmra.mxu0 %v468
  %v772 = vpop.f32.mrf.mxu0
  %v773 = vadd.f32 %v403, %v772
  %v774 = vpop.f32.mrf.mxu0
  %v775 = vadd.f32 %v405, %v774
  %776 = vmatprep.mubr.f32.mxu0 0.0
  %777 = vmatmul.mubr.f32.gmra.mxu0 %v471
  %v778 = vpop.f32.mrf.mxu0
  %v779 = vadd.f32 %v409, %v778
  %v780 = vpop.f32.mrf.mxu0
  %v781 = vadd.f32 %v411, %v780
  %782 = vmatprep.mubr.f32.mxu0 0.0
  %783 = vmatmul.mubr.f32.gmra.mxu0 %v474
  %v784 = vpop.f32.mrf.mxu0
  %v785 = vadd.f32 %v415, %v784
  %v786 = vpop.f32.mrf.mxu0
  %v787 = vadd.f32 %v417, %v786
  %788 = vmatprep.mubr.f32.mxu0 0.0
  %789 = vmatmul.mubr.f32.gmra.mxu0 %v477
  %v790 = vpop.f32.mrf.mxu0
  %v791 = vadd.f32 %v421, %v790
  %v792 = vpop.f32.mrf.mxu0
  %v793 = vadd.f32 %v423, %v792
  %794 = vmatprep.mubr.f32.mxu0 0.0
  %795 = vmatmul.mubr.f32.gmra.mxu0 %v480
  %v796 = vpop.f32.mrf.mxu0
  %v797 = vadd.f32 %v427, %v796
  %v798 = vpop.f32.mrf.mxu0
  %v799 = vadd.f32 %v429, %v798
  %800 = vmatprep.mubr.f32.mxu0 0.0
  %801 = vmatmul.mubr.f32.gmra.mxu0 %v483
  %v802 = vpop.f32.mrf.mxu0
  %v803 = vadd.f32 %v433, %v802
  %v804 = vpop.f32.mrf.mxu0
  %v805 = vadd.f32 %v435, %v804
  %806 = vdwg.mxu0
  %s807 = scalar_lea.vmem %s0, 16
  %v808 = vld [vmem:[%s807] sm:$0xff]
  %v809 = vld [vmem:[%s807 + $0x10] sm:$0xff]
  %v810 = vld [vmem:[%s807 + $0x20] sm:$0xff]
  %v811 = vld [vmem:[%s807 + $0x30] sm:$0xff]
  %v812 = vld [vmem:[%s807 + $0x40] sm:$0xff]
  %v813 = vld [vmem:[%s807 + $0x50] sm:$0xff]
  %v814 = vld [vmem:[%s807 + $0x60] sm:$0xff]
  %v815 = vld [vmem:[%s807 + $0x70] sm:$0xff]
  %v816 = vld [vmem:[%s807 + $0x90] sm:$0xff]
  %v817 = vld [vmem:[%s807 + $0xa0] sm:$0xff]
  %v818 = vld [vmem:[%s807 + $0xb0] sm:$0xff]
  %v819 = vld [vmem:[%s807 + $0xc0] sm:$0xff]
  %v820 = vld [vmem:[%s807 + $0xd0] sm:$0xff]
  %v821 = vld [vmem:[%s807 + $0xe0] sm:$0xff]
  %v822 = vld [vmem:[%s807 + $0xf0] sm:$0xff]
  %v823 = vld [vmem:[%s807 + $0x100] sm:$0xff]
  %s824 = scalar_lea.vmem %s1, 128
  %v825 = vld [vmem:[%s824] sm:$0xff]
  %v826 = vld [vmem:[%s824 + $0x8] sm:$0xff]
  %v827 = vld [vmem:[%s824 + $0x10] sm:$0xff]
  %v828 = vld [vmem:[%s824 + $0x18] sm:$0xff]
  %v829 = vld [vmem:[%s824 + $0x20] sm:$0xff]
  %v830 = vld [vmem:[%s824 + $0x28] sm:$0xff]
  %v831 = vld [vmem:[%s824 + $0x30] sm:$0xff]
  %v832 = vld [vmem:[%s824 + $0x38] sm:$0xff]
  %v834 = vsel %vm66, %v808, 0
  %v837 = vsel %vm66, %v809, 0
  %v840 = vsel %vm66, %v810, 0
  %v843 = vsel %vm66, %v811, 0
  %v846 = vsel %vm66, %v812, 0
  %v849 = vsel %vm66, %v813, 0
  %v852 = vsel %vm66, %v814, 0
  %v855 = vsel %vm66, %v815, 0
  %v858 = vsel %vm66, %v816, 0
  %v861 = vsel %vm66, %v817, 0
  %v864 = vsel %vm66, %v818, 0
  %v867 = vsel %vm66, %v819, 0
  %v870 = vsel %vm66, %v820, 0
  %v873 = vsel %vm66, %v821, 0
  %v876 = vsel %vm66, %v822, 0
  %v879 = vsel %vm66, %v823, 0
  %881 = vmatprep.subr.mxu0 0.0
  %882 = vmatpush1.msra.mxu0 0.0
  %883 = vmatprep.subr.mxu0 0.0
  %884 = vmatpush1.msra.mxu0 0.0
  %885 = vmatprep.subr.mxu0 0.0
  %886 = vmatpush1.msra.mxu0 0.0
  %887 = vmatprep.subr.mxu0 0.0
  %888 = vmatpush1.msra.mxu0 0.0
  %889 = vmatprep.subr.mxu0 0.0
  %890 = vmatpush1.msra.mxu0 0.0
  %891 = vmatprep.subr.mxu0 0.0
  %892 = vmatpush1.msra.mxu0 0.0
  %893 = vmatprep.subr.mxu0 0.0
  %894 = vmatpush1.msra.mxu0 0.0
  %895 = vmatprep.subr.mxu0 0.0
  %896 = vmatpush1.msra.mxu0 0.0
  %897 = vmatprep.subr.mxu0 0.0
  %898 = vmatpush1.msra.mxu0 0.0
  %899 = vmatprep.subr.mxu0 0.0
  %900 = vmatpush1.msra.mxu0 0.0
  %901 = vmatprep.subr.mxu0 0.0
  %902 = vmatpush1.msra.mxu0 0.0
  %903 = vmatprep.subr.mxu0 0.0
  %904 = vmatpush1.msra.mxu0 0.0
  %905 = vmatprep.subr.mxu0 0.0
  %906 = vmatpush1.msra.mxu0 0.0
  %907 = vmatprep.subr.mxu0 0.0
  %908 = vmatpush1.msra.mxu0 0.0
  %909 = vmatprep.subr.mxu0 %v830
  %910 = vmatpush1.msra.mxu0 %v829
  %911 = vmatprep.subr.mxu0 %v826
  %912 = vmatpush1.msra.mxu0 %v825
  %913 = vmatprep.subr.mxu0 0.0
  %914 = vmatpush2.msra.mxu0 0.0
  %915 = vmatprep.subr.mxu0 0.0
  %916 = vmatpush2.msra.mxu0 0.0
  %917 = vmatprep.subr.mxu0 0.0
  %918 = vmatpush2.msra.mxu0 0.0
  %919 = vmatprep.subr.mxu0 0.0
  %920 = vmatpush2.msra.mxu0 0.0
  %921 = vmatprep.subr.mxu0 0.0
  %922 = vmatpush2.msra.mxu0 0.0
  %923 = vmatprep.subr.mxu0 0.0
  %924 = vmatpush2.msra.mxu0 0.0
  %925 = vmatprep.subr.mxu0 0.0
  %926 = vmatpush2.msra.mxu0 0.0
  %927 = vmatprep.subr.mxu0 0.0
  %928 = vmatpush2.msra.mxu0 0.0
  %929 = vmatprep.subr.mxu0 0.0
  %930 = vmatpush2.msra.mxu0 0.0
  %931 = vmatprep.subr.mxu0 0.0
  %932 = vmatpush2.msra.mxu0 0.0
  %933 = vmatprep.subr.mxu0 0.0
  %934 = vmatpush2.msra.mxu0 0.0
  %935 = vmatprep.subr.mxu0 0.0
  %936 = vmatpush2.msra.mxu0 0.0
  %937 = vmatprep.subr.mxu0 0.0
  %938 = vmatpush2.msra.mxu0 0.0
  %939 = vmatprep.subr.mxu0 0.0
  %940 = vmatpush2.msra.mxu0 0.0
  %941 = vmatprep.subr.mxu0 0.0
  %942 = vmatpush2.msra.mxu0 0.0
  %943 = vmatprep.subr.mxu0 0.0
  %944 = vmatpush2.msra.mxu0 0.0
  %945 = vmatprep.mubr.f32.mxu0 0.0
  %946 = vmatmul.mubr.f32.gmra.mxu0 %v834
  %v947 = vpop.f32.mrf.mxu0
  %v948 = vadd.f32 0.0, %v947
  %v949 = vpop.f32.mrf.mxu0
  %v950 = vadd.f32 0.0, %v949
  %951 = vmatprep.mubr.f32.mxu0 0.0
  %952 = vmatmul.mubr.f32.gmra.mxu0 %v837
  %v953 = vpop.f32.mrf.mxu0
  %v954 = vadd.f32 0.0, %v953
  %v955 = vpop.f32.mrf.mxu0
  %v956 = vadd.f32 0.0, %v955
  %957 = vmatprep.mubr.f32.mxu0 0.0
  %958 = vmatmul.mubr.f32.gmra.mxu0 %v840
  %v959 = vpop.f32.mrf.mxu0
  %v960 = vadd.f32 0.0, %v959
  %v961 = vpop.f32.mrf.mxu0
  %v962 = vadd.f32 0.0, %v961
  %963 = vmatprep.mubr.f32.mxu0 0.0
  %964 = vmatmul.mubr.f32.gmra.mxu0 %v843
  %v965 = vpop.f32.mrf.mxu0
  %v966 = vadd.f32 0.0, %v965
  %v967 = vpop.f32.mrf.mxu0
  %v968 = vadd.f32 0.0, %v967
  %969 = vmatprep.mubr.f32.mxu0 0.0
  %970 = vmatmul.mubr.f32.gmra.mxu0 %v846
  %v971 = vpop.f32.mrf.mxu0
  %v972 = vadd.f32 0.0, %v971
  %v973 = vpop.f32.mrf.mxu0
  %v974 = vadd.f32 0.0, %v973
  %975 = vmatprep.mubr.f32.mxu0 0.0
  %976 = vmatmul.mubr.f32.gmra.mxu0 %v849
  %v977 = vpop.f32.mrf.mxu0
  %v978 = vadd.f32 0.0, %v977
  %v979 = vpop.f32.mrf.mxu0
  %v980 = vadd.f32 0.0, %v979
  %981 = vmatprep.mubr.f32.mxu0 0.0
  %982 = vmatmul.mubr.f32.gmra.mxu0 %v852
  %v983 = vpop.f32.mrf.mxu0
  %v984 = vadd.f32 0.0, %v983
  %v985 = vpop.f32.mrf.mxu0
  %v986 = vadd.f32 0.0, %v985
  %987 = vmatprep.mubr.f32.mxu0 0.0
  %988 = vmatmul.mubr.f32.gmra.mxu0 %v855
  %v989 = vpop.f32.mrf.mxu0
  %v990 = vadd.f32 0.0, %v989
  %v991 = vpop.f32.mrf.mxu0
  %v992 = vadd.f32 0.0, %v991
  %993 = vmatprep.mubr.f32.mxu0 0.0
  %994 = vmatmul.mubr.f32.gmra.mxu0 %v858
  %v995 = vpop.f32.mrf.mxu0
  %v996 = vadd.f32 0.0, %v995
  %v997 = vpop.f32.mrf.mxu0
  %v998 = vadd.f32 0.0, %v997
  %999 = vmatprep.mubr.f32.mxu0 0.0
  %1000 = vmatmul.mubr.f32.gmra.mxu0 %v861
  %v1001 = vpop.f32.mrf.mxu0
  %v1002 = vadd.f32 0.0, %v1001
  %v1003 = vpop.f32.mrf.mxu0
  %v1004 = vadd.f32 0.0, %v1003
  %1005 = vmatprep.mubr.f32.mxu0 0.0
  %1006 = vmatmul.mubr.f32.gmra.mxu0 %v864
  %v1007 = vpop.f32.mrf.mxu0
  %v1008 = vadd.f32 0.0, %v1007
  %v1009 = vpop.f32.mrf.mxu0
  %v1010 = vadd.f32 0.0, %v1009
  %1011 = vmatprep.mubr.f32.mxu0 0.0
  %1012 = vmatmul.mubr.f32.gmra.mxu0 %v867
  %v1013 = vpop.f32.mrf.mxu0
  %v1014 = vadd.f32 0.0, %v1013
  %v1015 = vpop.f32.mrf.mxu0
  %v1016 = vadd.f32 0.0, %v1015
  %1017 = vmatprep.mubr.f32.mxu0 0.0
  %1018 = vmatmul.mubr.f32.gmra.mxu0 %v870
  %v1019 = vpop.f32.mrf.mxu0
  %v1020 = vadd.f32 0.0, %v1019
  %v1021 = vpop.f32.mrf.mxu0
  %v1022 = vadd.f32 0.0, %v1021
  %1023 = vmatprep.mubr.f32.mxu0 0.0
  %1024 = vmatmul.mubr.f32.gmra.mxu0 %v873
  %v1025 = vpop.f32.mrf.mxu0
  %v1026 = vadd.f32 0.0, %v1025
  %v1027 = vpop.f32.mrf.mxu0
  %v1028 = vadd.f32 0.0, %v1027
  %1029 = vmatprep.mubr.f32.mxu0 0.0
  %1030 = vmatmul.mubr.f32.gmra.mxu0 %v876
  %v1031 = vpop.f32.mrf.mxu0
  %v1032 = vadd.f32 0.0, %v1031
  %v1033 = vpop.f32.mrf.mxu0
  %v1034 = vadd.f32 0.0, %v1033
  %1035 = vmatprep.mubr.f32.mxu0 0.0
  %1036 = vmatmul.mubr.f32.gmra.mxu0 %v879
  %v1037 = vpop.f32.mrf.mxu0
  %v1038 = vadd.f32 0.0, %v1037
  %v1039 = vpop.f32.mrf.mxu0
  %v1040 = vadd.f32 0.0, %v1039
  %1041 = vdwg.mxu0
  %1042 = vmatprep.subr.mxu0 0.0
  %1043 = vmatpush1.msra.mxu0 0.0
  %1044 = vmatprep.subr.mxu0 0.0
  %1045 = vmatpush1.msra.mxu0 0.0
  %1046 = vmatprep.subr.mxu0 0.0
  %1047 = vmatpush1.msra.mxu0 0.0
  %1048 = vmatprep.subr.mxu0 0.0
  %1049 = vmatpush1.msra.mxu0 0.0
  %1050 = vmatprep.subr.mxu0 0.0
  %1051 = vmatpush1.msra.mxu0 0.0
  %1052 = vmatprep.subr.mxu0 0.0
  %1053 = vmatpush1.msra.mxu0 0.0
  %1054 = vmatprep.subr.mxu0 0.0
  %1055 = vmatpush1.msra.mxu0 0.0
  %1056 = vmatprep.subr.mxu0 0.0
  %1057 = vmatpush1.msra.mxu0 0.0
  %1058 = vmatprep.subr.mxu0 0.0
  %1059 = vmatpush1.msra.mxu0 0.0
  %1060 = vmatprep.subr.mxu0 0.0
  %1061 = vmatpush1.msra.mxu0 0.0
  %1062 = vmatprep.subr.mxu0 0.0
  %1063 = vmatpush1.msra.mxu0 0.0
  %1064 = vmatprep.subr.mxu0 0.0
  %1065 = vmatpush1.msra.mxu0 0.0
  %1066 = vmatprep.subr.mxu0 0.0
  %1067 = vmatpush1.msra.mxu0 0.0
  %1068 = vmatprep.subr.mxu0 0.0
  %1069 = vmatpush1.msra.mxu0 0.0
  %1070 = vmatprep.subr.mxu0 %v832
  %1071 = vmatpush1.msra.mxu0 %v831
  %1072 = vmatprep.subr.mxu0 %v828
  %1073 = vmatpush1.msra.mxu0 %v827
  %1074 = vmatprep.subr.mxu0 0.0
  %1075 = vmatpush2.msra.mxu0 0.0
  %1076 = vmatprep.subr.mxu0 0.0
  %1077 = vmatpush2.msra.mxu0 0.0
  %1078 = vmatprep.subr.mxu0 0.0
  %1079 = vmatpush2.msra.mxu0 0.0
  %1080 = vmatprep.subr.mxu0 0.0
  %1081 = vmatpush2.msra.mxu0 0.0
  %1082 = vmatprep.subr.mxu0 0.0
  %1083 = vmatpush2.msra.mxu0 0.0
  %1084 = vmatprep.subr.mxu0 0.0
  %1085 = vmatpush2.msra.mxu0 0.0
  %1086 = vmatprep.subr.mxu0 0.0
  %1087 = vmatpush2.msra.mxu0 0.0
  %1088 = vmatprep.subr.mxu0 0.0
  %1089 = vmatpush2.msra.mxu0 0.0
  %1090 = vmatprep.subr.mxu0 0.0
  %1091 = vmatpush2.msra.mxu0 0.0
  %1092 = vmatprep.subr.mxu0 0.0
  %1093 = vmatpush2.msra.mxu0 0.0
  %1094 = vmatprep.subr.mxu0 0.0
  %1095 = vmatpush2.msra.mxu0 0.0
  %1096 = vmatprep.subr.mxu0 0.0
  %1097 = vmatpush2.msra.mxu0 0.0
  %1098 = vmatprep.subr.mxu0 0.0
  %1099 = vmatpush2.msra.mxu0 0.0
  %1100 = vmatprep.subr.mxu0 0.0
  %1101 = vmatpush2.msra.mxu0 0.0
  %1102 = vmatprep.subr.mxu0 0.0
  %1103 = vmatpush2.msra.mxu0 0.0
  %1104 = vmatprep.subr.mxu0 0.0
  %1105 = vmatpush2.msra.mxu0 0.0
  %1106 = vmatprep.mubr.f32.mxu0 0.0
  %1107 = vmatmul.mubr.f32.gmra.mxu0 %v834
  %v1108 = vpop.f32.mrf.mxu0
  %v1109 = vadd.f32 0.0, %v1108
  %v1110 = vpop.f32.mrf.mxu0
  %v1111 = vadd.f32 0.0, %v1110
  %1112 = vmatprep.mubr.f32.mxu0 0.0
  %1113 = vmatmul.mubr.f32.gmra.mxu0 %v837
  %v1114 = vpop.f32.mrf.mxu0
  %v1115 = vadd.f32 0.0, %v1114
  %v1116 = vpop.f32.mrf.mxu0
  %v1117 = vadd.f32 0.0, %v1116
  %1118 = vmatprep.mubr.f32.mxu0 0.0
  %1119 = vmatmul.mubr.f32.gmra.mxu0 %v840
  %v1120 = vpop.f32.mrf.mxu0
  %v1121 = vadd.f32 0.0, %v1120
  %v1122 = vpop.f32.mrf.mxu0
  %v1123 = vadd.f32 0.0, %v1122
  %1124 = vmatprep.mubr.f32.mxu0 0.0
  %1125 = vmatmul.mubr.f32.gmra.mxu0 %v843
  %v1126 = vpop.f32.mrf.mxu0
  %v1127 = vadd.f32 0.0, %v1126
  %v1128 = vpop.f32.mrf.mxu0
  %v1129 = vadd.f32 0.0, %v1128
  %1130 = vmatprep.mubr.f32.mxu0 0.0
  %1131 = vmatmul.mubr.f32.gmra.mxu0 %v846
  %v1132 = vpop.f32.mrf.mxu0
  %v1133 = vadd.f32 0.0, %v1132
  %v1134 = vpop.f32.mrf.mxu0
  %v1135 = vadd.f32 0.0, %v1134
  %1136 = vmatprep.mubr.f32.mxu0 0.0
  %1137 = vmatmul.mubr.f32.gmra.mxu0 %v849
  %v1138 = vpop.f32.mrf.mxu0
  %v1139 = vadd.f32 0.0, %v1138
  %v1140 = vpop.f32.mrf.mxu0
  %v1141 = vadd.f32 0.0, %v1140
  %1142 = vmatprep.mubr.f32.mxu0 0.0
  %1143 = vmatmul.mubr.f32.gmra.mxu0 %v852
  %v1144 = vpop.f32.mrf.mxu0
  %v1145 = vadd.f32 0.0, %v1144
  %v1146 = vpop.f32.mrf.mxu0
  %v1147 = vadd.f32 0.0, %v1146
  %1148 = vmatprep.mubr.f32.mxu0 0.0
  %1149 = vmatmul.mubr.f32.gmra.mxu0 %v855
  %v1150 = vpop.f32.mrf.mxu0
  %v1151 = vadd.f32 0.0, %v1150
  %v1152 = vpop.f32.mrf.mxu0
  %v1153 = vadd.f32 0.0, %v1152
  %1154 = vmatprep.mubr.f32.mxu0 0.0
  %1155 = vmatmul.mubr.f32.gmra.mxu0 %v858
  %v1156 = vpop.f32.mrf.mxu0
  %v1157 = vadd.f32 0.0, %v1156
  %v1158 = vpop.f32.mrf.mxu0
  %v1159 = vadd.f32 0.0, %v1158
  %1160 = vmatprep.mubr.f32.mxu0 0.0
  %1161 = vmatmul.mubr.f32.gmra.mxu0 %v861
  %v1162 = vpop.f32.mrf.mxu0
  %v1163 = vadd.f32 0.0, %v1162
  %v1164 = vpop.f32.mrf.mxu0
  %v1165 = vadd.f32 0.0, %v1164
  %1166 = vmatprep.mubr.f32.mxu0 0.0
  %1167 = vmatmul.mubr.f32.gmra.mxu0 %v864
  %v1168 = vpop.f32.mrf.mxu0
  %v1169 = vadd.f32 0.0, %v1168
  %v1170 = vpop.f32.mrf.mxu0
  %v1171 = vadd.f32 0.0, %v1170
  %1172 = vmatprep.mubr.f32.mxu0 0.0
  %1173 = vmatmul.mubr.f32.gmra.mxu0 %v867
  %v1174 = vpop.f32.mrf.mxu0
  %v1175 = vadd.f32 0.0, %v1174
  %v1176 = vpop.f32.mrf.mxu0
  %v1177 = vadd.f32 0.0, %v1176
  %1178 = vmatprep.mubr.f32.mxu0 0.0
  %1179 = vmatmul.mubr.f32.gmra.mxu0 %v870
  %v1180 = vpop.f32.mrf.mxu0
  %v1181 = vadd.f32 0.0, %v1180
  %v1182 = vpop.f32.mrf.mxu0
  %v1183 = vadd.f32 0.0, %v1182
  %1184 = vmatprep.mubr.f32.mxu0 0.0
  %1185 = vmatmul.mubr.f32.gmra.mxu0 %v873
  %v1186 = vpop.f32.mrf.mxu0
  %v1187 = vadd.f32 0.0, %v1186
  %v1188 = vpop.f32.mrf.mxu0
  %v1189 = vadd.f32 0.0, %v1188
  %1190 = vmatprep.mubr.f32.mxu0 0.0
  %1191 = vmatmul.mubr.f32.gmra.mxu0 %v876
  %v1192 = vpop.f32.mrf.mxu0
  %v1193 = vadd.f32 0.0, %v1192
  %v1194 = vpop.f32.mrf.mxu0
  %v1195 = vadd.f32 0.0, %v1194
  %1196 = vmatprep.mubr.f32.mxu0 0.0
  %1197 = vmatmul.mubr.f32.gmra.mxu0 %v879
  %v1198 = vpop.f32.mrf.mxu0
  %v1199 = vadd.f32 0.0, %v1198
  %v1200 = vpop.f32.mrf.mxu0
  %v1201 = vadd.f32 0.0, %v1200
  %1202 = vdwg.mxu0
  %v1203 = vadd.f32 %v552, %v948
  %v1204 = vadd.f32 %v554, %v950
  %v1205 = vadd.f32 %v713, %v1109
  %v1206 = vadd.f32 %v715, %v1111
  %v1207 = vadd.f32 %v558, %v954
  %v1208 = vadd.f32 %v560, %v956
  %v1209 = vadd.f32 %v719, %v1115
  %v1210 = vadd.f32 %v721, %v1117
  %v1211 = vadd.f32 %v564, %v960
  %v1212 = vadd.f32 %v566, %v962
  %v1213 = vadd.f32 %v725, %v1121
  %v1214 = vadd.f32 %v727, %v1123
  %v1215 = vadd.f32 %v570, %v966
  %v1216 = vadd.f32 %v572, %v968
  %v1217 = vadd.f32 %v731, %v1127
  %v1218 = vadd.f32 %v733, %v1129
  %v1219 = vadd.f32 %v576, %v972
  %v1220 = vadd.f32 %v578, %v974
  %v1221 = vadd.f32 %v737, %v1133
  %v1222 = vadd.f32 %v739, %v1135
  %v1223 = vadd.f32 %v582, %v978
  %v1224 = vadd.f32 %v584, %v980
  %v1225 = vadd.f32 %v743, %v1139
  %v1226 = vadd.f32 %v745, %v1141
  %v1227 = vadd.f32 %v588, %v984
  %v1228 = vadd.f32 %v590, %v986
  %v1229 = vadd.f32 %v749, %v1145
  %v1230 = vadd.f32 %v751, %v1147
  %v1231 = vadd.f32 %v594, %v990
  %v1232 = vadd.f32 %v596, %v992
  %v1233 = vadd.f32 %v755, %v1151
  %v1234 = vadd.f32 %v757, %v1153
  %v1235 = vadd.f32 %v600, %v996
  %v1236 = vadd.f32 %v602, %v998
  %v1237 = vadd.f32 %v761, %v1157
  %v1238 = vadd.f32 %v763, %v1159
  %v1239 = vadd.f32 %v606, %v1002
  %v1240 = vadd.f32 %v608, %v1004
  %v1241 = vadd.f32 %v767, %v1163
  %v1242 = vadd.f32 %v769, %v1165
  %v1243 = vadd.f32 %v612, %v1008
  %v1244 = vadd.f32 %v614, %v1010
  %v1245 = vadd.f32 %v773, %v1169
  %v1246 = vadd.f32 %v775, %v1171
  %v1247 = vadd.f32 %v618, %v1014
  %v1248 = vadd.f32 %v620, %v1016
  %v1249 = vadd.f32 %v779, %v1175
  %v1250 = vadd.f32 %v781, %v1177
  %v1251 = vadd.f32 %v624, %v1020
  %v1252 = vadd.f32 %v626, %v1022
  %v1253 = vadd.f32 %v785, %v1181
  %v1254 = vadd.f32 %v787, %v1183
  %v1255 = vadd.f32 %v630, %v1026
  %v1256 = vadd.f32 %v632, %v1028
  %v1257 = vadd.f32 %v791, %v1187
  %v1258 = vadd.f32 %v793, %v1189
  %v1259 = vadd.f32 %v636, %v1032
  %v1260 = vadd.f32 %v638, %v1034
  %v1261 = vadd.f32 %v797, %v1193
  %v1262 = vadd.f32 %v799, %v1195
  %v1263 = vadd.f32 %v642, %v1038
  %v1264 = vadd.f32 %v644, %v1040
  %v1265 = vadd.f32 %v803, %v1199
  %v1266 = vadd.f32 %v805, %v1201
  %v1267 = vld [vmem:[%s807 + $0x1] sm:$0xff]
  %v1268 = vld [vmem:[%s807 + $0x11] sm:$0xff]
  %v1269 = vld [vmem:[%s807 + $0x21] sm:$0xff]
  %v1270 = vld [vmem:[%s807 + $0x31] sm:$0xff]
  %v1271 = vld [vmem:[%s807 + $0x41] sm:$0xff]
  %v1272 = vld [vmem:[%s807 + $0x51] sm:$0xff]
  %v1273 = vld [vmem:[%s807 + $0x61] sm:$0xff]
  %v1274 = vld [vmem:[%s807 + $0x71] sm:$0xff]
  %v1275 = vld [vmem:[%s807 + $0x91] sm:$0xff]
  %v1276 = vld [vmem:[%s807 + $0xa1] sm:$0xff]
  %v1277 = vld [vmem:[%s807 + $0xb1] sm:$0xff]
  %v1278 = vld [vmem:[%s807 + $0xc1] sm:$0xff]
  %v1279 = vld [vmem:[%s807 + $0xd1] sm:$0xff]
  %v1280 = vld [vmem:[%s807 + $0xe1] sm:$0xff]
  %v1281 = vld [vmem:[%s807 + $0xf1] sm:$0xff]
  %v1282 = vld [vmem:[%s807 + $0x101] sm:$0xff]
  %s1283 = scalar_lea.vmem %s1, 192
  %v1284 = vld [vmem:[%s1283] sm:$0xff]
  %v1285 = vld [vmem:[%s1283 + $0x8] sm:$0xff]
  %v1286 = vld [vmem:[%s1283 + $0x10] sm:$0xff]
  %v1287 = vld [vmem:[%s1283 + $0x18] sm:$0xff]
  %v1288 = vld [vmem:[%s1283 + $0x20] sm:$0xff]
  %v1289 = vld [vmem:[%s1283 + $0x28] sm:$0xff]
  %v1290 = vld [vmem:[%s1283 + $0x30] sm:$0xff]
  %v1291 = vld [vmem:[%s1283 + $0x38] sm:$0xff]
  %v1293 = vsel %vm66, %v1267, 0
  %v1296 = vsel %vm66, %v1268, 0
  %v1299 = vsel %vm66, %v1269, 0
  %v1302 = vsel %vm66, %v1270, 0
  %v1305 = vsel %vm66, %v1271, 0
  %v1308 = vsel %vm66, %v1272, 0
  %v1311 = vsel %vm66, %v1273, 0
  %v1314 = vsel %vm66, %v1274, 0
  %v1317 = vsel %vm66, %v1275, 0
  %v1320 = vsel %vm66, %v1276, 0
  %v1323 = vsel %vm66, %v1277, 0
  %v1326 = vsel %vm66, %v1278, 0
  %v1329 = vsel %vm66, %v1279, 0
  %v1332 = vsel %vm66, %v1280, 0
  %v1335 = vsel %vm66, %v1281, 0
  %v1338 = vsel %vm66, %v1282, 0
  %1340 = vmatprep.subr.mxu0 0.0
  %1341 = vmatpush1.msra.mxu0 0.0
  %1342 = vmatprep.subr.mxu0 0.0
  %1343 = vmatpush1.msra.mxu0 0.0
  %1344 = vmatprep.subr.mxu0 0.0
  %1345 = vmatpush1.msra.mxu0 0.0
  %1346 = vmatprep.subr.mxu0 0.0
  %1347 = vmatpush1.msra.mxu0 0.0
  %1348 = vmatprep.subr.mxu0 0.0
  %1349 = vmatpush1.msra.mxu0 0.0
  %1350 = vmatprep.subr.mxu0 0.0
  %1351 = vmatpush1.msra.mxu0 0.0
  %1352 = vmatprep.subr.mxu0 0.0
  %1353 = vmatpush1.msra.mxu0 0.0
  %1354 = vmatprep.subr.mxu0 0.0
  %1355 = vmatpush1.msra.mxu0 0.0
  %1356 = vmatprep.subr.mxu0 0.0
  %1357 = vmatpush1.msra.mxu0 0.0
  %1358 = vmatprep.subr.mxu0 0.0
  %1359 = vmatpush1.msra.mxu0 0.0
  %1360 = vmatprep.subr.mxu0 0.0
  %1361 = vmatpush1.msra.mxu0 0.0
  %1362 = vmatprep.subr.mxu0 0.0
  %1363 = vmatpush1.msra.mxu0 0.0
  %1364 = vmatprep.subr.mxu0 0.0
  %1365 = vmatpush1.msra.mxu0 0.0
  %1366 = vmatprep.subr.mxu0 0.0
  %1367 = vmatpush1.msra.mxu0 0.0
  %1368 = vmatprep.subr.mxu0 %v1289
  %1369 = vmatpush1.msra.mxu0 %v1288
  %1370 = vmatprep.subr.mxu0 %v1285
  %1371 = vmatpush1.msra.mxu0 %v1284
  %1372 = vmatprep.subr.mxu0 0.0
  %1373 = vmatpush2.msra.mxu0 0.0
  %1374 = vmatprep.subr.mxu0 0.0
  %1375 = vmatpush2.msra.mxu0 0.0
  %1376 = vmatprep.subr.mxu0 0.0
  %1377 = vmatpush2.msra.mxu0 0.0
  %1378 = vmatprep.subr.mxu0 0.0
  %1379 = vmatpush2.msra.mxu0 0.0
  %1380 = vmatprep.subr.mxu0 0.0
  %1381 = vmatpush2.msra.mxu0 0.0
  %1382 = vmatprep.subr.mxu0 0.0
  %1383 = vmatpush2.msra.mxu0 0.0
  %1384 = vmatprep.subr.mxu0 0.0
  %1385 = vmatpush2.msra.mxu0 0.0
  %1386 = vmatprep.subr.mxu0 0.0
  %1387 = vmatpush2.msra.mxu0 0.0
  %1388 = vmatprep.subr.mxu0 0.0
  %1389 = vmatpush2.msra.mxu0 0.0
  %1390 = vmatprep.subr.mxu0 0.0
  %1391 = vmatpush2.msra.mxu0 0.0
  %1392 = vmatprep.subr.mxu0 0.0
  %1393 = vmatpush2.msra.mxu0 0.0
  %1394 = vmatprep.subr.mxu0 0.0
  %1395 = vmatpush2.msra.mxu0 0.0
  %1396 = vmatprep.subr.mxu0 0.0
  %1397 = vmatpush2.msra.mxu0 0.0
  %1398 = vmatprep.subr.mxu0 0.0
  %1399 = vmatpush2.msra.mxu0 0.0
  %1400 = vmatprep.subr.mxu0 0.0
  %1401 = vmatpush2.msra.mxu0 0.0
  %1402 = vmatprep.subr.mxu0 0.0
  %1403 = vmatpush2.msra.mxu0 0.0
  %1404 = vmatprep.mubr.f32.mxu0 0.0
  %1405 = vmatmul.mubr.f32.gmra.mxu0 %v1293
  %v1406 = vpop.f32.mrf.mxu0
  %v1407 = vadd.f32 0.0, %v1406
  %v1408 = vpop.f32.mrf.mxu0
  %v1409 = vadd.f32 0.0, %v1408
  %1410 = vmatprep.mubr.f32.mxu0 0.0
  %1411 = vmatmul.mubr.f32.gmra.mxu0 %v1296
  %v1412 = vpop.f32.mrf.mxu0
  %v1413 = vadd.f32 0.0, %v1412
  %v1414 = vpop.f32.mrf.mxu0
  %v1415 = vadd.f32 0.0, %v1414
  %1416 = vmatprep.mubr.f32.mxu0 0.0
  %1417 = vmatmul.mubr.f32.gmra.mxu0 %v1299
  %v1418 = vpop.f32.mrf.mxu0
  %v1419 = vadd.f32 0.0, %v1418
  %v1420 = vpop.f32.mrf.mxu0
  %v1421 = vadd.f32 0.0, %v1420
  %1422 = vmatprep.mubr.f32.mxu0 0.0
  %1423 = vmatmul.mubr.f32.gmra.mxu0 %v1302
  %v1424 = vpop.f32.mrf.mxu0
  %v1425 = vadd.f32 0.0, %v1424
  %v1426 = vpop.f32.mrf.mxu0
  %v1427 = vadd.f32 0.0, %v1426
  %1428 = vmatprep.mubr.f32.mxu0 0.0
  %1429 = vmatmul.mubr.f32.gmra.mxu0 %v1305
  %v1430 = vpop.f32.mrf.mxu0
  %v1431 = vadd.f32 0.0, %v1430
  %v1432 = vpop.f32.mrf.mxu0
  %v1433 = vadd.f32 0.0, %v1432
  %1434 = vmatprep.mubr.f32.mxu0 0.0
  %1435 = vmatmul.mubr.f32.gmra.mxu0 %v1308
  %v1436 = vpop.f32.mrf.mxu0
  %v1437 = vadd.f32 0.0, %v1436
  %v1438 = vpop.f32.mrf.mxu0
  %v1439 = vadd.f32 0.0, %v1438
  %1440 = vmatprep.mubr.f32.mxu0 0.0
  %1441 = vmatmul.mubr.f32.gmra.mxu0 %v1311
  %v1442 = vpop.f32.mrf.mxu0
  %v1443 = vadd.f32 0.0, %v1442
  %v1444 = vpop.f32.mrf.mxu0
  %v1445 = vadd.f32 0.0, %v1444
  %1446 = vmatprep.mubr.f32.mxu0 0.0
  %1447 = vmatmul.mubr.f32.gmra.mxu0 %v1314
  %v1448 = vpop.f32.mrf.mxu0
  %v1449 = vadd.f32 0.0, %v1448
  %v1450 = vpop.f32.mrf.mxu0
  %v1451 = vadd.f32 0.0, %v1450
  %1452 = vmatprep.mubr.f32.mxu0 0.0
  %1453 = vmatmul.mubr.f32.gmra.mxu0 %v1317
  %v1454 = vpop.f32.mrf.mxu0
  %v1455 = vadd.f32 0.0, %v1454
  %v1456 = vpop.f32.mrf.mxu0
  %v1457 = vadd.f32 0.0, %v1456
  %1458 = vmatprep.mubr.f32.mxu0 0.0
  %1459 = vmatmul.mubr.f32.gmra.mxu0 %v1320
  %v1460 = vpop.f32.mrf.mxu0
  %v1461 = vadd.f32 0.0, %v1460
  %v1462 = vpop.f32.mrf.mxu0
  %v1463 = vadd.f32 0.0, %v1462
  %1464 = vmatprep.mubr.f32.mxu0 0.0
  %1465 = vmatmul.mubr.f32.gmra.mxu0 %v1323
  %v1466 = vpop.f32.mrf.mxu0
  %v1467 = vadd.f32 0.0, %v1466
  %v1468 = vpop.f32.mrf.mxu0
  %v1469 = vadd.f32 0.0, %v1468
  %1470 = vmatprep.mubr.f32.mxu0 0.0
  %1471 = vmatmul.mubr.f32.gmra.mxu0 %v1326
  %v1472 = vpop.f32.mrf.mxu0
  %v1473 = vadd.f32 0.0, %v1472
  %v1474 = vpop.f32.mrf.mxu0
  %v1475 = vadd.f32 0.0, %v1474
  %1476 = vmatprep.mubr.f32.mxu0 0.0
  %1477 = vmatmul.mubr.f32.gmra.mxu0 %v1329
  %v1478 = vpop.f32.mrf.mxu0
  %v1479 = vadd.f32 0.0, %v1478
  %v1480 = vpop.f32.mrf.mxu0
  %v1481 = vadd.f32 0.0, %v1480
  %1482 = vmatprep.mubr.f32.mxu0 0.0
  %1483 = vmatmul.mubr.f32.gmra.mxu0 %v1332
  %v1484 = vpop.f32.mrf.mxu0
  %v1485 = vadd.f32 0.0, %v1484
  %v1486 = vpop.f32.mrf.mxu0
  %v1487 = vadd.f32 0.0, %v1486
  %1488 = vmatprep.mubr.f32.mxu0 0.0
  %1489 = vmatmul.mubr.f32.gmra.mxu0 %v1335
  %v1490 = vpop.f32.mrf.mxu0
  %v1491 = vadd.f32 0.0, %v1490
  %v1492 = vpop.f32.mrf.mxu0
  %v1493 = vadd.f32 0.0, %v1492
  %1494 = vmatprep.mubr.f32.mxu0 0.0
  %1495 = vmatmul.mubr.f32.gmra.mxu0 %v1338
  %v1496 = vpop.f32.mrf.mxu0
  %v1497 = vadd.f32 0.0, %v1496
  %v1498 = vpop.f32.mrf.mxu0
  %v1499 = vadd.f32 0.0, %v1498
  %1500 = vdwg.mxu0
  %1501 = vmatprep.subr.mxu0 0.0
  %1502 = vmatpush1.msra.mxu0 0.0
  %1503 = vmatprep.subr.mxu0 0.0
  %1504 = vmatpush1.msra.mxu0 0.0
  %1505 = vmatprep.subr.mxu0 0.0
  %1506 = vmatpush1.msra.mxu0 0.0
  %1507 = vmatprep.subr.mxu0 0.0
  %1508 = vmatpush1.msra.mxu0 0.0
  %1509 = vmatprep.subr.mxu0 0.0
  %1510 = vmatpush1.msra.mxu0 0.0
  %1511 = vmatprep.subr.mxu0 0.0
  %1512 = vmatpush1.msra.mxu0 0.0
  %1513 = vmatprep.subr.mxu0 0.0
  %1514 = vmatpush1.msra.mxu0 0.0
  %1515 = vmatprep.subr.mxu0 0.0
  %1516 = vmatpush1.msra.mxu0 0.0
  %1517 = vmatprep.subr.mxu0 0.0
  %1518 = vmatpush1.msra.mxu0 0.0
  %1519 = vmatprep.subr.mxu0 0.0
  %1520 = vmatpush1.msra.mxu0 0.0
  %1521 = vmatprep.subr.mxu0 0.0
  %1522 = vmatpush1.msra.mxu0 0.0
  %1523 = vmatprep.subr.mxu0 0.0
  %1524 = vmatpush1.msra.mxu0 0.0
  %1525 = vmatprep.subr.mxu0 0.0
  %1526 = vmatpush1.msra.mxu0 0.0
  %1527 = vmatprep.subr.mxu0 0.0
  %1528 = vmatpush1.msra.mxu0 0.0
  %1529 = vmatprep.subr.mxu0 %v1291
  %1530 = vmatpush1.msra.mxu0 %v1290
  %1531 = vmatprep.subr.mxu0 %v1287
  %1532 = vmatpush1.msra.mxu0 %v1286
  %1533 = vmatprep.subr.mxu0 0.0
  %1534 = vmatpush2.msra.mxu0 0.0
  %1535 = vmatprep.subr.mxu0 0.0
  %1536 = vmatpush2.msra.mxu0 0.0
  %1537 = vmatprep.subr.mxu0 0.0
  %1538 = vmatpush2.msra.mxu0 0.0
  %1539 = vmatprep.subr.mxu0 0.0
  %1540 = vmatpush2.msra.mxu0 0.0
  %1541 = vmatprep.subr.mxu0 0.0
  %1542 = vmatpush2.msra.mxu0 0.0
  %1543 = vmatprep.subr.mxu0 0.0
  %1544 = vmatpush2.msra.mxu0 0.0
  %1545 = vmatprep.subr.mxu0 0.0
  %1546 = vmatpush2.msra.mxu0 0.0
  %1547 = vmatprep.subr.mxu0 0.0
  %1548 = vmatpush2.msra.mxu0 0.0
  %1549 = vmatprep.subr.mxu0 0.0
  %1550 = vmatpush2.msra.mxu0 0.0
  %1551 = vmatprep.subr.mxu0 0.0
  %1552 = vmatpush2.msra.mxu0 0.0
  %1553 = vmatprep.subr.mxu0 0.0
  %1554 = vmatpush2.msra.mxu0 0.0
  %1555 = vmatprep.subr.mxu0 0.0
  %1556 = vmatpush2.msra.mxu0 0.0
  %1557 = vmatprep.subr.mxu0 0.0
  %1558 = vmatpush2.msra.mxu0 0.0
  %1559 = vmatprep.subr.mxu0 0.0
  %1560 = vmatpush2.msra.mxu0 0.0
  %1561 = vmatprep.subr.mxu0 0.0
  %1562 = vmatpush2.msra.mxu0 0.0
  %1563 = vmatprep.subr.mxu0 0.0
  %1564 = vmatpush2.msra.mxu0 0.0
  %1565 = vmatprep.mubr.f32.mxu0 0.0
  %1566 = vmatmul.mubr.f32.gmra.mxu0 %v1293
  %v1567 = vpop.f32.mrf.mxu0
  %v1568 = vadd.f32 0.0, %v1567
  %v1569 = vpop.f32.mrf.mxu0
  %v1570 = vadd.f32 0.0, %v1569
  %1571 = vmatprep.mubr.f32.mxu0 0.0
  %1572 = vmatmul.mubr.f32.gmra.mxu0 %v1296
  %v1573 = vpop.f32.mrf.mxu0
  %v1574 = vadd.f32 0.0, %v1573
  %v1575 = vpop.f32.mrf.mxu0
  %v1576 = vadd.f32 0.0, %v1575
  %1577 = vmatprep.mubr.f32.mxu0 0.0
  %1578 = vmatmul.mubr.f32.gmra.mxu0 %v1299
  %v1579 = vpop.f32.mrf.mxu0
  %v1580 = vadd.f32 0.0, %v1579
  %v1581 = vpop.f32.mrf.mxu0
  %v1582 = vadd.f32 0.0, %v1581
  %1583 = vmatprep.mubr.f32.mxu0 0.0
  %1584 = vmatmul.mubr.f32.gmra.mxu0 %v1302
  %v1585 = vpop.f32.mrf.mxu0
  %v1586 = vadd.f32 0.0, %v1585
  %v1587 = vpop.f32.mrf.mxu0
  %v1588 = vadd.f32 0.0, %v1587
  %1589 = vmatprep.mubr.f32.mxu0 0.0
  %1590 = vmatmul.mubr.f32.gmra.mxu0 %v1305
  %v1591 = vpop.f32.mrf.mxu0
  %v1592 = vadd.f32 0.0, %v1591
  %v1593 = vpop.f32.mrf.mxu0
  %v1594 = vadd.f32 0.0, %v1593
  %1595 = vmatprep.mubr.f32.mxu0 0.0
  %1596 = vmatmul.mubr.f32.gmra.mxu0 %v1308
  %v1597 = vpop.f32.mrf.mxu0
  %v1598 = vadd.f32 0.0, %v1597
  %v1599 = vpop.f32.mrf.mxu0
  %v1600 = vadd.f32 0.0, %v1599
  %1601 = vmatprep.mubr.f32.mxu0 0.0
  %1602 = vmatmul.mubr.f32.gmra.mxu0 %v1311
  %v1603 = vpop.f32.mrf.mxu0
  %v1604 = vadd.f32 0.0, %v1603
  %v1605 = vpop.f32.mrf.mxu0
  %v1606 = vadd.f32 0.0, %v1605
  %1607 = vmatprep.mubr.f32.mxu0 0.0
  %1608 = vmatmul.mubr.f32.gmra.mxu0 %v1314
  %v1609 = vpop.f32.mrf.mxu0
  %v1610 = vadd.f32 0.0, %v1609
  %v1611 = vpop.f32.mrf.mxu0
  %v1612 = vadd.f32 0.0, %v1611
  %1613 = vmatprep.mubr.f32.mxu0 0.0
  %1614 = vmatmul.mubr.f32.gmra.mxu0 %v1317
  %v1615 = vpop.f32.mrf.mxu0
  %v1616 = vadd.f32 0.0, %v1615
  %v1617 = vpop.f32.mrf.mxu0
  %v1618 = vadd.f32 0.0, %v1617
  %1619 = vmatprep.mubr.f32.mxu0 0.0
  %1620 = vmatmul.mubr.f32.gmra.mxu0 %v1320
  %v1621 = vpop.f32.mrf.mxu0
  %v1622 = vadd.f32 0.0, %v1621
  %v1623 = vpop.f32.mrf.mxu0
  %v1624 = vadd.f32 0.0, %v1623
  %1625 = vmatprep.mubr.f32.mxu0 0.0
  %1626 = vmatmul.mubr.f32.gmra.mxu0 %v1323
  %v1627 = vpop.f32.mrf.mxu0
  %v1628 = vadd.f32 0.0, %v1627
  %v1629 = vpop.f32.mrf.mxu0
  %v1630 = vadd.f32 0.0, %v1629
  %1631 = vmatprep.mubr.f32.mxu0 0.0
  %1632 = vmatmul.mubr.f32.gmra.mxu0 %v1326
  %v1633 = vpop.f32.mrf.mxu0
  %v1634 = vadd.f32 0.0, %v1633
  %v1635 = vpop.f32.mrf.mxu0
  %v1636 = vadd.f32 0.0, %v1635
  %1637 = vmatprep.mubr.f32.mxu0 0.0
  %1638 = vmatmul.mubr.f32.gmra.mxu0 %v1329
  %v1639 = vpop.f32.mrf.mxu0
  %v1640 = vadd.f32 0.0, %v1639
  %v1641 = vpop.f32.mrf.mxu0
  %v1642 = vadd.f32 0.0, %v1641
  %1643 = vmatprep.mubr.f32.mxu0 0.0
  %1644 = vmatmul.mubr.f32.gmra.mxu0 %v1332
  %v1645 = vpop.f32.mrf.mxu0
  %v1646 = vadd.f32 0.0, %v1645
  %v1647 = vpop.f32.mrf.mxu0
  %v1648 = vadd.f32 0.0, %v1647
  %1649 = vmatprep.mubr.f32.mxu0 0.0
  %1650 = vmatmul.mubr.f32.gmra.mxu0 %v1335
  %v1651 = vpop.f32.mrf.mxu0
  %v1652 = vadd.f32 0.0, %v1651
  %v1653 = vpop.f32.mrf.mxu0
  %v1654 = vadd.f32 0.0, %v1653
  %1655 = vmatprep.mubr.f32.mxu0 0.0
  %1656 = vmatmul.mubr.f32.gmra.mxu0 %v1338
  %v1657 = vpop.f32.mrf.mxu0
  %v1658 = vadd.f32 0.0, %v1657
  %v1659 = vpop.f32.mrf.mxu0
  %v1660 = vadd.f32 0.0, %v1659
  %1661 = vdwg.mxu0
  %v1662 = vadd.f32 %v1203, %v1407
  %v1663 = vadd.f32 %v1204, %v1409
  %v1664 = vadd.f32 %v1205, %v1568
  %v1665 = vadd.f32 %v1206, %v1570
  %v1666 = vadd.f32 %v1207, %v1413
  %v1667 = vadd.f32 %v1208, %v1415
  %v1668 = vadd.f32 %v1209, %v1574
  %v1669 = vadd.f32 %v1210, %v1576
  %v1670 = vadd.f32 %v1211, %v1419
  %v1671 = vadd.f32 %v1212, %v1421
  %v1672 = vadd.f32 %v1213, %v1580
  %v1673 = vadd.f32 %v1214, %v1582
  %v1674 = vadd.f32 %v1215, %v1425
  %v1675 = vadd.f32 %v1216, %v1427
  %v1676 = vadd.f32 %v1217, %v1586
  %v1677 = vadd.f32 %v1218, %v1588
  %v1678 = vadd.f32 %v1219, %v1431
  %v1679 = vadd.f32 %v1220, %v1433
  %v1680 = vadd.f32 %v1221, %v1592
  %v1681 = vadd.f32 %v1222, %v1594
  %v1682 = vadd.f32 %v1223, %v1437
  %v1683 = vadd.f32 %v1224, %v1439
  %v1684 = vadd.f32 %v1225, %v1598
  %v1685 = vadd.f32 %v1226, %v1600
  %v1686 = vadd.f32 %v1227, %v1443
  %v1687 = vadd.f32 %v1228, %v1445
  %v1688 = vadd.f32 %v1229, %v1604
  %v1689 = vadd.f32 %v1230, %v1606
  %v1690 = vadd.f32 %v1231, %v1449
  %v1691 = vadd.f32 %v1232, %v1451
  %v1692 = vadd.f32 %v1233, %v1610
  %v1693 = vadd.f32 %v1234, %v1612
  %v1694 = vadd.f32 %v1235, %v1455
  %v1695 = vadd.f32 %v1236, %v1457
  %v1696 = vadd.f32 %v1237, %v1616
  %v1697 = vadd.f32 %v1238, %v1618
  %v1698 = vadd.f32 %v1239, %v1461
  %v1699 = vadd.f32 %v1240, %v1463
  %v1700 = vadd.f32 %v1241, %v1622
  %v1701 = vadd.f32 %v1242, %v1624
  %v1702 = vadd.f32 %v1243, %v1467
  %v1703 = vadd.f32 %v1244, %v1469
  %v1704 = vadd.f32 %v1245, %v1628
  %v1705 = vadd.f32 %v1246, %v1630
  %v1706 = vadd.f32 %v1247, %v1473
  %v1707 = vadd.f32 %v1248, %v1475
  %v1708 = vadd.f32 %v1249, %v1634
  %v1709 = vadd.f32 %v1250, %v1636
  %v1710 = vadd.f32 %v1251, %v1479
  %v1711 = vadd.f32 %v1252, %v1481
  %v1712 = vadd.f32 %v1253, %v1640
  %v1713 = vadd.f32 %v1254, %v1642
  %v1714 = vadd.f32 %v1255, %v1485
  %v1715 = vadd.f32 %v1256, %v1487
  %v1716 = vadd.f32 %v1257, %v1646
  %v1717 = vadd.f32 %v1258, %v1648
  %v1718 = vadd.f32 %v1259, %v1491
  %v1719 = vadd.f32 %v1260, %v1493
  %v1720 = vadd.f32 %v1261, %v1652
  %v1721 = vadd.f32 %v1262, %v1654
  %v1722 = vadd.f32 %v1263, %v1497
  %v1723 = vadd.f32 %v1264, %v1499
  %v1724 = vadd.f32 %v1265, %v1658
  %v1725 = vadd.f32 %v1266, %v1660
  %v1726 = vmax.f32 %v1662, %v1663
  %v1727 = vmax.f32 %v1666, %v1667
  %v1728 = vmax.f32 %v1670, %v1671
  %v1729 = vmax.f32 %v1674, %v1675
  %v1730 = vmax.f32 %v1678, %v1679
  %v1731 = vmax.f32 %v1682, %v1683
  %v1732 = vmax.f32 %v1686, %v1687
  %v1733 = vmax.f32 %v1690, %v1691
  %v1734 = vmax.f32 %v1694, %v1695
  %v1735 = vmax.f32 %v1698, %v1699
  %v1736 = vmax.f32 %v1702, %v1703
  %v1737 = vmax.f32 %v1706, %v1707
  %v1738 = vmax.f32 %v1710, %v1711
  %v1739 = vmax.f32 %v1714, %v1715
  %v1740 = vmax.f32 %v1718, %v1719
  %v1741 = vmax.f32 %v1722, %v1723
  %v1742 = vmax.f32 %v1664, %v1665
  %v1743 = vmax.f32 %v1668, %v1669
  %v1744 = vmax.f32 %v1672, %v1673
  %v1745 = vmax.f32 %v1676, %v1677
  %v1746 = vmax.f32 %v1680, %v1681
  %v1747 = vmax.f32 %v1684, %v1685
  %v1748 = vmax.f32 %v1688, %v1689
  %v1749 = vmax.f32 %v1692, %v1693
  %v1750 = vmax.f32 %v1696, %v1697
  %v1751 = vmax.f32 %v1700, %v1701
  %v1752 = vmax.f32 %v1704, %v1705
  %v1753 = vmax.f32 %v1708, %v1709
  %v1754 = vmax.f32 %v1712, %v1713
  %v1755 = vmax.f32 %v1716, %v1717
  %v1756 = vmax.f32 %v1720, %v1721
  %v1757 = vmax.f32 %v1724, %v1725
  %v1758 = vmax.f32 %v1726, %v1742
  %v1759 = vmax.f32 %v1727, %v1743
  %v1760 = vmax.f32 %v1728, %v1744
  %v1761 = vmax.f32 %v1729, %v1745
  %v1762 = vmax.f32 %v1730, %v1746
  %v1763 = vmax.f32 %v1731, %v1747
  %v1764 = vmax.f32 %v1732, %v1748
  %v1765 = vmax.f32 %v1733, %v1749
  %v1766 = vmax.f32 %v1734, %v1750
  %v1767 = vmax.f32 %v1735, %v1751
  %v1768 = vmax.f32 %v1736, %v1752
  %v1769 = vmax.f32 %v1737, %v1753
  %v1770 = vmax.f32 %v1738, %v1754
  %v1771 = vmax.f32 %v1739, %v1755
  %v1772 = vmax.f32 %v1740, %v1756
  %v1773 = vmax.f32 %v1741, %v1757
  %v1774 = vld [vmem:[%s3] sm:$0x1]
  %v1775 = vlaneseq
  %v1776 = vshrl.u32 %v1775, 7
  %v1777 = vsub.s32 0, %v1776
  %v1778 = vrot.slane %v1774, %v1777
  %v1779 = vmul.f32 %v1758, %v1778
  %v1780 = vmul.f32 %v1759, %v1778
  %v1781 = vmul.f32 %v1760, %v1778
  %v1782 = vmul.f32 %v1761, %v1778
  %v1783 = vmul.f32 %v1762, %v1778
  %v1784 = vmul.f32 %v1763, %v1778
  %v1785 = vmul.f32 %v1764, %v1778
  %v1786 = vmul.f32 %v1765, %v1778
  %v1787 = vmul.f32 %v1766, %v1778
  %v1788 = vmul.f32 %v1767, %v1778
  %v1789 = vmul.f32 %v1768, %v1778
  %v1790 = vmul.f32 %v1769, %v1778
  %v1791 = vmul.f32 %v1770, %v1778
  %v1792 = vmul.f32 %v1771, %v1778
  %v1793 = vmul.f32 %v1772, %v1778
  %v1794 = vmul.f32 %v1773, %v1778
  %v1795 = vld [vmem:[%s3 + $0x1] sm:$0x1]
  %v1796 = vlaneseq
  %v1797 = vshrl.u32 %v1796, 7
  %v1798 = vsub.s32 0, %v1797
  %v1799 = vrot.slane %v1795, %v1798
  %v1800 = vadd.f32 %v1779, %v1799
  %v1801 = vadd.f32 %v1780, %v1799
  %v1802 = vadd.f32 %v1781, %v1799
  %v1803 = vadd.f32 %v1782, %v1799
  %v1804 = vadd.f32 %v1783, %v1799
  %v1805 = vadd.f32 %v1784, %v1799
  %v1806 = vadd.f32 %v1785, %v1799
  %v1807 = vadd.f32 %v1786, %v1799
  %v1808 = vadd.f32 %v1787, %v1799
  %v1809 = vadd.f32 %v1788, %v1799
  %v1810 = vadd.f32 %v1789, %v1799
  %v1811 = vadd.f32 %v1790, %v1799
  %v1812 = vadd.f32 %v1791, %v1799
  %v1813 = vadd.f32 %v1792, %v1799
  %v1814 = vadd.f32 %v1793, %v1799
  %v1815 = vadd.f32 %v1794, %v1799
  %v1816 = vmax.f32 %v1800, 0.0
  %v1817 = vmax.f32 %v1801, 0.0
  %v1818 = vmax.f32 %v1802, 0.0
  %v1819 = vmax.f32 %v1803, 0.0
  %v1820 = vmax.f32 %v1804, 0.0
  %v1821 = vmax.f32 %v1805, 0.0
  %v1822 = vmax.f32 %v1806, 0.0
  %v1823 = vmax.f32 %v1807, 0.0
  %v1824 = vmax.f32 %v1808, 0.0
  %v1825 = vmax.f32 %v1809, 0.0
  %v1826 = vmax.f32 %v1810, 0.0
  %v1827 = vmax.f32 %v1811, 0.0
  %v1828 = vmax.f32 %v1812, 0.0
  %v1829 = vmax.f32 %v1813, 0.0
  %v1830 = vmax.f32 %v1814, 0.0
  %v1831 = vmax.f32 %v1815, 0.0
  %1832 = vst [vmem:[#allocation2] sm:$0xff] 0.0
  %1833 = vst [vmem:[#allocation2 + $0x8] sm:$0x3] 0.0
  %1834 = vst [vmem:[#allocation2 + $0x10] sm:$0xff] 0.0
  %1835 = vst [vmem:[#allocation2 + $0x18] sm:$0x3] 0.0
  %1836 = vst [vmem:[#allocation2 + $0x20] sm:$0xff] 0.0
  %1837 = vst [vmem:[#allocation2 + $0x28] sm:$0x3] 0.0
  %1838 = vst [vmem:[#allocation2 + $0x30] sm:$0xff] 0.0
  %1839 = vst [vmem:[#allocation2 + $0x38] sm:$0x3] 0.0
  %1840 = vst [vmem:[#allocation2 + $0x40] sm:$0xff] 0.0
  %1841 = vst [vmem:[#allocation2 + $0x48] sm:$0x3] 0.0
  %1842 = vst [vmem:[#allocation2 + $0x50] sm:$0xff] 0.0
  %1843 = vst [vmem:[#allocation2 + $0x58] sm:$0x3] 0.0
  %1844 = vst [vmem:[#allocation2 + $0x60] sm:$0xff] 0.0
  %1845 = vst [vmem:[#allocation2 + $0x68] sm:$0x3] 0.0
  %1846 = vst [vmem:[#allocation2 + $0x70] sm:$0xff] 0.0
  %1847 = vst [vmem:[#allocation2 + $0x78] sm:$0x3] 0.0
  %1848 = vst [vmem:[#allocation2 + $0x80] sm:$0xff] 0.0
  %1849 = vst [vmem:[#allocation2 + $0x88] sm:$0x3] 0.0
  %1850 = vst [vmem:[#allocation2 + $0x90] sm:$0xff] 0.0
  %1851 = vst [vmem:[#allocation2 + $0x98] sm:$0x3] 0.0
  %1852 = vst [vmem:[#allocation2 + $0xa0] sm:$0xff] 0.0
  %1853 = vst [vmem:[#allocation2 + $0xa8] sm:$0x3] 0.0
  %1854 = vst [vmem:[#allocation2 + $0xb0] sm:$0xff] 0.0
  %1855 = vst [vmem:[#allocation2 + $0xb8] sm:$0x3] 0.0
  %1856 = vst [vmem:[#allocation2 + $0xc0] sm:$0xff] 0.0
  %1857 = vst [vmem:[#allocation2 + $0xc8] sm:$0x3] 0.0
  %1858 = vst [vmem:[#allocation2 + $0xd0] sm:$0xff] 0.0
  %1859 = vst [vmem:[#allocation2 + $0xd8] sm:$0x3] 0.0
  %1860 = vst [vmem:[#allocation2 + $0xe0] sm:$0xff] 0.0
  %1861 = vst [vmem:[#allocation2 + $0xe8] sm:$0x3] 0.0
  %1862 = vst [vmem:[#allocation2 + $0xf0] sm:$0xff] 0.0
  %1863 = vst [vmem:[#allocation2 + $0xf8] sm:$0x3] 0.0
  %1864 = vst [vmem:[#allocation2 + $0x100] sm:$0xff] 0.0
  %1865 = vst [vmem:[#allocation2 + $0x108] sm:$0x3] 0.0
  %1866 = vst [vmem:[#allocation2 + $0x110] sm:$0xff] 0.0
  %1867 = vst [vmem:[#allocation2 + $0x118] sm:$0x3] 0.0
  %1868 = vst [vmem:[#allocation2 + $0x120] sm:$0xff] 0.0
  %1869 = vst [vmem:[#allocation2 + $0x128] sm:$0x3] 0.0
  %1870 = vst [vmem:[#allocation2 + $0x130] sm:$0xff] 0.0
  %1871 = vst [vmem:[#allocation2 + $0x138] sm:$0x3] 0.0
  %s1872 = scalar_lea.vmem [#allocation2], 16
  %1873 = vst [vmem:[%s1872 + $0x1] sm:$0xff] %v1816
  %1874 = vst [vmem:[%s1872 + $0x11] sm:$0xff] %v1817
  %1875 = vst [vmem:[%s1872 + $0x21] sm:$0xff] %v1818
  %1876 = vst [vmem:[%s1872 + $0x31] sm:$0xff] %v1819
  %1877 = vst [vmem:[%s1872 + $0x41] sm:$0xff] %v1820
  %1878 = vst [vmem:[%s1872 + $0x51] sm:$0xff] %v1821
  %1879 = vst [vmem:[%s1872 + $0x61] sm:$0xff] %v1822
  %1880 = vst [vmem:[%s1872 + $0x71] sm:$0xff] %v1823
  %1881 = vst [vmem:[%s1872 + $0xa1] sm:$0xff] %v1824
  %1882 = vst [vmem:[%s1872 + $0xb1] sm:$0xff] %v1825
  %1883 = vst [vmem:[%s1872 + $0xc1] sm:$0xff] %v1826
  %1884 = vst [vmem:[%s1872 + $0xd1] sm:$0xff] %v1827
  %1885 = vst [vmem:[%s1872 + $0xe1] sm:$0xff] %v1828
  %1886 = vst [vmem:[%s1872 + $0xf1] sm:$0xff] %v1829
  %1887 = vst [vmem:[%s1872 + $0x101] sm:$0xff] %v1830
  %1888 = vst [vmem:[%s1872 + $0x111] sm:$0xff] %v1831
  %v1889 = vld [vmem:[#allocation2] sm:$0xff]
  %v1890 = vld [vmem:[#allocation2 + $0x10] sm:$0xff]
  %v1891 = vld [vmem:[#allocation2 + $0x20] sm:$0xff]
  %v1892 = vld [vmem:[#allocation2 + $0x30] sm:$0xff]
  %v1893 = vld [vmem:[#allocation2 + $0x40] sm:$0xff]
  %v1894 = vld [vmem:[#allocation2 + $0x50] sm:$0xff]
  %v1895 = vld [vmem:[#allocation2 + $0x60] sm:$0xff]
  %v1896 = vld [vmem:[#allocation2 + $0x70] sm:$0xff]
  %v1897 = vld [vmem:[#allocation2 + $0xa0] sm:$0xff]
  %v1898 = vld [vmem:[#allocation2 + $0xb0] sm:$0xff]
  %v1899 = vld [vmem:[#allocation2 + $0xc0] sm:$0xff]
  %v1900 = vld [vmem:[#allocation2 + $0xd0] sm:$0xff]
  %v1901 = vld [vmem:[#allocation2 + $0xe0] sm:$0xff]
  %v1902 = vld [vmem:[#allocation2 + $0xf0] sm:$0xff]
  %v1903 = vld [vmem:[#allocation2 + $0x100] sm:$0xff]
  %v1904 = vld [vmem:[#allocation2 + $0x110] sm:$0xff]
  %v1905 = vld [vmem:[%s2] sm:$0xff]
  %v1906 = vld [vmem:[%s2 + $0x8] sm:$0xff]
  %v1907 = vld [vmem:[%s2 + $0x10] sm:$0xff]
  %v1908 = vld [vmem:[%s2 + $0x18] sm:$0xff]
  %v1909 = vld [vmem:[%s2 + $0x20] sm:$0xff]
  %v1910 = vld [vmem:[%s2 + $0x28] sm:$0xff]
  %v1911 = vld [vmem:[%s2 + $0x30] sm:$0xff]
  %v1912 = vld [vmem:[%s2 + $0x38] sm:$0xff]
  %v1913 = vld [vmem:[%s2 + $0x40] sm:$0xff]
  %v1914 = vld [vmem:[%s2 + $0x48] sm:$0xff]
  %v1915 = vld [vmem:[%s2 + $0x50] sm:$0xff]
  %v1916 = vld [vmem:[%s2 + $0x58] sm:$0xff]
  %v1917 = vld [vmem:[%s2 + $0x60] sm:$0xff]
  %v1918 = vld [vmem:[%s2 + $0x68] sm:$0xff]
  %v1919 = vld [vmem:[%s2 + $0x70] sm:$0xff]
  %v1920 = vld [vmem:[%s2 + $0x78] sm:$0xff]
  %v1921 = vld [vmem:[#allocation2 + $0x1] sm:$0xff]
  %v1922 = vld [vmem:[#allocation2 + $0x11] sm:$0xff]
  %v1923 = vld [vmem:[#allocation2 + $0x21] sm:$0xff]
  %v1924 = vld [vmem:[#allocation2 + $0x31] sm:$0xff]
  %v1925 = vld [vmem:[#allocation2 + $0x41] sm:$0xff]
  %v1926 = vld [vmem:[#allocation2 + $0x51] sm:$0xff]
  %v1927 = vld [vmem:[#allocation2 + $0x61] sm:$0xff]
  %v1928 = vld [vmem:[#allocation2 + $0x71] sm:$0xff]
  %v1929 = vld [vmem:[#allocation2 + $0xa1] sm:$0xff]
  %v1930 = vld [vmem:[#allocation2 + $0xb1] sm:$0xff]
  %v1931 = vld [vmem:[#allocation2 + $0xc1] sm:$0xff]
  %v1932 = vld [vmem:[#allocation2 + $0xd1] sm:$0xff]
  %v1933 = vld [vmem:[#allocation2 + $0xe1] sm:$0xff]
  %v1934 = vld [vmem:[#allocation2 + $0xf1] sm:$0xff]
  %v1935 = vld [vmem:[#allocation2 + $0x101] sm:$0xff]
  %v1936 = vld [vmem:[#allocation2 + $0x111] sm:$0xff]
  %s1937 = scalar_lea.vmem %s2, 128
  %v1938 = vld [vmem:[%s1937] sm:$0xff]
  %v1939 = vld [vmem:[%s1937 + $0x8] sm:$0xff]
  %v1940 = vld [vmem:[%s1937 + $0x10] sm:$0xff]
  %v1941 = vld [vmem:[%s1937 + $0x18] sm:$0xff]
  %v1942 = vld [vmem:[%s1937 + $0x20] sm:$0xff]
  %v1943 = vld [vmem:[%s1937 + $0x28] sm:$0xff]
  %v1944 = vld [vmem:[%s1937 + $0x30] sm:$0xff]
  %v1945 = vld [vmem:[%s1937 + $0x38] sm:$0xff]
  %v1946 = vld [vmem:[%s1937 + $0x40] sm:$0xff]
  %v1947 = vld [vmem:[%s1937 + $0x48] sm:$0xff]
  %v1948 = vld [vmem:[%s1937 + $0x50] sm:$0xff]
  %v1949 = vld [vmem:[%s1937 + $0x58] sm:$0xff]
  %v1950 = vld [vmem:[%s1937 + $0x60] sm:$0xff]
  %v1951 = vld [vmem:[%s1937 + $0x68] sm:$0xff]
  %v1952 = vld [vmem:[%s1937 + $0x70] sm:$0xff]
  %v1953 = vld [vmem:[%s1937 + $0x78] sm:$0xff]
  %1954 = vmatprep.subr.mxu0 0.0
  %1955 = vmatpush1.msra.mxu0 %v1953
  %1956 = vmatprep.subr.mxu0 0.0
  %1957 = vmatpush1.msra.mxu0 %v1952
  %1958 = vmatprep.subr.mxu0 0.0
  %1959 = vmatpush1.msra.mxu0 %v1951
  %1960 = vmatprep.subr.mxu0 0.0
  %1961 = vmatpush1.msra.mxu0 %v1950
  %1962 = vmatprep.subr.mxu0 0.0
  %1963 = vmatpush1.msra.mxu0 %v1949
  %1964 = vmatprep.subr.mxu0 0.0
  %1965 = vmatpush1.msra.mxu0 %v1948
  %1966 = vmatprep.subr.mxu0 0.0
  %1967 = vmatpush1.msra.mxu0 %v1947
  %1968 = vmatprep.subr.mxu0 0.0
  %1969 = vmatpush1.msra.mxu0 %v1946
  %1970 = vmatprep.subr.mxu0 0.0
  %1971 = vmatpush1.msra.mxu0 %v1945
  %1972 = vmatprep.subr.mxu0 0.0
  %1973 = vmatpush1.msra.mxu0 %v1944
  %1974 = vmatprep.subr.mxu0 0.0
  %1975 = vmatpush1.msra.mxu0 %v1943
  %1976 = vmatprep.subr.mxu0 0.0
  %1977 = vmatpush1.msra.mxu0 %v1942
  %1978 = vmatprep.subr.mxu0 0.0
  %1979 = vmatpush1.msra.mxu0 %v1941
  %1980 = vmatprep.subr.mxu0 0.0
  %1981 = vmatpush1.msra.mxu0 %v1940
  %1982 = vmatprep.subr.mxu0 0.0
  %1983 = vmatpush1.msra.mxu0 %v1939
  %1984 = vmatprep.subr.mxu0 0.0
  %1985 = vmatpush1.msra.mxu0 %v1938
  %1986 = vmatprep.subr.mxu0 0.0
  %1987 = vmatpush2.msra.mxu0 0.0
  %1988 = vmatprep.subr.mxu0 0.0
  %1989 = vmatpush2.msra.mxu0 0.0
  %1990 = vmatprep.subr.mxu0 0.0
  %1991 = vmatpush2.msra.mxu0 0.0
  %1992 = vmatprep.subr.mxu0 0.0
  %1993 = vmatpush2.msra.mxu0 0.0
  %1994 = vmatprep.subr.mxu0 0.0
  %1995 = vmatpush2.msra.mxu0 0.0
  %1996 = vmatprep.subr.mxu0 0.0
  %1997 = vmatpush2.msra.mxu0 0.0
  %1998 = vmatprep.subr.mxu0 0.0
  %1999 = vmatpush2.msra.mxu0 0.0
  %2000 = vmatprep.subr.mxu0 0.0
  %2001 = vmatpush2.msra.mxu0 0.0
  %2002 = vmatprep.subr.mxu0 0.0
  %2003 = vmatpush2.msra.mxu0 0.0
  %2004 = vmatprep.subr.mxu0 0.0
  %2005 = vmatpush2.msra.mxu0 0.0
  %2006 = vmatprep.subr.mxu0 0.0
  %2007 = vmatpush2.msra.mxu0 0.0
  %2008 = vmatprep.subr.mxu0 0.0
  %2009 = vmatpush2.msra.mxu0 0.0
  %2010 = vmatprep.subr.mxu0 0.0
  %2011 = vmatpush2.msra.mxu0 0.0
  %2012 = vmatprep.subr.mxu0 0.0
  %2013 = vmatpush2.msra.mxu0 0.0
  %2014 = vmatprep.subr.mxu0 0.0
  %2015 = vmatpush2.msra.mxu0 0.0
  %2016 = vmatprep.subr.mxu0 0.0
  %2017 = vmatpush2.msra.mxu0 0.0
  %2018 = vmatprep.mubr.f32.mxu0 0.0
  %2019 = vmatmul.mubr.f32.gmra.mxu0 %v1921
  %v2020 = vpop.f32.mrf.mxu0
  %v2021 = vadd.f32 0.0, %v2020
  %v2022 = vpop.f32.mrf.mxu0
  %2023 = vmatprep.mubr.f32.mxu0 0.0
  %2024 = vmatmul.mubr.f32.gmra.mxu0 %v1922
  %v2025 = vpop.f32.mrf.mxu0
  %v2026 = vadd.f32 0.0, %v2025
  %v2027 = vpop.f32.mrf.mxu0
  %2028 = vmatprep.mubr.f32.mxu0 0.0
  %2029 = vmatmul.mubr.f32.gmra.mxu0 %v1923
  %v2030 = vpop.f32.mrf.mxu0
  %v2031 = vadd.f32 0.0, %v2030
  %v2032 = vpop.f32.mrf.mxu0
  %2033 = vmatprep.mubr.f32.mxu0 0.0
  %2034 = vmatmul.mubr.f32.gmra.mxu0 %v1924
  %v2035 = vpop.f32.mrf.mxu0
  %v2036 = vadd.f32 0.0, %v2035
  %v2037 = vpop.f32.mrf.mxu0
  %2038 = vmatprep.mubr.f32.mxu0 0.0
  %2039 = vmatmul.mubr.f32.gmra.mxu0 %v1925
  %v2040 = vpop.f32.mrf.mxu0
  %v2041 = vadd.f32 0.0, %v2040
  %v2042 = vpop.f32.mrf.mxu0
  %2043 = vmatprep.mubr.f32.mxu0 0.0
  %2044 = vmatmul.mubr.f32.gmra.mxu0 %v1926
  %v2045 = vpop.f32.mrf.mxu0
  %v2046 = vadd.f32 0.0, %v2045
  %v2047 = vpop.f32.mrf.mxu0
  %2048 = vmatprep.mubr.f32.mxu0 0.0
  %2049 = vmatmul.mubr.f32.gmra.mxu0 %v1927
  %v2050 = vpop.f32.mrf.mxu0
  %v2051 = vadd.f32 0.0, %v2050
  %v2052 = vpop.f32.mrf.mxu0
  %2053 = vmatprep.mubr.f32.mxu0 0.0
  %2054 = vmatmul.mubr.f32.gmra.mxu0 %v1928
  %v2055 = vpop.f32.mrf.mxu0
  %v2056 = vadd.f32 0.0, %v2055
  %v2057 = vpop.f32.mrf.mxu0
  %2058 = vmatprep.mubr.f32.mxu0 0.0
  %2059 = vmatmul.mubr.f32.gmra.mxu0 %v1929
  %v2060 = vpop.f32.mrf.mxu0
  %v2061 = vadd.f32 0.0, %v2060
  %v2062 = vpop.f32.mrf.mxu0
  %2063 = vmatprep.mubr.f32.mxu0 0.0
  %2064 = vmatmul.mubr.f32.gmra.mxu0 %v1930
  %v2065 = vpop.f32.mrf.mxu0
  %v2066 = vadd.f32 0.0, %v2065
  %v2067 = vpop.f32.mrf.mxu0
  %2068 = vmatprep.mubr.f32.mxu0 0.0
  %2069 = vmatmul.mubr.f32.gmra.mxu0 %v1931
  %v2070 = vpop.f32.mrf.mxu0
  %v2071 = vadd.f32 0.0, %v2070
  %v2072 = vpop.f32.mrf.mxu0
  %2073 = vmatprep.mubr.f32.mxu0 0.0
  %2074 = vmatmul.mubr.f32.gmra.mxu0 %v1932
  %v2075 = vpop.f32.mrf.mxu0
  %v2076 = vadd.f32 0.0, %v2075
  %v2077 = vpop.f32.mrf.mxu0
  %2078 = vmatprep.mubr.f32.mxu0 0.0
  %2079 = vmatmul.mubr.f32.gmra.mxu0 %v1933
  %v2080 = vpop.f32.mrf.mxu0
  %v2081 = vadd.f32 0.0, %v2080
  %v2082 = vpop.f32.mrf.mxu0
  %2083 = vmatprep.mubr.f32.mxu0 0.0
  %2084 = vmatmul.mubr.f32.gmra.mxu0 %v1934
  %v2085 = vpop.f32.mrf.mxu0
  %v2086 = vadd.f32 0.0, %v2085
  %v2087 = vpop.f32.mrf.mxu0
  %2088 = vmatprep.mubr.f32.mxu0 0.0
  %2089 = vmatmul.mubr.f32.gmra.mxu0 %v1935
  %v2090 = vpop.f32.mrf.mxu0
  %v2091 = vadd.f32 0.0, %v2090
  %v2092 = vpop.f32.mrf.mxu0
  %2093 = vmatprep.mubr.f32.mxu0 0.0
  %2094 = vmatmul.mubr.f32.gmra.mxu0 %v1936
  %v2095 = vpop.f32.mrf.mxu0
  %v2096 = vadd.f32 0.0, %v2095
  %v2097 = vpop.f32.mrf.mxu0
  %2098 = vdwg.mxu0
  %2099 = vmatprep.subr.mxu0 0.0
  %2100 = vmatpush1.msra.mxu0 %v1920
  %2101 = vmatprep.subr.mxu0 0.0
  %2102 = vmatpush1.msra.mxu0 %v1919
  %2103 = vmatprep.subr.mxu0 0.0
  %2104 = vmatpush1.msra.mxu0 %v1918
  %2105 = vmatprep.subr.mxu0 0.0
  %2106 = vmatpush1.msra.mxu0 %v1917
  %2107 = vmatprep.subr.mxu0 0.0
  %2108 = vmatpush1.msra.mxu0 %v1916
  %2109 = vmatprep.subr.mxu0 0.0
  %2110 = vmatpush1.msra.mxu0 %v1915
  %2111 = vmatprep.subr.mxu0 0.0
  %2112 = vmatpush1.msra.mxu0 %v1914
  %2113 = vmatprep.subr.mxu0 0.0
  %2114 = vmatpush1.msra.mxu0 %v1913
  %2115 = vmatprep.subr.mxu0 0.0
  %2116 = vmatpush1.msra.mxu0 %v1912
  %2117 = vmatprep.subr.mxu0 0.0
  %2118 = vmatpush1.msra.mxu0 %v1911
  %2119 = vmatprep.subr.mxu0 0.0
  %2120 = vmatpush1.msra.mxu0 %v1910
  %2121 = vmatprep.subr.mxu0 0.0
  %2122 = vmatpush1.msra.mxu0 %v1909
  %2123 = vmatprep.subr.mxu0 0.0
  %2124 = vmatpush1.msra.mxu0 %v1908
  %2125 = vmatprep.subr.mxu0 0.0
  %2126 = vmatpush1.msra.mxu0 %v1907
  %2127 = vmatprep.subr.mxu0 0.0
  %2128 = vmatpush1.msra.mxu0 %v1906
  %2129 = vmatprep.subr.mxu0 0.0
  %2130 = vmatpush1.msra.mxu0 %v1905
  %2131 = vmatprep.subr.mxu0 0.0
  %2132 = vmatpush2.msra.mxu0 0.0
  %2133 = vmatprep.subr.mxu0 0.0
  %2134 = vmatpush2.msra.mxu0 0.0
  %2135 = vmatprep.subr.mxu0 0.0
  %2136 = vmatpush2.msra.mxu0 0.0
  %2137 = vmatprep.subr.mxu0 0.0
  %2138 = vmatpush2.msra.mxu0 0.0
  %2139 = vmatprep.subr.mxu0 0.0
  %2140 = vmatpush2.msra.mxu0 0.0
  %2141 = vmatprep.subr.mxu0 0.0
  %2142 = vmatpush2.msra.mxu0 0.0
  %2143 = vmatprep.subr.mxu0 0.0
  %2144 = vmatpush2.msra.mxu0 0.0
  %2145 = vmatprep.subr.mxu0 0.0
  %2146 = vmatpush2.msra.mxu0 0.0
  %2147 = vmatprep.subr.mxu0 0.0
  %2148 = vmatpush2.msra.mxu0 0.0
  %2149 = vmatprep.subr.mxu0 0.0
  %2150 = vmatpush2.msra.mxu0 0.0
  %2151 = vmatprep.subr.mxu0 0.0
  %2152 = vmatpush2.msra.mxu0 0.0
  %2153 = vmatprep.subr.mxu0 0.0
  %2154 = vmatpush2.msra.mxu0 0.0
  %2155 = vmatprep.subr.mxu0 0.0
  %2156 = vmatpush2.msra.mxu0 0.0
  %2157 = vmatprep.subr.mxu0 0.0
  %2158 = vmatpush2.msra.mxu0 0.0
  %2159 = vmatprep.subr.mxu0 0.0
  %2160 = vmatpush2.msra.mxu0 0.0
  %2161 = vmatprep.subr.mxu0 0.0
  %2162 = vmatpush2.msra.mxu0 0.0
  %2163 = vmatprep.mubr.f32.mxu0 0.0
  %2164 = vmatmul.mubr.f32.gmra.mxu0 %v1889
  %v2165 = vpop.f32.mrf.mxu0
  %v2166 = vadd.f32 %v2021, %v2165
  %v2167 = vpop.f32.mrf.mxu0
  %2168 = vmatprep.mubr.f32.mxu0 0.0
  %2169 = vmatmul.mubr.f32.gmra.mxu0 %v1890
  %v2170 = vpop.f32.mrf.mxu0
  %v2171 = vadd.f32 %v2026, %v2170
  %v2172 = vpop.f32.mrf.mxu0
  %2173 = vmatprep.mubr.f32.mxu0 0.0
  %2174 = vmatmul.mubr.f32.gmra.mxu0 %v1891
  %v2175 = vpop.f32.mrf.mxu0
  %v2176 = vadd.f32 %v2031, %v2175
  %v2177 = vpop.f32.mrf.mxu0
  %2178 = vmatprep.mubr.f32.mxu0 0.0
  %2179 = vmatmul.mubr.f32.gmra.mxu0 %v1892
  %v2180 = vpop.f32.mrf.mxu0
  %v2181 = vadd.f32 %v2036, %v2180
  %v2182 = vpop.f32.mrf.mxu0
  %2183 = vmatprep.mubr.f32.mxu0 0.0
  %2184 = vmatmul.mubr.f32.gmra.mxu0 %v1893
  %v2185 = vpop.f32.mrf.mxu0
  %v2186 = vadd.f32 %v2041, %v2185
  %v2187 = vpop.f32.mrf.mxu0
  %2188 = vmatprep.mubr.f32.mxu0 0.0
  %2189 = vmatmul.mubr.f32.gmra.mxu0 %v1894
  %v2190 = vpop.f32.mrf.mxu0
  %v2191 = vadd.f32 %v2046, %v2190
  %v2192 = vpop.f32.mrf.mxu0
  %2193 = vmatprep.mubr.f32.mxu0 0.0
  %2194 = vmatmul.mubr.f32.gmra.mxu0 %v1895
  %v2195 = vpop.f32.mrf.mxu0
  %v2196 = vadd.f32 %v2051, %v2195
  %v2197 = vpop.f32.mrf.mxu0
  %2198 = vmatprep.mubr.f32.mxu0 0.0
  %2199 = vmatmul.mubr.f32.gmra.mxu0 %v1896
  %v2200 = vpop.f32.mrf.mxu0
  %v2201 = vadd.f32 %v2056, %v2200
  %v2202 = vpop.f32.mrf.mxu0
  %2203 = vmatprep.mubr.f32.mxu0 0.0
  %2204 = vmatmul.mubr.f32.gmra.mxu0 %v1897
  %v2205 = vpop.f32.mrf.mxu0
  %v2206 = vadd.f32 %v2061, %v2205
  %v2207 = vpop.f32.mrf.mxu0
  %2208 = vmatprep.mubr.f32.mxu0 0.0
  %2209 = vmatmul.mubr.f32.gmra.mxu0 %v1898
  %v2210 = vpop.f32.mrf.mxu0
  %v2211 = vadd.f32 %v2066, %v2210
  %v2212 = vpop.f32.mrf.mxu0
  %2213 = vmatprep.mubr.f32.mxu0 0.0
  %2214 = vmatmul.mubr.f32.gmra.mxu0 %v1899
  %v2215 = vpop.f32.mrf.mxu0
  %v2216 = vadd.f32 %v2071, %v2215
  %v2217 = vpop.f32.mrf.mxu0
  %2218 = vmatprep.mubr.f32.mxu0 0.0
  %2219 = vmatmul.mubr.f32.gmra.mxu0 %v1900
  %v2220 = vpop.f32.mrf.mxu0
  %v2221 = vadd.f32 %v2076, %v2220
  %v2222 = vpop.f32.mrf.mxu0
  %2223 = vmatprep.mubr.f32.mxu0 0.0
  %2224 = vmatmul.mubr.f32.gmra.mxu0 %v1901
  %v2225 = vpop.f32.mrf.mxu0
  %v2226 = vadd.f32 %v2081, %v2225
  %v2227 = vpop.f32.mrf.mxu0
  %2228 = vmatprep.mubr.f32.mxu0 0.0
  %2229 = vmatmul.mubr.f32.gmra.mxu0 %v1902
  %v2230 = vpop.f32.mrf.mxu0
  %v2231 = vadd.f32 %v2086, %v2230
  %v2232 = vpop.f32.mrf.mxu0
  %2233 = vmatprep.mubr.f32.mxu0 0.0
  %2234 = vmatmul.mubr.f32.gmra.mxu0 %v1903
  %v2235 = vpop.f32.mrf.mxu0
  %v2236 = vadd.f32 %v2091, %v2235
  %v2237 = vpop.f32.mrf.mxu0
  %2238 = vmatprep.mubr.f32.mxu0 0.0
  %2239 = vmatmul.mubr.f32.gmra.mxu0 %v1904
  %v2240 = vpop.f32.mrf.mxu0
  %v2241 = vadd.f32 %v2096, %v2240
  %v2242 = vpop.f32.mrf.mxu0
  %2243 = vdwg.mxu0
  %v2244 = vld [vmem:[#allocation2 + $0x2] sm:$0xff]
  %v2245 = vld [vmem:[#allocation2 + $0x12] sm:$0xff]
  %v2246 = vld [vmem:[#allocation2 + $0x22] sm:$0xff]
  %v2247 = vld [vmem:[#allocation2 + $0x32] sm:$0xff]
  %v2248 = vld [vmem:[#allocation2 + $0x42] sm:$0xff]
  %v2249 = vld [vmem:[#allocation2 + $0x52] sm:$0xff]
  %v2250 = vld [vmem:[#allocation2 + $0x62] sm:$0xff]
  %v2251 = vld [vmem:[#allocation2 + $0x72] sm:$0xff]
  %v2252 = vld [vmem:[#allocation2 + $0xa2] sm:$0xff]
  %v2253 = vld [vmem:[#allocation2 + $0xb2] sm:$0xff]
  %v2254 = vld [vmem:[#allocation2 + $0xc2] sm:$0xff]
  %v2255 = vld [vmem:[#allocation2 + $0xd2] sm:$0xff]
  %v2256 = vld [vmem:[#allocation2 + $0xe2] sm:$0xff]
  %v2257 = vld [vmem:[#allocation2 + $0xf2] sm:$0xff]
  %v2258 = vld [vmem:[#allocation2 + $0x102] sm:$0xff]
  %v2259 = vld [vmem:[#allocation2 + $0x112] sm:$0xff]
  %s2260 = scalar_lea.vmem %s2, 256
  %v2261 = vld [vmem:[%s2260] sm:$0xff]
  %v2262 = vld [vmem:[%s2260 + $0x8] sm:$0xff]
  %v2263 = vld [vmem:[%s2260 + $0x10] sm:$0xff]
  %v2264 = vld [vmem:[%s2260 + $0x18] sm:$0xff]
  %v2265 = vld [vmem:[%s2260 + $0x20] sm:$0xff]
  %v2266 = vld [vmem:[%s2260 + $0x28] sm:$0xff]
  %v2267 = vld [vmem:[%s2260 + $0x30] sm:$0xff]
  %v2268 = vld [vmem:[%s2260 + $0x38] sm:$0xff]
  %v2269 = vld [vmem:[%s2260 + $0x40] sm:$0xff]
  %v2270 = vld [vmem:[%s2260 + $0x48] sm:$0xff]
  %v2271 = vld [vmem:[%s2260 + $0x50] sm:$0xff]
  %v2272 = vld [vmem:[%s2260 + $0x58] sm:$0xff]
  %v2273 = vld [vmem:[%s2260 + $0x60] sm:$0xff]
  %v2274 = vld [vmem:[%s2260 + $0x68] sm:$0xff]
  %v2275 = vld [vmem:[%s2260 + $0x70] sm:$0xff]
  %v2276 = vld [vmem:[%s2260 + $0x78] sm:$0xff]
  %2277 = vmatprep.subr.mxu0 0.0
  %2278 = vmatpush1.msra.mxu0 %v2276
  %2279 = vmatprep.subr.mxu0 0.0
  %2280 = vmatpush1.msra.mxu0 %v2275
  %2281 = vmatprep.subr.mxu0 0.0
  %2282 = vmatpush1.msra.mxu0 %v2274
  %2283 = vmatprep.subr.mxu0 0.0
  %2284 = vmatpush1.msra.mxu0 %v2273
  %2285 = vmatprep.subr.mxu0 0.0
  %2286 = vmatpush1.msra.mxu0 %v2272
  %2287 = vmatprep.subr.mxu0 0.0
  %2288 = vmatpush1.msra.mxu0 %v2271
  %2289 = vmatprep.subr.mxu0 0.0
  %2290 = vmatpush1.msra.mxu0 %v2270
  %2291 = vmatprep.subr.mxu0 0.0
  %2292 = vmatpush1.msra.mxu0 %v2269
  %2293 = vmatprep.subr.mxu0 0.0
  %2294 = vmatpush1.msra.mxu0 %v2268
  %2295 = vmatprep.subr.mxu0 0.0
  %2296 = vmatpush1.msra.mxu0 %v2267
  %2297 = vmatprep.subr.mxu0 0.0
  %2298 = vmatpush1.msra.mxu0 %v2266
  %2299 = vmatprep.subr.mxu0 0.0
  %2300 = vmatpush1.msra.mxu0 %v2265
  %2301 = vmatprep.subr.mxu0 0.0
  %2302 = vmatpush1.msra.mxu0 %v2264
  %2303 = vmatprep.subr.mxu0 0.0
  %2304 = vmatpush1.msra.mxu0 %v2263
  %2305 = vmatprep.subr.mxu0 0.0
  %2306 = vmatpush1.msra.mxu0 %v2262
  %2307 = vmatprep.subr.mxu0 0.0
  %2308 = vmatpush1.msra.mxu0 %v2261
  %2309 = vmatprep.subr.mxu0 0.0
  %2310 = vmatpush2.msra.mxu0 0.0
  %2311 = vmatprep.subr.mxu0 0.0
  %2312 = vmatpush2.msra.mxu0 0.0
  %2313 = vmatprep.subr.mxu0 0.0
  %2314 = vmatpush2.msra.mxu0 0.0
  %2315 = vmatprep.subr.mxu0 0.0
  %2316 = vmatpush2.msra.mxu0 0.0
  %2317 = vmatprep.subr.mxu0 0.0
  %2318 = vmatpush2.msra.mxu0 0.0
  %2319 = vmatprep.subr.mxu0 0.0
  %2320 = vmatpush2.msra.mxu0 0.0
  %2321 = vmatprep.subr.mxu0 0.0
  %2322 = vmatpush2.msra.mxu0 0.0
  %2323 = vmatprep.subr.mxu0 0.0
  %2324 = vmatpush2.msra.mxu0 0.0
  %2325 = vmatprep.subr.mxu0 0.0
  %2326 = vmatpush2.msra.mxu0 0.0
  %2327 = vmatprep.subr.mxu0 0.0
  %2328 = vmatpush2.msra.mxu0 0.0
  %2329 = vmatprep.subr.mxu0 0.0
  %2330 = vmatpush2.msra.mxu0 0.0
  %2331 = vmatprep.subr.mxu0 0.0
  %2332 = vmatpush2.msra.mxu0 0.0
  %2333 = vmatprep.subr.mxu0 0.0
  %2334 = vmatpush2.msra.mxu0 0.0
  %2335 = vmatprep.subr.mxu0 0.0
  %2336 = vmatpush2.msra.mxu0 0.0
  %2337 = vmatprep.subr.mxu0 0.0
  %2338 = vmatpush2.msra.mxu0 0.0
  %2339 = vmatprep.subr.mxu0 0.0
  %2340 = vmatpush2.msra.mxu0 0.0
  %2341 = vmatprep.mubr.f32.mxu0 0.0
  %2342 = vmatmul.mubr.f32.gmra.mxu0 %v2244
  %v2343 = vpop.f32.mrf.mxu0
  %v2344 = vadd.f32 0.0, %v2343
  %v2345 = vpop.f32.mrf.mxu0
  %2346 = vmatprep.mubr.f32.mxu0 0.0
  %2347 = vmatmul.mubr.f32.gmra.mxu0 %v2245
  %v2348 = vpop.f32.mrf.mxu0
  %v2349 = vadd.f32 0.0, %v2348
  %v2350 = vpop.f32.mrf.mxu0
  %2351 = vmatprep.mubr.f32.mxu0 0.0
  %2352 = vmatmul.mubr.f32.gmra.mxu0 %v2246
  %v2353 = vpop.f32.mrf.mxu0
  %v2354 = vadd.f32 0.0, %v2353
  %v2355 = vpop.f32.mrf.mxu0
  %2356 = vmatprep.mubr.f32.mxu0 0.0
  %2357 = vmatmul.mubr.f32.gmra.mxu0 %v2247
  %v2358 = vpop.f32.mrf.mxu0
  %v2359 = vadd.f32 0.0, %v2358
  %v2360 = vpop.f32.mrf.mxu0
  %2361 = vmatprep.mubr.f32.mxu0 0.0
  %2362 = vmatmul.mubr.f32.gmra.mxu0 %v2248
  %v2363 = vpop.f32.mrf.mxu0
  %v2364 = vadd.f32 0.0, %v2363
  %v2365 = vpop.f32.mrf.mxu0
  %2366 = vmatprep.mubr.f32.mxu0 0.0
  %2367 = vmatmul.mubr.f32.gmra.mxu0 %v2249
  %v2368 = vpop.f32.mrf.mxu0
  %v2369 = vadd.f32 0.0, %v2368
  %v2370 = vpop.f32.mrf.mxu0
  %2371 = vmatprep.mubr.f32.mxu0 0.0
  %2372 = vmatmul.mubr.f32.gmra.mxu0 %v2250
  %v2373 = vpop.f32.mrf.mxu0
  %v2374 = vadd.f32 0.0, %v2373
  %v2375 = vpop.f32.mrf.mxu0
  %2376 = vmatprep.mubr.f32.mxu0 0.0
  %2377 = vmatmul.mubr.f32.gmra.mxu0 %v2251
  %v2378 = vpop.f32.mrf.mxu0
  %v2379 = vadd.f32 0.0, %v2378
  %v2380 = vpop.f32.mrf.mxu0
  %2381 = vmatprep.mubr.f32.mxu0 0.0
  %2382 = vmatmul.mubr.f32.gmra.mxu0 %v2252
  %v2383 = vpop.f32.mrf.mxu0
  %v2384 = vadd.f32 0.0, %v2383
  %v2385 = vpop.f32.mrf.mxu0
  %2386 = vmatprep.mubr.f32.mxu0 0.0
  %2387 = vmatmul.mubr.f32.gmra.mxu0 %v2253
  %v2388 = vpop.f32.mrf.mxu0
  %v2389 = vadd.f32 0.0, %v2388
  %v2390 = vpop.f32.mrf.mxu0
  %2391 = vmatprep.mubr.f32.mxu0 0.0
  %2392 = vmatmul.mubr.f32.gmra.mxu0 %v2254
  %v2393 = vpop.f32.mrf.mxu0
  %v2394 = vadd.f32 0.0, %v2393
  %v2395 = vpop.f32.mrf.mxu0
  %2396 = vmatprep.mubr.f32.mxu0 0.0
  %2397 = vmatmul.mubr.f32.gmra.mxu0 %v2255
  %v2398 = vpop.f32.mrf.mxu0
  %v2399 = vadd.f32 0.0, %v2398
  %v2400 = vpop.f32.mrf.mxu0
  %2401 = vmatprep.mubr.f32.mxu0 0.0
  %2402 = vmatmul.mubr.f32.gmra.mxu0 %v2256
  %v2403 = vpop.f32.mrf.mxu0
  %v2404 = vadd.f32 0.0, %v2403
  %v2405 = vpop.f32.mrf.mxu0
  %2406 = vmatprep.mubr.f32.mxu0 0.0
  %2407 = vmatmul.mubr.f32.gmra.mxu0 %v2257
  %v2408 = vpop.f32.mrf.mxu0
  %v2409 = vadd.f32 0.0, %v2408
  %v2410 = vpop.f32.mrf.mxu0
  %2411 = vmatprep.mubr.f32.mxu0 0.0
  %2412 = vmatmul.mubr.f32.gmra.mxu0 %v2258
  %v2413 = vpop.f32.mrf.mxu0
  %v2414 = vadd.f32 0.0, %v2413
  %v2415 = vpop.f32.mrf.mxu0
  %2416 = vmatprep.mubr.f32.mxu0 0.0
  %2417 = vmatmul.mubr.f32.gmra.mxu0 %v2259
  %v2418 = vpop.f32.mrf.mxu0
  %v2419 = vadd.f32 0.0, %v2418
  %v2420 = vpop.f32.mrf.mxu0
  %2421 = vdwg.mxu0
  %v2422 = vadd.f32 %v2166, %v2344
  %v2423 = vadd.f32 %v2171, %v2349
  %v2424 = vadd.f32 %v2176, %v2354
  %v2425 = vadd.f32 %v2181, %v2359
  %v2426 = vadd.f32 %v2186, %v2364
  %v2427 = vadd.f32 %v2191, %v2369
  %v2428 = vadd.f32 %v2196, %v2374
  %v2429 = vadd.f32 %v2201, %v2379
  %v2430 = vadd.f32 %v2206, %v2384
  %v2431 = vadd.f32 %v2211, %v2389
  %v2432 = vadd.f32 %v2216, %v2394
  %v2433 = vadd.f32 %v2221, %v2399
  %v2434 = vadd.f32 %v2226, %v2404
  %v2435 = vadd.f32 %v2231, %v2409
  %v2436 = vadd.f32 %v2236, %v2414
  %v2437 = vadd.f32 %v2241, %v2419
  %v2438 = vld [vmem:[%s1872] sm:$0xff]
  %v2439 = vld [vmem:[%s1872 + $0x10] sm:$0xff]
  %v2440 = vld [vmem:[%s1872 + $0x20] sm:$0xff]
  %v2441 = vld [vmem:[%s1872 + $0x30] sm:$0xff]
  %v2442 = vld [vmem:[%s1872 + $0x40] sm:$0xff]
  %v2443 = vld [vmem:[%s1872 + $0x50] sm:$0xff]
  %v2444 = vld [vmem:[%s1872 + $0x60] sm:$0xff]
  %v2445 = vld [vmem:[%s1872 + $0x70] sm:$0xff]
  %v2446 = vld [vmem:[%s1872 + $0xa0] sm:$0xff]
  %v2447 = vld [vmem:[%s1872 + $0xb0] sm:$0xff]
  %v2448 = vld [vmem:[%s1872 + $0xc0] sm:$0xff]
  %v2449 = vld [vmem:[%s1872 + $0xd0] sm:$0xff]
  %v2450 = vld [vmem:[%s1872 + $0xe0] sm:$0xff]
  %v2451 = vld [vmem:[%s1872 + $0xf0] sm:$0xff]
  %v2452 = vld [vmem:[%s1872 + $0x100] sm:$0xff]
  %v2453 = vld [vmem:[%s1872 + $0x110] sm:$0xff]
  %s2454 = scalar_lea.vmem %s2, 384
  %v2455 = vld [vmem:[%s2454] sm:$0xff]
  %v2456 = vld [vmem:[%s2454 + $0x8] sm:$0xff]
  %v2457 = vld [vmem:[%s2454 + $0x10] sm:$0xff]
  %v2458 = vld [vmem:[%s2454 + $0x18] sm:$0xff]
  %v2459 = vld [vmem:[%s2454 + $0x20] sm:$0xff]
  %v2460 = vld [vmem:[%s2454 + $0x28] sm:$0xff]
  %v2461 = vld [vmem:[%s2454 + $0x30] sm:$0xff]
  %v2462 = vld [vmem:[%s2454 + $0x38] sm:$0xff]
  %v2463 = vld [vmem:[%s2454 + $0x40] sm:$0xff]
  %v2464 = vld [vmem:[%s2454 + $0x48] sm:$0xff]
  %v2465 = vld [vmem:[%s2454 + $0x50] sm:$0xff]
  %v2466 = vld [vmem:[%s2454 + $0x58] sm:$0xff]
  %v2467 = vld [vmem:[%s2454 + $0x60] sm:$0xff]
  %v2468 = vld [vmem:[%s2454 + $0x68] sm:$0xff]
  %v2469 = vld [vmem:[%s2454 + $0x70] sm:$0xff]
  %v2470 = vld [vmem:[%s2454 + $0x78] sm:$0xff]
  %2471 = vmatprep.subr.mxu0 0.0
  %2472 = vmatpush1.msra.mxu0 %v2470
  %2473 = vmatprep.subr.mxu0 0.0
  %2474 = vmatpush1.msra.mxu0 %v2469
  %2475 = vmatprep.subr.mxu0 0.0
  %2476 = vmatpush1.msra.mxu0 %v2468
  %2477 = vmatprep.subr.mxu0 0.0
  %2478 = vmatpush1.msra.mxu0 %v2467
  %2479 = vmatprep.subr.mxu0 0.0
  %2480 = vmatpush1.msra.mxu0 %v2466
  %2481 = vmatprep.subr.mxu0 0.0
  %2482 = vmatpush1.msra.mxu0 %v2465
  %2483 = vmatprep.subr.mxu0 0.0
  %2484 = vmatpush1.msra.mxu0 %v2464
  %2485 = vmatprep.subr.mxu0 0.0
  %2486 = vmatpush1.msra.mxu0 %v2463
  %2487 = vmatprep.subr.mxu0 0.0
  %2488 = vmatpush1.msra.mxu0 %v2462
  %2489 = vmatprep.subr.mxu0 0.0
  %2490 = vmatpush1.msra.mxu0 %v2461
  %2491 = vmatprep.subr.mxu0 0.0
  %2492 = vmatpush1.msra.mxu0 %v2460
  %2493 = vmatprep.subr.mxu0 0.0
  %2494 = vmatpush1.msra.mxu0 %v2459
  %2495 = vmatprep.subr.mxu0 0.0
  %2496 = vmatpush1.msra.mxu0 %v2458
  %2497 = vmatprep.subr.mxu0 0.0
  %2498 = vmatpush1.msra.mxu0 %v2457
  %2499 = vmatprep.subr.mxu0 0.0
  %2500 = vmatpush1.msra.mxu0 %v2456
  %2501 = vmatprep.subr.mxu0 0.0
  %2502 = vmatpush1.msra.mxu0 %v2455
  %2503 = vmatprep.subr.mxu0 0.0
  %2504 = vmatpush2.msra.mxu0 0.0
  %2505 = vmatprep.subr.mxu0 0.0
  %2506 = vmatpush2.msra.mxu0 0.0
  %2507 = vmatprep.subr.mxu0 0.0
  %2508 = vmatpush2.msra.mxu0 0.0
  %2509 = vmatprep.subr.mxu0 0.0
  %2510 = vmatpush2.msra.mxu0 0.0
  %2511 = vmatprep.subr.mxu0 0.0
  %2512 = vmatpush2.msra.mxu0 0.0
  %2513 = vmatprep.subr.mxu0 0.0
  %2514 = vmatpush2.msra.mxu0 0.0
  %2515 = vmatprep.subr.mxu0 0.0
  %2516 = vmatpush2.msra.mxu0 0.0
  %2517 = vmatprep.subr.mxu0 0.0
  %2518 = vmatpush2.msra.mxu0 0.0
  %2519 = vmatprep.subr.mxu0 0.0
  %2520 = vmatpush2.msra.mxu0 0.0
  %2521 = vmatprep.subr.mxu0 0.0
  %2522 = vmatpush2.msra.mxu0 0.0
  %2523 = vmatprep.subr.mxu0 0.0
  %2524 = vmatpush2.msra.mxu0 0.0
  %2525 = vmatprep.subr.mxu0 0.0
  %2526 = vmatpush2.msra.mxu0 0.0
  %2527 = vmatprep.subr.mxu0 0.0
  %2528 = vmatpush2.msra.mxu0 0.0
  %2529 = vmatprep.subr.mxu0 0.0
  %2530 = vmatpush2.msra.mxu0 0.0
  %2531 = vmatprep.subr.mxu0 0.0
  %2532 = vmatpush2.msra.mxu0 0.0
  %2533 = vmatprep.subr.mxu0 0.0
  %2534 = vmatpush2.msra.mxu0 0.0
  %2535 = vmatprep.mubr.f32.mxu0 0.0
  %2536 = vmatmul.mubr.f32.gmra.mxu0 %v2438
  %v2537 = vpop.f32.mrf.mxu0
  %v2538 = vadd.f32 0.0, %v2537
  %v2539 = vpop.f32.mrf.mxu0
  %2540 = vmatprep.mubr.f32.mxu0 0.0
  %2541 = vmatmul.mubr.f32.gmra.mxu0 %v2439
  %v2542 = vpop.f32.mrf.mxu0
  %v2543 = vadd.f32 0.0, %v2542
  %v2544 = vpop.f32.mrf.mxu0
  %2545 = vmatprep.mubr.f32.mxu0 0.0
  %2546 = vmatmul.mubr.f32.gmra.mxu0 %v2440
  %v2547 = vpop.f32.mrf.mxu0
  %v2548 = vadd.f32 0.0, %v2547
  %v2549 = vpop.f32.mrf.mxu0
  %2550 = vmatprep.mubr.f32.mxu0 0.0
  %2551 = vmatmul.mubr.f32.gmra.mxu0 %v2441
  %v2552 = vpop.f32.mrf.mxu0
  %v2553 = vadd.f32 0.0, %v2552
  %v2554 = vpop.f32.mrf.mxu0
  %2555 = vmatprep.mubr.f32.mxu0 0.0
  %2556 = vmatmul.mubr.f32.gmra.mxu0 %v2442
  %v2557 = vpop.f32.mrf.mxu0
  %v2558 = vadd.f32 0.0, %v2557
  %v2559 = vpop.f32.mrf.mxu0
  %2560 = vmatprep.mubr.f32.mxu0 0.0
  %2561 = vmatmul.mubr.f32.gmra.mxu0 %v2443
  %v2562 = vpop.f32.mrf.mxu0
  %v2563 = vadd.f32 0.0, %v2562
  %v2564 = vpop.f32.mrf.mxu0
  %2565 = vmatprep.mubr.f32.mxu0 0.0
  %2566 = vmatmul.mubr.f32.gmra.mxu0 %v2444
  %v2567 = vpop.f32.mrf.mxu0
  %v2568 = vadd.f32 0.0, %v2567
  %v2569 = vpop.f32.mrf.mxu0
  %2570 = vmatprep.mubr.f32.mxu0 0.0
  %2571 = vmatmul.mubr.f32.gmra.mxu0 %v2445
  %v2572 = vpop.f32.mrf.mxu0
  %v2573 = vadd.f32 0.0, %v2572
  %v2574 = vpop.f32.mrf.mxu0
  %2575 = vmatprep.mubr.f32.mxu0 0.0
  %2576 = vmatmul.mubr.f32.gmra.mxu0 %v2446
  %v2577 = vpop.f32.mrf.mxu0
  %v2578 = vadd.f32 0.0, %v2577
  %v2579 = vpop.f32.mrf.mxu0
  %2580 = vmatprep.mubr.f32.mxu0 0.0
  %2581 = vmatmul.mubr.f32.gmra.mxu0 %v2447
  %v2582 = vpop.f32.mrf.mxu0
  %v2583 = vadd.f32 0.0, %v2582
  %v2584 = vpop.f32.mrf.mxu0
  %2585 = vmatprep.mubr.f32.mxu0 0.0
  %2586 = vmatmul.mubr.f32.gmra.mxu0 %v2448
  %v2587 = vpop.f32.mrf.mxu0
  %v2588 = vadd.f32 0.0, %v2587
  %v2589 = vpop.f32.mrf.mxu0
  %2590 = vmatprep.mubr.f32.mxu0 0.0
  %2591 = vmatmul.mubr.f32.gmra.mxu0 %v2449
  %v2592 = vpop.f32.mrf.mxu0
  %v2593 = vadd.f32 0.0, %v2592
  %v2594 = vpop.f32.mrf.mxu0
  %2595 = vmatprep.mubr.f32.mxu0 0.0
  %2596 = vmatmul.mubr.f32.gmra.mxu0 %v2450
  %v2597 = vpop.f32.mrf.mxu0
  %v2598 = vadd.f32 0.0, %v2597
  %v2599 = vpop.f32.mrf.mxu0
  %2600 = vmatprep.mubr.f32.mxu0 0.0
  %2601 = vmatmul.mubr.f32.gmra.mxu0 %v2451
  %v2602 = vpop.f32.mrf.mxu0
  %v2603 = vadd.f32 0.0, %v2602
  %v2604 = vpop.f32.mrf.mxu0
  %2605 = vmatprep.mubr.f32.mxu0 0.0
  %2606 = vmatmul.mubr.f32.gmra.mxu0 %v2452
  %v2607 = vpop.f32.mrf.mxu0
  %v2608 = vadd.f32 0.0, %v2607
  %v2609 = vpop.f32.mrf.mxu0
  %2610 = vmatprep.mubr.f32.mxu0 0.0
  %2611 = vmatmul.mubr.f32.gmra.mxu0 %v2453
  %v2612 = vpop.f32.mrf.mxu0
  %v2613 = vadd.f32 0.0, %v2612
  %v2614 = vpop.f32.mrf.mxu0
  %2615 = vdwg.mxu0
  %v2616 = vadd.f32 %v2422, %v2538
  %v2617 = vadd.f32 %v2423, %v2543
  %v2618 = vadd.f32 %v2424, %v2548
  %v2619 = vadd.f32 %v2425, %v2553
  %v2620 = vadd.f32 %v2426, %v2558
  %v2621 = vadd.f32 %v2427, %v2563
  %v2622 = vadd.f32 %v2428, %v2568
  %v2623 = vadd.f32 %v2429, %v2573
  %v2624 = vadd.f32 %v2430, %v2578
  %v2625 = vadd.f32 %v2431, %v2583
  %v2626 = vadd.f32 %v2432, %v2588
  %v2627 = vadd.f32 %v2433, %v2593
  %v2628 = vadd.f32 %v2434, %v2598
  %v2629 = vadd.f32 %v2435, %v2603
  %v2630 = vadd.f32 %v2436, %v2608
  %v2631 = vadd.f32 %v2437, %v2613
  %v2632 = vld [vmem:[%s1872 + $0x1] sm:$0xff]
  %v2633 = vld [vmem:[%s1872 + $0x11] sm:$0xff]
  %v2634 = vld [vmem:[%s1872 + $0x21] sm:$0xff]
  %v2635 = vld [vmem:[%s1872 + $0x31] sm:$0xff]
  %v2636 = vld [vmem:[%s1872 + $0x41] sm:$0xff]
  %v2637 = vld [vmem:[%s1872 + $0x51] sm:$0xff]
  %v2638 = vld [vmem:[%s1872 + $0x61] sm:$0xff]
  %v2639 = vld [vmem:[%s1872 + $0x71] sm:$0xff]
  %v2640 = vld [vmem:[%s1872 + $0xa1] sm:$0xff]
  %v2641 = vld [vmem:[%s1872 + $0xb1] sm:$0xff]
  %v2642 = vld [vmem:[%s1872 + $0xc1] sm:$0xff]
  %v2643 = vld [vmem:[%s1872 + $0xd1] sm:$0xff]
  %v2644 = vld [vmem:[%s1872 + $0xe1] sm:$0xff]
  %v2645 = vld [vmem:[%s1872 + $0xf1] sm:$0xff]
  %v2646 = vld [vmem:[%s1872 + $0x101] sm:$0xff]
  %v2647 = vld [vmem:[%s1872 + $0x111] sm:$0xff]
  %s2648 = scalar_lea.vmem %s2, 512
  %v2649 = vld [vmem:[%s2648] sm:$0xff]
  %v2650 = vld [vmem:[%s2648 + $0x8] sm:$0xff]
  %v2651 = vld [vmem:[%s2648 + $0x10] sm:$0xff]
  %v2652 = vld [vmem:[%s2648 + $0x18] sm:$0xff]
  %v2653 = vld [vmem:[%s2648 + $0x20] sm:$0xff]
  %v2654 = vld [vmem:[%s2648 + $0x28] sm:$0xff]
  %v2655 = vld [vmem:[%s2648 + $0x30] sm:$0xff]
  %v2656 = vld [vmem:[%s2648 + $0x38] sm:$0xff]
  %v2657 = vld [vmem:[%s2648 + $0x40] sm:$0xff]
  %v2658 = vld [vmem:[%s2648 + $0x48] sm:$0xff]
  %v2659 = vld [vmem:[%s2648 + $0x50] sm:$0xff]
  %v2660 = vld [vmem:[%s2648 + $0x58] sm:$0xff]
  %v2661 = vld [vmem:[%s2648 + $0x60] sm:$0xff]
  %v2662 = vld [vmem:[%s2648 + $0x68] sm:$0xff]
  %v2663 = vld [vmem:[%s2648 + $0x70] sm:$0xff]
  %v2664 = vld [vmem:[%s2648 + $0x78] sm:$0xff]
  %2665 = vmatprep.subr.mxu0 0.0
  %2666 = vmatpush1.msra.mxu0 %v2664
  %2667 = vmatprep.subr.mxu0 0.0
  %2668 = vmatpush1.msra.mxu0 %v2663
  %2669 = vmatprep.subr.mxu0 0.0
  %2670 = vmatpush1.msra.mxu0 %v2662
  %2671 = vmatprep.subr.mxu0 0.0
  %2672 = vmatpush1.msra.mxu0 %v2661
  %2673 = vmatprep.subr.mxu0 0.0
  %2674 = vmatpush1.msra.mxu0 %v2660
  %2675 = vmatprep.subr.mxu0 0.0
  %2676 = vmatpush1.msra.mxu0 %v2659
  %2677 = vmatprep.subr.mxu0 0.0
  %2678 = vmatpush1.msra.mxu0 %v2658
  %2679 = vmatprep.subr.mxu0 0.0
  %2680 = vmatpush1.msra.mxu0 %v2657
  %2681 = vmatprep.subr.mxu0 0.0
  %2682 = vmatpush1.msra.mxu0 %v2656
  %2683 = vmatprep.subr.mxu0 0.0
  %2684 = vmatpush1.msra.mxu0 %v2655
  %2685 = vmatprep.subr.mxu0 0.0
  %2686 = vmatpush1.msra.mxu0 %v2654
  %2687 = vmatprep.subr.mxu0 0.0
  %2688 = vmatpush1.msra.mxu0 %v2653
  %2689 = vmatprep.subr.mxu0 0.0
  %2690 = vmatpush1.msra.mxu0 %v2652
  %2691 = vmatprep.subr.mxu0 0.0
  %2692 = vmatpush1.msra.mxu0 %v2651
  %2693 = vmatprep.subr.mxu0 0.0
  %2694 = vmatpush1.msra.mxu0 %v2650
  %2695 = vmatprep.subr.mxu0 0.0
  %2696 = vmatpush1.msra.mxu0 %v2649
  %2697 = vmatprep.subr.mxu0 0.0
  %2698 = vmatpush2.msra.mxu0 0.0
  %2699 = vmatprep.subr.mxu0 0.0
  %2700 = vmatpush2.msra.mxu0 0.0
  %2701 = vmatprep.subr.mxu0 0.0
  %2702 = vmatpush2.msra.mxu0 0.0
  %2703 = vmatprep.subr.mxu0 0.0
  %2704 = vmatpush2.msra.mxu0 0.0
  %2705 = vmatprep.subr.mxu0 0.0
  %2706 = vmatpush2.msra.mxu0 0.0
  %2707 = vmatprep.subr.mxu0 0.0
  %2708 = vmatpush2.msra.mxu0 0.0
  %2709 = vmatprep.subr.mxu0 0.0
  %2710 = vmatpush2.msra.mxu0 0.0
  %2711 = vmatprep.subr.mxu0 0.0
  %2712 = vmatpush2.msra.mxu0 0.0
  %2713 = vmatprep.subr.mxu0 0.0
  %2714 = vmatpush2.msra.mxu0 0.0
  %2715 = vmatprep.subr.mxu0 0.0
  %2716 = vmatpush2.msra.mxu0 0.0
  %2717 = vmatprep.subr.mxu0 0.0
  %2718 = vmatpush2.msra.mxu0 0.0
  %2719 = vmatprep.subr.mxu0 0.0
  %2720 = vmatpush2.msra.mxu0 0.0
  %2721 = vmatprep.subr.mxu0 0.0
  %2722 = vmatpush2.msra.mxu0 0.0
  %2723 = vmatprep.subr.mxu0 0.0
  %2724 = vmatpush2.msra.mxu0 0.0
  %2725 = vmatprep.subr.mxu0 0.0
  %2726 = vmatpush2.msra.mxu0 0.0
  %2727 = vmatprep.subr.mxu0 0.0
  %2728 = vmatpush2.msra.mxu0 0.0
  %2729 = vmatprep.mubr.f32.mxu0 0.0
  %2730 = vmatmul.mubr.f32.gmra.mxu0 %v2632
  %v2731 = vpop.f32.mrf.mxu0
  %v2732 = vadd.f32 0.0, %v2731
  %v2733 = vpop.f32.mrf.mxu0
  %2734 = vmatprep.mubr.f32.mxu0 0.0
  %2735 = vmatmul.mubr.f32.gmra.mxu0 %v2633
  %v2736 = vpop.f32.mrf.mxu0
  %v2737 = vadd.f32 0.0, %v2736
  %v2738 = vpop.f32.mrf.mxu0
  %2739 = vmatprep.mubr.f32.mxu0 0.0
  %2740 = vmatmul.mubr.f32.gmra.mxu0 %v2634
  %v2741 = vpop.f32.mrf.mxu0
  %v2742 = vadd.f32 0.0, %v2741
  %v2743 = vpop.f32.mrf.mxu0
  %2744 = vmatprep.mubr.f32.mxu0 0.0
  %2745 = vmatmul.mubr.f32.gmra.mxu0 %v2635
  %v2746 = vpop.f32.mrf.mxu0
  %v2747 = vadd.f32 0.0, %v2746
  %v2748 = vpop.f32.mrf.mxu0
  %2749 = vmatprep.mubr.f32.mxu0 0.0
  %2750 = vmatmul.mubr.f32.gmra.mxu0 %v2636
  %v2751 = vpop.f32.mrf.mxu0
  %v2752 = vadd.f32 0.0, %v2751
  %v2753 = vpop.f32.mrf.mxu0
  %2754 = vmatprep.mubr.f32.mxu0 0.0
  %2755 = vmatmul.mubr.f32.gmra.mxu0 %v2637
  %v2756 = vpop.f32.mrf.mxu0
  %v2757 = vadd.f32 0.0, %v2756
  %v2758 = vpop.f32.mrf.mxu0
  %2759 = vmatprep.mubr.f32.mxu0 0.0
  %2760 = vmatmul.mubr.f32.gmra.mxu0 %v2638
  %v2761 = vpop.f32.mrf.mxu0
  %v2762 = vadd.f32 0.0, %v2761
  %v2763 = vpop.f32.mrf.mxu0
  %2764 = vmatprep.mubr.f32.mxu0 0.0
  %2765 = vmatmul.mubr.f32.gmra.mxu0 %v2639
  %v2766 = vpop.f32.mrf.mxu0
  %v2767 = vadd.f32 0.0, %v2766
  %v2768 = vpop.f32.mrf.mxu0
  %2769 = vmatprep.mubr.f32.mxu0 0.0
  %2770 = vmatmul.mubr.f32.gmra.mxu0 %v2640
  %v2771 = vpop.f32.mrf.mxu0
  %v2772 = vadd.f32 0.0, %v2771
  %v2773 = vpop.f32.mrf.mxu0
  %2774 = vmatprep.mubr.f32.mxu0 0.0
  %2775 = vmatmul.mubr.f32.gmra.mxu0 %v2641
  %v2776 = vpop.f32.mrf.mxu0
  %v2777 = vadd.f32 0.0, %v2776
  %v2778 = vpop.f32.mrf.mxu0
  %2779 = vmatprep.mubr.f32.mxu0 0.0
  %2780 = vmatmul.mubr.f32.gmra.mxu0 %v2642
  %v2781 = vpop.f32.mrf.mxu0
  %v2782 = vadd.f32 0.0, %v2781
  %v2783 = vpop.f32.mrf.mxu0
  %2784 = vmatprep.mubr.f32.mxu0 0.0
  %2785 = vmatmul.mubr.f32.gmra.mxu0 %v2643
  %v2786 = vpop.f32.mrf.mxu0
  %v2787 = vadd.f32 0.0, %v2786
  %v2788 = vpop.f32.mrf.mxu0
  %2789 = vmatprep.mubr.f32.mxu0 0.0
  %2790 = vmatmul.mubr.f32.gmra.mxu0 %v2644
  %v2791 = vpop.f32.mrf.mxu0
  %v2792 = vadd.f32 0.0, %v2791
  %v2793 = vpop.f32.mrf.mxu0
  %2794 = vmatprep.mubr.f32.mxu0 0.0
  %2795 = vmatmul.mubr.f32.gmra.mxu0 %v2645
  %v2796 = vpop.f32.mrf.mxu0
  %v2797 = vadd.f32 0.0, %v2796
  %v2798 = vpop.f32.mrf.mxu0
  %2799 = vmatprep.mubr.f32.mxu0 0.0
  %2800 = vmatmul.mubr.f32.gmra.mxu0 %v2646
  %v2801 = vpop.f32.mrf.mxu0
  %v2802 = vadd.f32 0.0, %v2801
  %v2803 = vpop.f32.mrf.mxu0
  %2804 = vmatprep.mubr.f32.mxu0 0.0
  %2805 = vmatmul.mubr.f32.gmra.mxu0 %v2647
  %v2806 = vpop.f32.mrf.mxu0
  %v2807 = vadd.f32 0.0, %v2806
  %v2808 = vpop.f32.mrf.mxu0
  %2809 = vdwg.mxu0
  %v2810 = vadd.f32 %v2616, %v2732
  %v2811 = vadd.f32 %v2617, %v2737
  %v2812 = vadd.f32 %v2618, %v2742
  %v2813 = vadd.f32 %v2619, %v2747
  %v2814 = vadd.f32 %v2620, %v2752
  %v2815 = vadd.f32 %v2621, %v2757
  %v2816 = vadd.f32 %v2622, %v2762
  %v2817 = vadd.f32 %v2623, %v2767
  %v2818 = vadd.f32 %v2624, %v2772
  %v2819 = vadd.f32 %v2625, %v2777
  %v2820 = vadd.f32 %v2626, %v2782
  %v2821 = vadd.f32 %v2627, %v2787
  %v2822 = vadd.f32 %v2628, %v2792
  %v2823 = vadd.f32 %v2629, %v2797
  %v2824 = vadd.f32 %v2630, %v2802
  %v2825 = vadd.f32 %v2631, %v2807
  %v2826 = vld [vmem:[%s1872 + $0x2] sm:$0xff]
  %v2827 = vld [vmem:[%s1872 + $0x12] sm:$0xff]
  %v2828 = vld [vmem:[%s1872 + $0x22] sm:$0xff]
  %v2829 = vld [vmem:[%s1872 + $0x32] sm:$0xff]
  %v2830 = vld [vmem:[%s1872 + $0x42] sm:$0xff]
  %v2831 = vld [vmem:[%s1872 + $0x52] sm:$0xff]
  %v2832 = vld [vmem:[%s1872 + $0x62] sm:$0xff]
  %v2833 = vld [vmem:[%s1872 + $0x72] sm:$0xff]
  %v2834 = vld [vmem:[%s1872 + $0xa2] sm:$0xff]
  %v2835 = vld [vmem:[%s1872 + $0xb2] sm:$0xff]
  %v2836 = vld [vmem:[%s1872 + $0xc2] sm:$0xff]
  %v2837 = vld [vmem:[%s1872 + $0xd2] sm:$0xff]
  %v2838 = vld [vmem:[%s1872 + $0xe2] sm:$0xff]
  %v2839 = vld [vmem:[%s1872 + $0xf2] sm:$0xff]
  %v2840 = vld [vmem:[%s1872 + $0x102] sm:$0xff]
  %v2841 = vld [vmem:[%s1872 + $0x112] sm:$0xff]
  %s2842 = scalar_lea.vmem %s2, 640
  %v2843 = vld [vmem:[%s2842] sm:$0xff]
  %v2844 = vld [vmem:[%s2842 + $0x8] sm:$0xff]
  %v2845 = vld [vmem:[%s2842 + $0x10] sm:$0xff]
  %v2846 = vld [vmem:[%s2842 + $0x18] sm:$0xff]
  %v2847 = vld [vmem:[%s2842 + $0x20] sm:$0xff]
  %v2848 = vld [vmem:[%s2842 + $0x28] sm:$0xff]
  %v2849 = vld [vmem:[%s2842 + $0x30] sm:$0xff]
  %v2850 = vld [vmem:[%s2842 + $0x38] sm:$0xff]
  %v2851 = vld [vmem:[%s2842 + $0x40] sm:$0xff]
  %v2852 = vld [vmem:[%s2842 + $0x48] sm:$0xff]
  %v2853 = vld [vmem:[%s2842 + $0x50] sm:$0xff]
  %v2854 = vld [vmem:[%s2842 + $0x58] sm:$0xff]
  %v2855 = vld [vmem:[%s2842 + $0x60] sm:$0xff]
  %v2856 = vld [vmem:[%s2842 + $0x68] sm:$0xff]
  %v2857 = vld [vmem:[%s2842 + $0x70] sm:$0xff]
  %v2858 = vld [vmem:[%s2842 + $0x78] sm:$0xff]
  %2859 = vmatprep.subr.mxu0 0.0
  %2860 = vmatpush1.msra.mxu0 %v2858
  %2861 = vmatprep.subr.mxu0 0.0
  %2862 = vmatpush1.msra.mxu0 %v2857
  %2863 = vmatprep.subr.mxu0 0.0
  %2864 = vmatpush1.msra.mxu0 %v2856
  %2865 = vmatprep.subr.mxu0 0.0
  %2866 = vmatpush1.msra.mxu0 %v2855
  %2867 = vmatprep.subr.mxu0 0.0
  %2868 = vmatpush1.msra.mxu0 %v2854
  %2869 = vmatprep.subr.mxu0 0.0
  %2870 = vmatpush1.msra.mxu0 %v2853
  %2871 = vmatprep.subr.mxu0 0.0
  %2872 = vmatpush1.msra.mxu0 %v2852
  %2873 = vmatprep.subr.mxu0 0.0
  %2874 = vmatpush1.msra.mxu0 %v2851
  %2875 = vmatprep.subr.mxu0 0.0
  %2876 = vmatpush1.msra.mxu0 %v2850
  %2877 = vmatprep.subr.mxu0 0.0
  %2878 = vmatpush1.msra.mxu0 %v2849
  %2879 = vmatprep.subr.mxu0 0.0
  %2880 = vmatpush1.msra.mxu0 %v2848
  %2881 = vmatprep.subr.mxu0 0.0
  %2882 = vmatpush1.msra.mxu0 %v2847
  %2883 = vmatprep.subr.mxu0 0.0
  %2884 = vmatpush1.msra.mxu0 %v2846
  %2885 = vmatprep.subr.mxu0 0.0
  %2886 = vmatpush1.msra.mxu0 %v2845
  %2887 = vmatprep.subr.mxu0 0.0
  %2888 = vmatpush1.msra.mxu0 %v2844
  %2889 = vmatprep.subr.mxu0 0.0
  %2890 = vmatpush1.msra.mxu0 %v2843
  %2891 = vmatprep.subr.mxu0 0.0
  %2892 = vmatpush2.msra.mxu0 0.0
  %2893 = vmatprep.subr.mxu0 0.0
  %2894 = vmatpush2.msra.mxu0 0.0
  %2895 = vmatprep.subr.mxu0 0.0
  %2896 = vmatpush2.msra.mxu0 0.0
  %2897 = vmatprep.subr.mxu0 0.0
  %2898 = vmatpush2.msra.mxu0 0.0
  %2899 = vmatprep.subr.mxu0 0.0
  %2900 = vmatpush2.msra.mxu0 0.0
  %2901 = vmatprep.subr.mxu0 0.0
  %2902 = vmatpush2.msra.mxu0 0.0
  %2903 = vmatprep.subr.mxu0 0.0
  %2904 = vmatpush2.msra.mxu0 0.0
  %2905 = vmatprep.subr.mxu0 0.0
  %2906 = vmatpush2.msra.mxu0 0.0
  %2907 = vmatprep.subr.mxu0 0.0
  %2908 = vmatpush2.msra.mxu0 0.0
  %2909 = vmatprep.subr.mxu0 0.0
  %2910 = vmatpush2.msra.mxu0 0.0
  %2911 = vmatprep.subr.mxu0 0.0
  %2912 = vmatpush2.msra.mxu0 0.0
  %2913 = vmatprep.subr.mxu0 0.0
  %2914 = vmatpush2.msra.mxu0 0.0
  %2915 = vmatprep.subr.mxu0 0.0
  %2916 = vmatpush2.msra.mxu0 0.0
  %2917 = vmatprep.subr.mxu0 0.0
  %2918 = vmatpush2.msra.mxu0 0.0
  %2919 = vmatprep.subr.mxu0 0.0
  %2920 = vmatpush2.msra.mxu0 0.0
  %2921 = vmatprep.subr.mxu0 0.0
  %2922 = vmatpush2.msra.mxu0 0.0
  %2923 = vmatprep.mubr.f32.mxu0 0.0
  %2924 = vmatmul.mubr.f32.gmra.mxu0 %v2826
  %v2925 = vpop.f32.mrf.mxu0
  %v2926 = vadd.f32 0.0, %v2925
  %v2927 = vpop.f32.mrf.mxu0
  %2928 = vmatprep.mubr.f32.mxu0 0.0
  %2929 = vmatmul.mubr.f32.gmra.mxu0 %v2827
  %v2930 = vpop.f32.mrf.mxu0
  %v2931 = vadd.f32 0.0, %v2930
  %v2932 = vpop.f32.mrf.mxu0
  %2933 = vmatprep.mubr.f32.mxu0 0.0
  %2934 = vmatmul.mubr.f32.gmra.mxu0 %v2828
  %v2935 = vpop.f32.mrf.mxu0
  %v2936 = vadd.f32 0.0, %v2935
  %v2937 = vpop.f32.mrf.mxu0
  %2938 = vmatprep.mubr.f32.mxu0 0.0
  %2939 = vmatmul.mubr.f32.gmra.mxu0 %v2829
  %v2940 = vpop.f32.mrf.mxu0
  %v2941 = vadd.f32 0.0, %v2940
  %v2942 = vpop.f32.mrf.mxu0
  %2943 = vmatprep.mubr.f32.mxu0 0.0
  %2944 = vmatmul.mubr.f32.gmra.mxu0 %v2830
  %v2945 = vpop.f32.mrf.mxu0
  %v2946 = vadd.f32 0.0, %v2945
  %v2947 = vpop.f32.mrf.mxu0
  %2948 = vmatprep.mubr.f32.mxu0 0.0
  %2949 = vmatmul.mubr.f32.gmra.mxu0 %v2831
  %v2950 = vpop.f32.mrf.mxu0
  %v2951 = vadd.f32 0.0, %v2950
  %v2952 = vpop.f32.mrf.mxu0
  %2953 = vmatprep.mubr.f32.mxu0 0.0
  %2954 = vmatmul.mubr.f32.gmra.mxu0 %v2832
  %v2955 = vpop.f32.mrf.mxu0
  %v2956 = vadd.f32 0.0, %v2955
  %v2957 = vpop.f32.mrf.mxu0
  %2958 = vmatprep.mubr.f32.mxu0 0.0
  %2959 = vmatmul.mubr.f32.gmra.mxu0 %v2833
  %v2960 = vpop.f32.mrf.mxu0
  %v2961 = vadd.f32 0.0, %v2960
  %v2962 = vpop.f32.mrf.mxu0
  %2963 = vmatprep.mubr.f32.mxu0 0.0
  %2964 = vmatmul.mubr.f32.gmra.mxu0 %v2834
  %v2965 = vpop.f32.mrf.mxu0
  %v2966 = vadd.f32 0.0, %v2965
  %v2967 = vpop.f32.mrf.mxu0
  %2968 = vmatprep.mubr.f32.mxu0 0.0
  %2969 = vmatmul.mubr.f32.gmra.mxu0 %v2835
  %v2970 = vpop.f32.mrf.mxu0
  %v2971 = vadd.f32 0.0, %v2970
  %v2972 = vpop.f32.mrf.mxu0
  %2973 = vmatprep.mubr.f32.mxu0 0.0
  %2974 = vmatmul.mubr.f32.gmra.mxu0 %v2836
  %v2975 = vpop.f32.mrf.mxu0
  %v2976 = vadd.f32 0.0, %v2975
  %v2977 = vpop.f32.mrf.mxu0
  %2978 = vmatprep.mubr.f32.mxu0 0.0
  %2979 = vmatmul.mubr.f32.gmra.mxu0 %v2837
  %v2980 = vpop.f32.mrf.mxu0
  %v2981 = vadd.f32 0.0, %v2980
  %v2982 = vpop.f32.mrf.mxu0
  %2983 = vmatprep.mubr.f32.mxu0 0.0
  %2984 = vmatmul.mubr.f32.gmra.mxu0 %v2838
  %v2985 = vpop.f32.mrf.mxu0
  %v2986 = vadd.f32 0.0, %v2985
  %v2987 = vpop.f32.mrf.mxu0
  %2988 = vmatprep.mubr.f32.mxu0 0.0
  %2989 = vmatmul.mubr.f32.gmra.mxu0 %v2839
  %v2990 = vpop.f32.mrf.mxu0
  %v2991 = vadd.f32 0.0, %v2990
  %v2992 = vpop.f32.mrf.mxu0
  %2993 = vmatprep.mubr.f32.mxu0 0.0
  %2994 = vmatmul.mubr.f32.gmra.mxu0 %v2840
  %v2995 = vpop.f32.mrf.mxu0
  %v2996 = vadd.f32 0.0, %v2995
  %v2997 = vpop.f32.mrf.mxu0
  %2998 = vmatprep.mubr.f32.mxu0 0.0
  %2999 = vmatmul.mubr.f32.gmra.mxu0 %v2841
  %v3000 = vpop.f32.mrf.mxu0
  %v3001 = vadd.f32 0.0, %v3000
  %v3002 = vpop.f32.mrf.mxu0
  %3003 = vdwg.mxu0
  %v3004 = vadd.f32 %v2810, %v2926
  %v3005 = vadd.f32 %v2811, %v2931
  %v3006 = vadd.f32 %v2812, %v2936
  %v3007 = vadd.f32 %v2813, %v2941
  %v3008 = vadd.f32 %v2814, %v2946
  %v3009 = vadd.f32 %v2815, %v2951
  %v3010 = vadd.f32 %v2816, %v2956
  %v3011 = vadd.f32 %v2817, %v2961
  %v3012 = vadd.f32 %v2818, %v2966
  %v3013 = vadd.f32 %v2819, %v2971
  %v3014 = vadd.f32 %v2820, %v2976
  %v3015 = vadd.f32 %v2821, %v2981
  %v3016 = vadd.f32 %v2822, %v2986
  %v3017 = vadd.f32 %v2823, %v2991
  %v3018 = vadd.f32 %v2824, %v2996
  %v3019 = vadd.f32 %v2825, %v3001
  %s3020 = scalar_lea.vmem [#allocation2], 32
  %v3021 = vld [vmem:[%s3020] sm:$0xff]
  %v3022 = vld [vmem:[%s3020 + $0x10] sm:$0xff]
  %v3023 = vld [vmem:[%s3020 + $0x20] sm:$0xff]
  %v3024 = vld [vmem:[%s3020 + $0x30] sm:$0xff]
  %v3025 = vld [vmem:[%s3020 + $0x40] sm:$0xff]
  %v3026 = vld [vmem:[%s3020 + $0x50] sm:$0xff]
  %v3027 = vld [vmem:[%s3020 + $0x60] sm:$0xff]
  %v3028 = vld [vmem:[%s3020 + $0x70] sm:$0xff]
  %v3029 = vld [vmem:[%s3020 + $0xa0] sm:$0xff]
  %v3030 = vld [vmem:[%s3020 + $0xb0] sm:$0xff]
  %v3031 = vld [vmem:[%s3020 + $0xc0] sm:$0xff]
  %v3032 = vld [vmem:[%s3020 + $0xd0] sm:$0xff]
  %v3033 = vld [vmem:[%s3020 + $0xe0] sm:$0xff]
  %v3034 = vld [vmem:[%s3020 + $0xf0] sm:$0xff]
  %v3035 = vld [vmem:[%s3020 + $0x100] sm:$0xff]
  %v3036 = vld [vmem:[%s3020 + $0x110] sm:$0xff]
  %s3037 = scalar_lea.vmem %s2, 768
  %v3038 = vld [vmem:[%s3037] sm:$0xff]
  %v3039 = vld [vmem:[%s3037 + $0x8] sm:$0xff]
  %v3040 = vld [vmem:[%s3037 + $0x10] sm:$0xff]
  %v3041 = vld [vmem:[%s3037 + $0x18] sm:$0xff]
  %v3042 = vld [vmem:[%s3037 + $0x20] sm:$0xff]
  %v3043 = vld [vmem:[%s3037 + $0x28] sm:$0xff]
  %v3044 = vld [vmem:[%s3037 + $0x30] sm:$0xff]
  %v3045 = vld [vmem:[%s3037 + $0x38] sm:$0xff]
  %v3046 = vld [vmem:[%s3037 + $0x40] sm:$0xff]
  %v3047 = vld [vmem:[%s3037 + $0x48] sm:$0xff]
  %v3048 = vld [vmem:[%s3037 + $0x50] sm:$0xff]
  %v3049 = vld [vmem:[%s3037 + $0x58] sm:$0xff]
  %v3050 = vld [vmem:[%s3037 + $0x60] sm:$0xff]
  %v3051 = vld [vmem:[%s3037 + $0x68] sm:$0xff]
  %v3052 = vld [vmem:[%s3037 + $0x70] sm:$0xff]
  %v3053 = vld [vmem:[%s3037 + $0x78] sm:$0xff]
  %3054 = vmatprep.subr.mxu0 0.0
  %3055 = vmatpush1.msra.mxu0 %v3053
  %3056 = vmatprep.subr.mxu0 0.0
  %3057 = vmatpush1.msra.mxu0 %v3052
  %3058 = vmatprep.subr.mxu0 0.0
  %3059 = vmatpush1.msra.mxu0 %v3051
  %3060 = vmatprep.subr.mxu0 0.0
  %3061 = vmatpush1.msra.mxu0 %v3050
  %3062 = vmatprep.subr.mxu0 0.0
  %3063 = vmatpush1.msra.mxu0 %v3049
  %3064 = vmatprep.subr.mxu0 0.0
  %3065 = vmatpush1.msra.mxu0 %v3048
  %3066 = vmatprep.subr.mxu0 0.0
  %3067 = vmatpush1.msra.mxu0 %v3047
  %3068 = vmatprep.subr.mxu0 0.0
  %3069 = vmatpush1.msra.mxu0 %v3046
  %3070 = vmatprep.subr.mxu0 0.0
  %3071 = vmatpush1.msra.mxu0 %v3045
  %3072 = vmatprep.subr.mxu0 0.0
  %3073 = vmatpush1.msra.mxu0 %v3044
  %3074 = vmatprep.subr.mxu0 0.0
  %3075 = vmatpush1.msra.mxu0 %v3043
  %3076 = vmatprep.subr.mxu0 0.0
  %3077 = vmatpush1.msra.mxu0 %v3042
  %3078 = vmatprep.subr.mxu0 0.0
  %3079 = vmatpush1.msra.mxu0 %v3041
  %3080 = vmatprep.subr.mxu0 0.0
  %3081 = vmatpush1.msra.mxu0 %v3040
  %3082 = vmatprep.subr.mxu0 0.0
  %3083 = vmatpush1.msra.mxu0 %v3039
  %3084 = vmatprep.subr.mxu0 0.0
  %3085 = vmatpush1.msra.mxu0 %v3038
  %3086 = vmatprep.subr.mxu0 0.0
  %3087 = vmatpush2.msra.mxu0 0.0
  %3088 = vmatprep.subr.mxu0 0.0
  %3089 = vmatpush2.msra.mxu0 0.0
  %3090 = vmatprep.subr.mxu0 0.0
  %3091 = vmatpush2.msra.mxu0 0.0
  %3092 = vmatprep.subr.mxu0 0.0
  %3093 = vmatpush2.msra.mxu0 0.0
  %3094 = vmatprep.subr.mxu0 0.0
  %3095 = vmatpush2.msra.mxu0 0.0
  %3096 = vmatprep.subr.mxu0 0.0
  %3097 = vmatpush2.msra.mxu0 0.0
  %3098 = vmatprep.subr.mxu0 0.0
  %3099 = vmatpush2.msra.mxu0 0.0
  %3100 = vmatprep.subr.mxu0 0.0
  %3101 = vmatpush2.msra.mxu0 0.0
  %3102 = vmatprep.subr.mxu0 0.0
  %3103 = vmatpush2.msra.mxu0 0.0
  %3104 = vmatprep.subr.mxu0 0.0
  %3105 = vmatpush2.msra.mxu0 0.0
  %3106 = vmatprep.subr.mxu0 0.0
  %3107 = vmatpush2.msra.mxu0 0.0
  %3108 = vmatprep.subr.mxu0 0.0
  %3109 = vmatpush2.msra.mxu0 0.0
  %3110 = vmatprep.subr.mxu0 0.0
  %3111 = vmatpush2.msra.mxu0 0.0
  %3112 = vmatprep.subr.mxu0 0.0
  %3113 = vmatpush2.msra.mxu0 0.0
  %3114 = vmatprep.subr.mxu0 0.0
  %3115 = vmatpush2.msra.mxu0 0.0
  %3116 = vmatprep.subr.mxu0 0.0
  %3117 = vmatpush2.msra.mxu0 0.0
  %3118 = vmatprep.mubr.f32.mxu0 0.0
  %3119 = vmatmul.mubr.f32.gmra.mxu0 %v3021
  %v3120 = vpop.f32.mrf.mxu0
  %v3121 = vadd.f32 0.0, %v3120
  %v3122 = vpop.f32.mrf.mxu0
  %3123 = vmatprep.mubr.f32.mxu0 0.0
  %3124 = vmatmul.mubr.f32.gmra.mxu0 %v3022
  %v3125 = vpop.f32.mrf.mxu0
  %v3126 = vadd.f32 0.0, %v3125
  %v3127 = vpop.f32.mrf.mxu0
  %3128 = vmatprep.mubr.f32.mxu0 0.0
  %3129 = vmatmul.mubr.f32.gmra.mxu0 %v3023
  %v3130 = vpop.f32.mrf.mxu0
  %v3131 = vadd.f32 0.0, %v3130
  %v3132 = vpop.f32.mrf.mxu0
  %3133 = vmatprep.mubr.f32.mxu0 0.0
  %3134 = vmatmul.mubr.f32.gmra.mxu0 %v3024
  %v3135 = vpop.f32.mrf.mxu0
  %v3136 = vadd.f32 0.0, %v3135
  %v3137 = vpop.f32.mrf.mxu0
  %3138 = vmatprep.mubr.f32.mxu0 0.0
  %3139 = vmatmul.mubr.f32.gmra.mxu0 %v3025
  %v3140 = vpop.f32.mrf.mxu0
  %v3141 = vadd.f32 0.0, %v3140
  %v3142 = vpop.f32.mrf.mxu0
  %3143 = vmatprep.mubr.f32.mxu0 0.0
  %3144 = vmatmul.mubr.f32.gmra.mxu0 %v3026
  %v3145 = vpop.f32.mrf.mxu0
  %v3146 = vadd.f32 0.0, %v3145
  %v3147 = vpop.f32.mrf.mxu0
  %3148 = vmatprep.mubr.f32.mxu0 0.0
  %3149 = vmatmul.mubr.f32.gmra.mxu0 %v3027
  %v3150 = vpop.f32.mrf.mxu0
  %v3151 = vadd.f32 0.0, %v3150
  %v3152 = vpop.f32.mrf.mxu0
  %3153 = vmatprep.mubr.f32.mxu0 0.0
  %3154 = vmatmul.mubr.f32.gmra.mxu0 %v3028
  %v3155 = vpop.f32.mrf.mxu0
  %v3156 = vadd.f32 0.0, %v3155
  %v3157 = vpop.f32.mrf.mxu0
  %3158 = vmatprep.mubr.f32.mxu0 0.0
  %3159 = vmatmul.mubr.f32.gmra.mxu0 %v3029
  %v3160 = vpop.f32.mrf.mxu0
  %v3161 = vadd.f32 0.0, %v3160
  %v3162 = vpop.f32.mrf.mxu0
  %3163 = vmatprep.mubr.f32.mxu0 0.0
  %3164 = vmatmul.mubr.f32.gmra.mxu0 %v3030
  %v3165 = vpop.f32.mrf.mxu0
  %v3166 = vadd.f32 0.0, %v3165
  %v3167 = vpop.f32.mrf.mxu0
  %3168 = vmatprep.mubr.f32.mxu0 0.0
  %3169 = vmatmul.mubr.f32.gmra.mxu0 %v3031
  %v3170 = vpop.f32.mrf.mxu0
  %v3171 = vadd.f32 0.0, %v3170
  %v3172 = vpop.f32.mrf.mxu0
  %3173 = vmatprep.mubr.f32.mxu0 0.0
  %3174 = vmatmul.mubr.f32.gmra.mxu0 %v3032
  %v3175 = vpop.f32.mrf.mxu0
  %v3176 = vadd.f32 0.0, %v3175
  %v3177 = vpop.f32.mrf.mxu0
  %3178 = vmatprep.mubr.f32.mxu0 0.0
  %3179 = vmatmul.mubr.f32.gmra.mxu0 %v3033
  %v3180 = vpop.f32.mrf.mxu0
  %v3181 = vadd.f32 0.0, %v3180
  %v3182 = vpop.f32.mrf.mxu0
  %3183 = vmatprep.mubr.f32.mxu0 0.0
  %3184 = vmatmul.mubr.f32.gmra.mxu0 %v3034
  %v3185 = vpop.f32.mrf.mxu0
  %v3186 = vadd.f32 0.0, %v3185
  %v3187 = vpop.f32.mrf.mxu0
  %3188 = vmatprep.mubr.f32.mxu0 0.0
  %3189 = vmatmul.mubr.f32.gmra.mxu0 %v3035
  %v3190 = vpop.f32.mrf.mxu0
  %v3191 = vadd.f32 0.0, %v3190
  %v3192 = vpop.f32.mrf.mxu0
  %3193 = vmatprep.mubr.f32.mxu0 0.0
  %3194 = vmatmul.mubr.f32.gmra.mxu0 %v3036
  %v3195 = vpop.f32.mrf.mxu0
  %v3196 = vadd.f32 0.0, %v3195
  %v3197 = vpop.f32.mrf.mxu0
  %3198 = vdwg.mxu0
  %v3199 = vadd.f32 %v3004, %v3121
  %v3200 = vadd.f32 %v3005, %v3126
  %v3201 = vadd.f32 %v3006, %v3131
  %v3202 = vadd.f32 %v3007, %v3136
  %v3203 = vadd.f32 %v3008, %v3141
  %v3204 = vadd.f32 %v3009, %v3146
  %v3205 = vadd.f32 %v3010, %v3151
  %v3206 = vadd.f32 %v3011, %v3156
  %v3207 = vadd.f32 %v3012, %v3161
  %v3208 = vadd.f32 %v3013, %v3166
  %v3209 = vadd.f32 %v3014, %v3171
  %v3210 = vadd.f32 %v3015, %v3176
  %v3211 = vadd.f32 %v3016, %v3181
  %v3212 = vadd.f32 %v3017, %v3186
  %v3213 = vadd.f32 %v3018, %v3191
  %v3214 = vadd.f32 %v3019, %v3196
  %v3215 = vld [vmem:[%s3020 + $0x1] sm:$0xff]
  %v3216 = vld [vmem:[%s3020 + $0x11] sm:$0xff]
  %v3217 = vld [vmem:[%s3020 + $0x21] sm:$0xff]
  %v3218 = vld [vmem:[%s3020 + $0x31] sm:$0xff]
  %v3219 = vld [vmem:[%s3020 + $0x41] sm:$0xff]
  %v3220 = vld [vmem:[%s3020 + $0x51] sm:$0xff]
  %v3221 = vld [vmem:[%s3020 + $0x61] sm:$0xff]
  %v3222 = vld [vmem:[%s3020 + $0x71] sm:$0xff]
  %v3223 = vld [vmem:[%s3020 + $0xa1] sm:$0xff]
  %v3224 = vld [vmem:[%s3020 + $0xb1] sm:$0xff]
  %v3225 = vld [vmem:[%s3020 + $0xc1] sm:$0xff]
  %v3226 = vld [vmem:[%s3020 + $0xd1] sm:$0xff]
  %v3227 = vld [vmem:[%s3020 + $0xe1] sm:$0xff]
  %v3228 = vld [vmem:[%s3020 + $0xf1] sm:$0xff]
  %v3229 = vld [vmem:[%s3020 + $0x101] sm:$0xff]
  %v3230 = vld [vmem:[%s3020 + $0x111] sm:$0xff]
  %s3231 = scalar_lea.vmem %s2, 896
  %v3232 = vld [vmem:[%s3231] sm:$0xff]
  %v3233 = vld [vmem:[%s3231 + $0x8] sm:$0xff]
  %v3234 = vld [vmem:[%s3231 + $0x10] sm:$0xff]
  %v3235 = vld [vmem:[%s3231 + $0x18] sm:$0xff]
  %v3236 = vld [vmem:[%s3231 + $0x20] sm:$0xff]
  %v3237 = vld [vmem:[%s3231 + $0x28] sm:$0xff]
  %v3238 = vld [vmem:[%s3231 + $0x30] sm:$0xff]
  %v3239 = vld [vmem:[%s3231 + $0x38] sm:$0xff]
  %v3240 = vld [vmem:[%s3231 + $0x40] sm:$0xff]
  %v3241 = vld [vmem:[%s3231 + $0x48] sm:$0xff]
  %v3242 = vld [vmem:[%s3231 + $0x50] sm:$0xff]
  %v3243 = vld [vmem:[%s3231 + $0x58] sm:$0xff]
  %v3244 = vld [vmem:[%s3231 + $0x60] sm:$0xff]
  %v3245 = vld [vmem:[%s3231 + $0x68] sm:$0xff]
  %v3246 = vld [vmem:[%s3231 + $0x70] sm:$0xff]
  %v3247 = vld [vmem:[%s3231 + $0x78] sm:$0xff]
  %3248 = vmatprep.subr.mxu0 0.0
  %3249 = vmatpush1.msra.mxu0 %v3247
  %3250 = vmatprep.subr.mxu0 0.0
  %3251 = vmatpush1.msra.mxu0 %v3246
  %3252 = vmatprep.subr.mxu0 0.0
  %3253 = vmatpush1.msra.mxu0 %v3245
  %3254 = vmatprep.subr.mxu0 0.0
  %3255 = vmatpush1.msra.mxu0 %v3244
  %3256 = vmatprep.subr.mxu0 0.0
  %3257 = vmatpush1.msra.mxu0 %v3243
  %3258 = vmatprep.subr.mxu0 0.0
  %3259 = vmatpush1.msra.mxu0 %v3242
  %3260 = vmatprep.subr.mxu0 0.0
  %3261 = vmatpush1.msra.mxu0 %v3241
  %3262 = vmatprep.subr.mxu0 0.0
  %3263 = vmatpush1.msra.mxu0 %v3240
  %3264 = vmatprep.subr.mxu0 0.0
  %3265 = vmatpush1.msra.mxu0 %v3239
  %3266 = vmatprep.subr.mxu0 0.0
  %3267 = vmatpush1.msra.mxu0 %v3238
  %3268 = vmatprep.subr.mxu0 0.0
  %3269 = vmatpush1.msra.mxu0 %v3237
  %3270 = vmatprep.subr.mxu0 0.0
  %3271 = vmatpush1.msra.mxu0 %v3236
  %3272 = vmatprep.subr.mxu0 0.0
  %3273 = vmatpush1.msra.mxu0 %v3235
  %3274 = vmatprep.subr.mxu0 0.0
  %3275 = vmatpush1.msra.mxu0 %v3234
  %3276 = vmatprep.subr.mxu0 0.0
  %3277 = vmatpush1.msra.mxu0 %v3233
  %3278 = vmatprep.subr.mxu0 0.0
  %3279 = vmatpush1.msra.mxu0 %v3232
  %3280 = vmatprep.subr.mxu0 0.0
  %3281 = vmatpush2.msra.mxu0 0.0
  %3282 = vmatprep.subr.mxu0 0.0
  %3283 = vmatpush2.msra.mxu0 0.0
  %3284 = vmatprep.subr.mxu0 0.0
  %3285 = vmatpush2.msra.mxu0 0.0
  %3286 = vmatprep.subr.mxu0 0.0
  %3287 = vmatpush2.msra.mxu0 0.0
  %3288 = vmatprep.subr.mxu0 0.0
  %3289 = vmatpush2.msra.mxu0 0.0
  %3290 = vmatprep.subr.mxu0 0.0
  %3291 = vmatpush2.msra.mxu0 0.0
  %3292 = vmatprep.subr.mxu0 0.0
  %3293 = vmatpush2.msra.mxu0 0.0
  %3294 = vmatprep.subr.mxu0 0.0
  %3295 = vmatpush2.msra.mxu0 0.0
  %3296 = vmatprep.subr.mxu0 0.0
  %3297 = vmatpush2.msra.mxu0 0.0
  %3298 = vmatprep.subr.mxu0 0.0
  %3299 = vmatpush2.msra.mxu0 0.0
  %3300 = vmatprep.subr.mxu0 0.0
  %3301 = vmatpush2.msra.mxu0 0.0
  %3302 = vmatprep.subr.mxu0 0.0
  %3303 = vmatpush2.msra.mxu0 0.0
  %3304 = vmatprep.subr.mxu0 0.0
  %3305 = vmatpush2.msra.mxu0 0.0
  %3306 = vmatprep.subr.mxu0 0.0
  %3307 = vmatpush2.msra.mxu0 0.0
  %3308 = vmatprep.subr.mxu0 0.0
  %3309 = vmatpush2.msra.mxu0 0.0
  %3310 = vmatprep.subr.mxu0 0.0
  %3311 = vmatpush2.msra.mxu0 0.0
  %3312 = vmatprep.mubr.f32.mxu0 0.0
  %3313 = vmatmul.mubr.f32.gmra.mxu0 %v3215
  %v3314 = vpop.f32.mrf.mxu0
  %v3315 = vadd.f32 0.0, %v3314
  %v3316 = vpop.f32.mrf.mxu0
  %3317 = vmatprep.mubr.f32.mxu0 0.0
  %3318 = vmatmul.mubr.f32.gmra.mxu0 %v3216
  %v3319 = vpop.f32.mrf.mxu0
  %v3320 = vadd.f32 0.0, %v3319
  %v3321 = vpop.f32.mrf.mxu0
  %3322 = vmatprep.mubr.f32.mxu0 0.0
  %3323 = vmatmul.mubr.f32.gmra.mxu0 %v3217
  %v3324 = vpop.f32.mrf.mxu0
  %v3325 = vadd.f32 0.0, %v3324
  %v3326 = vpop.f32.mrf.mxu0
  %3327 = vmatprep.mubr.f32.mxu0 0.0
  %3328 = vmatmul.mubr.f32.gmra.mxu0 %v3218
  %v3329 = vpop.f32.mrf.mxu0
  %v3330 = vadd.f32 0.0, %v3329
  %v3331 = vpop.f32.mrf.mxu0
  %3332 = vmatprep.mubr.f32.mxu0 0.0
  %3333 = vmatmul.mubr.f32.gmra.mxu0 %v3219
  %v3334 = vpop.f32.mrf.mxu0
  %v3335 = vadd.f32 0.0, %v3334
  %v3336 = vpop.f32.mrf.mxu0
  %3337 = vmatprep.mubr.f32.mxu0 0.0
  %3338 = vmatmul.mubr.f32.gmra.mxu0 %v3220
  %v3339 = vpop.f32.mrf.mxu0
  %v3340 = vadd.f32 0.0, %v3339
  %v3341 = vpop.f32.mrf.mxu0
  %3342 = vmatprep.mubr.f32.mxu0 0.0
  %3343 = vmatmul.mubr.f32.gmra.mxu0 %v3221
  %v3344 = vpop.f32.mrf.mxu0
  %v3345 = vadd.f32 0.0, %v3344
  %v3346 = vpop.f32.mrf.mxu0
  %3347 = vmatprep.mubr.f32.mxu0 0.0
  %3348 = vmatmul.mubr.f32.gmra.mxu0 %v3222
  %v3349 = vpop.f32.mrf.mxu0
  %v3350 = vadd.f32 0.0, %v3349
  %v3351 = vpop.f32.mrf.mxu0
  %3352 = vmatprep.mubr.f32.mxu0 0.0
  %3353 = vmatmul.mubr.f32.gmra.mxu0 %v3223
  %v3354 = vpop.f32.mrf.mxu0
  %v3355 = vadd.f32 0.0, %v3354
  %v3356 = vpop.f32.mrf.mxu0
  %3357 = vmatprep.mubr.f32.mxu0 0.0
  %3358 = vmatmul.mubr.f32.gmra.mxu0 %v3224
  %v3359 = vpop.f32.mrf.mxu0
  %v3360 = vadd.f32 0.0, %v3359
  %v3361 = vpop.f32.mrf.mxu0
  %3362 = vmatprep.mubr.f32.mxu0 0.0
  %3363 = vmatmul.mubr.f32.gmra.mxu0 %v3225
  %v3364 = vpop.f32.mrf.mxu0
  %v3365 = vadd.f32 0.0, %v3364
  %v3366 = vpop.f32.mrf.mxu0
  %3367 = vmatprep.mubr.f32.mxu0 0.0
  %3368 = vmatmul.mubr.f32.gmra.mxu0 %v3226
  %v3369 = vpop.f32.mrf.mxu0
  %v3370 = vadd.f32 0.0, %v3369
  %v3371 = vpop.f32.mrf.mxu0
  %3372 = vmatprep.mubr.f32.mxu0 0.0
  %3373 = vmatmul.mubr.f32.gmra.mxu0 %v3227
  %v3374 = vpop.f32.mrf.mxu0
  %v3375 = vadd.f32 0.0, %v3374
  %v3376 = vpop.f32.mrf.mxu0
  %3377 = vmatprep.mubr.f32.mxu0 0.0
  %3378 = vmatmul.mubr.f32.gmra.mxu0 %v3228
  %v3379 = vpop.f32.mrf.mxu0
  %v3380 = vadd.f32 0.0, %v3379
  %v3381 = vpop.f32.mrf.mxu0
  %3382 = vmatprep.mubr.f32.mxu0 0.0
  %3383 = vmatmul.mubr.f32.gmra.mxu0 %v3229
  %v3384 = vpop.f32.mrf.mxu0
  %v3385 = vadd.f32 0.0, %v3384
  %v3386 = vpop.f32.mrf.mxu0
  %3387 = vmatprep.mubr.f32.mxu0 0.0
  %3388 = vmatmul.mubr.f32.gmra.mxu0 %v3230
  %v3389 = vpop.f32.mrf.mxu0
  %v3390 = vadd.f32 0.0, %v3389
  %v3391 = vpop.f32.mrf.mxu0
  %3392 = vdwg.mxu0
  %v3393 = vadd.f32 %v3199, %v3315
  %v3394 = vadd.f32 %v3200, %v3320
  %v3395 = vadd.f32 %v3201, %v3325
  %v3396 = vadd.f32 %v3202, %v3330
  %v3397 = vadd.f32 %v3203, %v3335
  %v3398 = vadd.f32 %v3204, %v3340
  %v3399 = vadd.f32 %v3205, %v3345
  %v3400 = vadd.f32 %v3206, %v3350
  %v3401 = vadd.f32 %v3207, %v3355
  %v3402 = vadd.f32 %v3208, %v3360
  %v3403 = vadd.f32 %v3209, %v3365
  %v3404 = vadd.f32 %v3210, %v3370
  %v3405 = vadd.f32 %v3211, %v3375
  %v3406 = vadd.f32 %v3212, %v3380
  %v3407 = vadd.f32 %v3213, %v3385
  %v3408 = vadd.f32 %v3214, %v3390
  %v3409 = vld [vmem:[%s3020 + $0x2] sm:$0xff]
  %v3410 = vld [vmem:[%s3020 + $0x12] sm:$0xff]
  %v3411 = vld [vmem:[%s3020 + $0x22] sm:$0xff]
  %v3412 = vld [vmem:[%s3020 + $0x32] sm:$0xff]
  %v3413 = vld [vmem:[%s3020 + $0x42] sm:$0xff]
  %v3414 = vld [vmem:[%s3020 + $0x52] sm:$0xff]
  %v3415 = vld [vmem:[%s3020 + $0x62] sm:$0xff]
  %v3416 = vld [vmem:[%s3020 + $0x72] sm:$0xff]
  %v3417 = vld [vmem:[%s3020 + $0xa2] sm:$0xff]
  %v3418 = vld [vmem:[%s3020 + $0xb2] sm:$0xff]
  %v3419 = vld [vmem:[%s3020 + $0xc2] sm:$0xff]
  %v3420 = vld [vmem:[%s3020 + $0xd2] sm:$0xff]
  %v3421 = vld [vmem:[%s3020 + $0xe2] sm:$0xff]
  %v3422 = vld [vmem:[%s3020 + $0xf2] sm:$0xff]
  %v3423 = vld [vmem:[%s3020 + $0x102] sm:$0xff]
  %v3424 = vld [vmem:[%s3020 + $0x112] sm:$0xff]
  %s3425 = scalar_lea.vmem %s2, 1024
  %v3426 = vld [vmem:[%s3425] sm:$0xff]
  %v3427 = vld [vmem:[%s3425 + $0x8] sm:$0xff]
  %v3428 = vld [vmem:[%s3425 + $0x10] sm:$0xff]
  %v3429 = vld [vmem:[%s3425 + $0x18] sm:$0xff]
  %v3430 = vld [vmem:[%s3425 + $0x20] sm:$0xff]
  %v3431 = vld [vmem:[%s3425 + $0x28] sm:$0xff]
  %v3432 = vld [vmem:[%s3425 + $0x30] sm:$0xff]
  %v3433 = vld [vmem:[%s3425 + $0x38] sm:$0xff]
  %v3434 = vld [vmem:[%s3425 + $0x40] sm:$0xff]
  %v3435 = vld [vmem:[%s3425 + $0x48] sm:$0xff]
  %v3436 = vld [vmem:[%s3425 + $0x50] sm:$0xff]
  %v3437 = vld [vmem:[%s3425 + $0x58] sm:$0xff]
  %v3438 = vld [vmem:[%s3425 + $0x60] sm:$0xff]
  %v3439 = vld [vmem:[%s3425 + $0x68] sm:$0xff]
  %v3440 = vld [vmem:[%s3425 + $0x70] sm:$0xff]
  %v3441 = vld [vmem:[%s3425 + $0x78] sm:$0xff]
  %3442 = vmatprep.subr.mxu0 0.0
  %3443 = vmatpush1.msra.mxu0 %v3441
  %3444 = vmatprep.subr.mxu0 0.0
  %3445 = vmatpush1.msra.mxu0 %v3440
  %3446 = vmatprep.subr.mxu0 0.0
  %3447 = vmatpush1.msra.mxu0 %v3439
  %3448 = vmatprep.subr.mxu0 0.0
  %3449 = vmatpush1.msra.mxu0 %v3438
  %3450 = vmatprep.subr.mxu0 0.0
  %3451 = vmatpush1.msra.mxu0 %v3437
  %3452 = vmatprep.subr.mxu0 0.0
  %3453 = vmatpush1.msra.mxu0 %v3436
  %3454 = vmatprep.subr.mxu0 0.0
  %3455 = vmatpush1.msra.mxu0 %v3435
  %3456 = vmatprep.subr.mxu0 0.0
  %3457 = vmatpush1.msra.mxu0 %v3434
  %3458 = vmatprep.subr.mxu0 0.0
  %3459 = vmatpush1.msra.mxu0 %v3433
  %3460 = vmatprep.subr.mxu0 0.0
  %3461 = vmatpush1.msra.mxu0 %v3432
  %3462 = vmatprep.subr.mxu0 0.0
  %3463 = vmatpush1.msra.mxu0 %v3431
  %3464 = vmatprep.subr.mxu0 0.0
  %3465 = vmatpush1.msra.mxu0 %v3430
  %3466 = vmatprep.subr.mxu0 0.0
  %3467 = vmatpush1.msra.mxu0 %v3429
  %3468 = vmatprep.subr.mxu0 0.0
  %3469 = vmatpush1.msra.mxu0 %v3428
  %3470 = vmatprep.subr.mxu0 0.0
  %3471 = vmatpush1.msra.mxu0 %v3427
  %3472 = vmatprep.subr.mxu0 0.0
  %3473 = vmatpush1.msra.mxu0 %v3426
  %3474 = vmatprep.subr.mxu0 0.0
  %3475 = vmatpush2.msra.mxu0 0.0
  %3476 = vmatprep.subr.mxu0 0.0
  %3477 = vmatpush2.msra.mxu0 0.0
  %3478 = vmatprep.subr.mxu0 0.0
  %3479 = vmatpush2.msra.mxu0 0.0
  %3480 = vmatprep.subr.mxu0 0.0
  %3481 = vmatpush2.msra.mxu0 0.0
  %3482 = vmatprep.subr.mxu0 0.0
  %3483 = vmatpush2.msra.mxu0 0.0
  %3484 = vmatprep.subr.mxu0 0.0
  %3485 = vmatpush2.msra.mxu0 0.0
  %3486 = vmatprep.subr.mxu0 0.0
  %3487 = vmatpush2.msra.mxu0 0.0
  %3488 = vmatprep.subr.mxu0 0.0
  %3489 = vmatpush2.msra.mxu0 0.0
  %3490 = vmatprep.subr.mxu0 0.0
  %3491 = vmatpush2.msra.mxu0 0.0
  %3492 = vmatprep.subr.mxu0 0.0
  %3493 = vmatpush2.msra.mxu0 0.0
  %3494 = vmatprep.subr.mxu0 0.0
  %3495 = vmatpush2.msra.mxu0 0.0
  %3496 = vmatprep.subr.mxu0 0.0
  %3497 = vmatpush2.msra.mxu0 0.0
  %3498 = vmatprep.subr.mxu0 0.0
  %3499 = vmatpush2.msra.mxu0 0.0
  %3500 = vmatprep.subr.mxu0 0.0
  %3501 = vmatpush2.msra.mxu0 0.0
  %3502 = vmatprep.subr.mxu0 0.0
  %3503 = vmatpush2.msra.mxu0 0.0
  %3504 = vmatprep.subr.mxu0 0.0
  %3505 = vmatpush2.msra.mxu0 0.0
  %3506 = vmatprep.mubr.f32.mxu0 0.0
  %3507 = vmatmul.mubr.f32.gmra.mxu0 %v3409
  %v3508 = vpop.f32.mrf.mxu0
  %v3509 = vadd.f32 0.0, %v3508
  %v3510 = vpop.f32.mrf.mxu0
  %3511 = vmatprep.mubr.f32.mxu0 0.0
  %3512 = vmatmul.mubr.f32.gmra.mxu0 %v3410
  %v3513 = vpop.f32.mrf.mxu0
  %v3514 = vadd.f32 0.0, %v3513
  %v3515 = vpop.f32.mrf.mxu0
  %3516 = vmatprep.mubr.f32.mxu0 0.0
  %3517 = vmatmul.mubr.f32.gmra.mxu0 %v3411
  %v3518 = vpop.f32.mrf.mxu0
  %v3519 = vadd.f32 0.0, %v3518
  %v3520 = vpop.f32.mrf.mxu0
  %3521 = vmatprep.mubr.f32.mxu0 0.0
  %3522 = vmatmul.mubr.f32.gmra.mxu0 %v3412
  %v3523 = vpop.f32.mrf.mxu0
  %v3524 = vadd.f32 0.0, %v3523
  %v3525 = vpop.f32.mrf.mxu0
  %3526 = vmatprep.mubr.f32.mxu0 0.0
  %3527 = vmatmul.mubr.f32.gmra.mxu0 %v3413
  %v3528 = vpop.f32.mrf.mxu0
  %v3529 = vadd.f32 0.0, %v3528
  %v3530 = vpop.f32.mrf.mxu0
  %3531 = vmatprep.mubr.f32.mxu0 0.0
  %3532 = vmatmul.mubr.f32.gmra.mxu0 %v3414
  %v3533 = vpop.f32.mrf.mxu0
  %v3534 = vadd.f32 0.0, %v3533
  %v3535 = vpop.f32.mrf.mxu0
  %3536 = vmatprep.mubr.f32.mxu0 0.0
  %3537 = vmatmul.mubr.f32.gmra.mxu0 %v3415
  %v3538 = vpop.f32.mrf.mxu0
  %v3539 = vadd.f32 0.0, %v3538
  %v3540 = vpop.f32.mrf.mxu0
  %3541 = vmatprep.mubr.f32.mxu0 0.0
  %3542 = vmatmul.mubr.f32.gmra.mxu0 %v3416
  %v3543 = vpop.f32.mrf.mxu0
  %v3544 = vadd.f32 0.0, %v3543
  %v3545 = vpop.f32.mrf.mxu0
  %3546 = vmatprep.mubr.f32.mxu0 0.0
  %3547 = vmatmul.mubr.f32.gmra.mxu0 %v3417
  %v3548 = vpop.f32.mrf.mxu0
  %v3549 = vadd.f32 0.0, %v3548
  %v3550 = vpop.f32.mrf.mxu0
  %3551 = vmatprep.mubr.f32.mxu0 0.0
  %3552 = vmatmul.mubr.f32.gmra.mxu0 %v3418
  %v3553 = vpop.f32.mrf.mxu0
  %v3554 = vadd.f32 0.0, %v3553
  %v3555 = vpop.f32.mrf.mxu0
  %3556 = vmatprep.mubr.f32.mxu0 0.0
  %3557 = vmatmul.mubr.f32.gmra.mxu0 %v3419
  %v3558 = vpop.f32.mrf.mxu0
  %v3559 = vadd.f32 0.0, %v3558
  %v3560 = vpop.f32.mrf.mxu0
  %3561 = vmatprep.mubr.f32.mxu0 0.0
  %3562 = vmatmul.mubr.f32.gmra.mxu0 %v3420
  %v3563 = vpop.f32.mrf.mxu0
  %v3564 = vadd.f32 0.0, %v3563
  %v3565 = vpop.f32.mrf.mxu0
  %3566 = vmatprep.mubr.f32.mxu0 0.0
  %3567 = vmatmul.mubr.f32.gmra.mxu0 %v3421
  %v3568 = vpop.f32.mrf.mxu0
  %v3569 = vadd.f32 0.0, %v3568
  %v3570 = vpop.f32.mrf.mxu0
  %3571 = vmatprep.mubr.f32.mxu0 0.0
  %3572 = vmatmul.mubr.f32.gmra.mxu0 %v3422
  %v3573 = vpop.f32.mrf.mxu0
  %v3574 = vadd.f32 0.0, %v3573
  %v3575 = vpop.f32.mrf.mxu0
  %3576 = vmatprep.mubr.f32.mxu0 0.0
  %3577 = vmatmul.mubr.f32.gmra.mxu0 %v3423
  %v3578 = vpop.f32.mrf.mxu0
  %v3579 = vadd.f32 0.0, %v3578
  %v3580 = vpop.f32.mrf.mxu0
  %3581 = vmatprep.mubr.f32.mxu0 0.0
  %3582 = vmatmul.mubr.f32.gmra.mxu0 %v3424
  %v3583 = vpop.f32.mrf.mxu0
  %v3584 = vadd.f32 0.0, %v3583
  %v3585 = vpop.f32.mrf.mxu0
  %3586 = vdwg.mxu0
  %v3587 = vadd.f32 %v3393, %v3509
  %v3588 = vadd.f32 %v3394, %v3514
  %v3589 = vadd.f32 %v3395, %v3519
  %v3590 = vadd.f32 %v3396, %v3524
  %v3591 = vadd.f32 %v3397, %v3529
  %v3592 = vadd.f32 %v3398, %v3534
  %v3593 = vadd.f32 %v3399, %v3539
  %v3594 = vadd.f32 %v3400, %v3544
  %v3595 = vadd.f32 %v3401, %v3549
  %v3596 = vadd.f32 %v3402, %v3554
  %v3597 = vadd.f32 %v3403, %v3559
  %v3598 = vadd.f32 %v3404, %v3564
  %v3599 = vadd.f32 %v3405, %v3569
  %v3600 = vadd.f32 %v3406, %v3574
  %v3601 = vadd.f32 %v3407, %v3579
  %v3602 = vadd.f32 %v3408, %v3584
  %v3603 = vld [vmem:[%s3 + $0x2] sm:$0x1]
  %v3604 = vlaneseq
  %v3605 = vshrl.u32 %v3604, 7
  %v3606 = vsub.s32 0, %v3605
  %v3607 = vrot.slane %v3603, %v3606
  %v3608 = vadd.f32 %v3587, %v3607
  %v3609 = vadd.f32 %v3588, %v3607
  %v3610 = vadd.f32 %v3589, %v3607
  %v3611 = vadd.f32 %v3590, %v3607
  %v3612 = vadd.f32 %v3591, %v3607
  %v3613 = vadd.f32 %v3592, %v3607
  %v3614 = vadd.f32 %v3593, %v3607
  %v3615 = vadd.f32 %v3594, %v3607
  %v3616 = vadd.f32 %v3595, %v3607
  %v3617 = vadd.f32 %v3596, %v3607
  %v3618 = vadd.f32 %v3597, %v3607
  %v3619 = vadd.f32 %v3598, %v3607
  %v3620 = vadd.f32 %v3599, %v3607
  %v3621 = vadd.f32 %v3600, %v3607
  %v3622 = vadd.f32 %v3601, %v3607
  %v3623 = vadd.f32 %v3602, %v3607
  %v3624 = vmax.f32 %v3608, 0.0
  %v3625 = vmax.f32 %v3609, 0.0
  %v3626 = vmax.f32 %v3610, 0.0
  %v3627 = vmax.f32 %v3611, 0.0
  %v3628 = vmax.f32 %v3612, 0.0
  %v3629 = vmax.f32 %v3613, 0.0
  %v3630 = vmax.f32 %v3614, 0.0
  %v3631 = vmax.f32 %v3615, 0.0
  %v3632 = vmax.f32 %v3616, 0.0
  %v3633 = vmax.f32 %v3617, 0.0
  %v3634 = vmax.f32 %v3618, 0.0
  %v3635 = vmax.f32 %v3619, 0.0
  %v3636 = vmax.f32 %v3620, 0.0
  %v3637 = vmax.f32 %v3621, 0.0
  %v3638 = vmax.f32 %v3622, 0.0
  %v3639 = vmax.f32 %v3623, 0.0
  %3640 = vst [vmem:[%s1872 + $0x1] sm:$0xff] %v3624
  %3641 = vst [vmem:[%s1872 + $0x11] sm:$0xff] %v3625
  %3642 = vst [vmem:[%s1872 + $0x21] sm:$0xff] %v3626
  %3643 = vst [vmem:[%s1872 + $0x31] sm:$0xff] %v3627
  %3644 = vst [vmem:[%s1872 + $0x41] sm:$0xff] %v3628
  %3645 = vst [vmem:[%s1872 + $0x51] sm:$0xff] %v3629
  %3646 = vst [vmem:[%s1872 + $0x61] sm:$0xff] %v3630
  %3647 = vst [vmem:[%s1872 + $0x71] sm:$0xff] %v3631
  %3648 = vst [vmem:[%s1872 + $0xa1] sm:$0xff] %v3632
  %3649 = vst [vmem:[%s1872 + $0xb1] sm:$0xff] %v3633
  %3650 = vst [vmem:[%s1872 + $0xc1] sm:$0xff] %v3634
  %3651 = vst [vmem:[%s1872 + $0xd1] sm:$0xff] %v3635
  %3652 = vst [vmem:[%s1872 + $0xe1] sm:$0xff] %v3636
  %3653 = vst [vmem:[%s1872 + $0xf1] sm:$0xff] %v3637
  %3654 = vst [vmem:[%s1872 + $0x101] sm:$0xff] %v3638
  %3655 = vst [vmem:[%s1872 + $0x111] sm:$0xff] %v3639
  %v3656 = vld [vmem:[#allocation2] sm:$0xff]
  %v3657 = vld [vmem:[#allocation2 + $0x10] sm:$0xff]
  %v3658 = vld [vmem:[#allocation2 + $0x20] sm:$0xff]
  %v3659 = vld [vmem:[#allocation2 + $0x30] sm:$0xff]
  %v3660 = vld [vmem:[#allocation2 + $0x40] sm:$0xff]
  %v3661 = vld [vmem:[#allocation2 + $0x50] sm:$0xff]
  %v3662 = vld [vmem:[#allocation2 + $0x60] sm:$0xff]
  %v3663 = vld [vmem:[#allocation2 + $0x70] sm:$0xff]
  %v3664 = vld [vmem:[#allocation2 + $0xa0] sm:$0xff]
  %v3665 = vld [vmem:[#allocation2 + $0xb0] sm:$0xff]
  %v3666 = vld [vmem:[#allocation2 + $0xc0] sm:$0xff]
  %v3667 = vld [vmem:[#allocation2 + $0xd0] sm:$0xff]
  %v3668 = vld [vmem:[#allocation2 + $0xe0] sm:$0xff]
  %v3669 = vld [vmem:[#allocation2 + $0xf0] sm:$0xff]
  %v3670 = vld [vmem:[#allocation2 + $0x100] sm:$0xff]
  %v3671 = vld [vmem:[#allocation2 + $0x110] sm:$0xff]
  %s3672 = scalar_lea.vmem %s2, 1152
  %v3673 = vld [vmem:[%s3672] sm:$0xff]
  %v3674 = vld [vmem:[%s3672 + $0x8] sm:$0xff]
  %v3675 = vld [vmem:[%s3672 + $0x10] sm:$0xff]
  %v3676 = vld [vmem:[%s3672 + $0x18] sm:$0xff]
  %v3677 = vld [vmem:[%s3672 + $0x20] sm:$0xff]
  %v3678 = vld [vmem:[%s3672 + $0x28] sm:$0xff]
  %v3679 = vld [vmem:[%s3672 + $0x30] sm:$0xff]
  %v3680 = vld [vmem:[%s3672 + $0x38] sm:$0xff]
  %v3681 = vld [vmem:[%s3672 + $0x40] sm:$0xff]
  %v3682 = vld [vmem:[%s3672 + $0x48] sm:$0xff]
  %v3683 = vld [vmem:[%s3672 + $0x50] sm:$0xff]
  %v3684 = vld [vmem:[%s3672 + $0x58] sm:$0xff]
  %v3685 = vld [vmem:[%s3672 + $0x60] sm:$0xff]
  %v3686 = vld [vmem:[%s3672 + $0x68] sm:$0xff]
  %v3687 = vld [vmem:[%s3672 + $0x70] sm:$0xff]
  %v3688 = vld [vmem:[%s3672 + $0x78] sm:$0xff]
  %v3689 = vld [vmem:[#allocation2 + $0x1] sm:$0xff]
  %v3690 = vld [vmem:[#allocation2 + $0x11] sm:$0xff]
  %v3691 = vld [vmem:[#allocation2 + $0x21] sm:$0xff]
  %v3692 = vld [vmem:[#allocation2 + $0x31] sm:$0xff]
  %v3693 = vld [vmem:[#allocation2 + $0x41] sm:$0xff]
  %v3694 = vld [vmem:[#allocation2 + $0x51] sm:$0xff]
  %v3695 = vld [vmem:[#allocation2 + $0x61] sm:$0xff]
  %v3696 = vld [vmem:[#allocation2 + $0x71] sm:$0xff]
  %v3697 = vld [vmem:[#allocation2 + $0xa1] sm:$0xff]
  %v3698 = vld [vmem:[#allocation2 + $0xb1] sm:$0xff]
  %v3699 = vld [vmem:[#allocation2 + $0xc1] sm:$0xff]
  %v3700 = vld [vmem:[#allocation2 + $0xd1] sm:$0xff]
  %v3701 = vld [vmem:[#allocation2 + $0xe1] sm:$0xff]
  %v3702 = vld [vmem:[#allocation2 + $0xf1] sm:$0xff]
  %v3703 = vld [vmem:[#allocation2 + $0x101] sm:$0xff]
  %v3704 = vld [vmem:[#allocation2 + $0x111] sm:$0xff]
  %s3705 = scalar_lea.vmem %s2, 1280
  %v3706 = vld [vmem:[%s3705] sm:$0xff]
  %v3707 = vld [vmem:[%s3705 + $0x8] sm:$0xff]
  %v3708 = vld [vmem:[%s3705 + $0x10] sm:$0xff]
  %v3709 = vld [vmem:[%s3705 + $0x18] sm:$0xff]
  %v3710 = vld [vmem:[%s3705 + $0x20] sm:$0xff]
  %v3711 = vld [vmem:[%s3705 + $0x28] sm:$0xff]
  %v3712 = vld [vmem:[%s3705 + $0x30] sm:$0xff]
  %v3713 = vld [vmem:[%s3705 + $0x38] sm:$0xff]
  %v3714 = vld [vmem:[%s3705 + $0x40] sm:$0xff]
  %v3715 = vld [vmem:[%s3705 + $0x48] sm:$0xff]
  %v3716 = vld [vmem:[%s3705 + $0x50] sm:$0xff]
  %v3717 = vld [vmem:[%s3705 + $0x58] sm:$0xff]
  %v3718 = vld [vmem:[%s3705 + $0x60] sm:$0xff]
  %v3719 = vld [vmem:[%s3705 + $0x68] sm:$0xff]
  %v3720 = vld [vmem:[%s3705 + $0x70] sm:$0xff]
  %v3721 = vld [vmem:[%s3705 + $0x78] sm:$0xff]
  %3722 = vmatprep.subr.mxu0 0.0
  %3723 = vmatpush1.msra.mxu0 %v3721
  %3724 = vmatprep.subr.mxu0 0.0
  %3725 = vmatpush1.msra.mxu0 %v3720
  %3726 = vmatprep.subr.mxu0 0.0
  %3727 = vmatpush1.msra.mxu0 %v3719
  %3728 = vmatprep.subr.mxu0 0.0
  %3729 = vmatpush1.msra.mxu0 %v3718
  %3730 = vmatprep.subr.mxu0 0.0
  %3731 = vmatpush1.msra.mxu0 %v3717
  %3732 = vmatprep.subr.mxu0 0.0
  %3733 = vmatpush1.msra.mxu0 %v3716
  %3734 = vmatprep.subr.mxu0 0.0
  %3735 = vmatpush1.msra.mxu0 %v3715
  %3736 = vmatprep.subr.mxu0 0.0
  %3737 = vmatpush1.msra.mxu0 %v3714
  %3738 = vmatprep.subr.mxu0 0.0
  %3739 = vmatpush1.msra.mxu0 %v3713
  %3740 = vmatprep.subr.mxu0 0.0
  %3741 = vmatpush1.msra.mxu0 %v3712
  %3742 = vmatprep.subr.mxu0 0.0
  %3743 = vmatpush1.msra.mxu0 %v3711
  %3744 = vmatprep.subr.mxu0 0.0
  %3745 = vmatpush1.msra.mxu0 %v3710
  %3746 = vmatprep.subr.mxu0 0.0
  %3747 = vmatpush1.msra.mxu0 %v3709
  %3748 = vmatprep.subr.mxu0 0.0
  %3749 = vmatpush1.msra.mxu0 %v3708
  %3750 = vmatprep.subr.mxu0 0.0
  %3751 = vmatpush1.msra.mxu0 %v3707
  %3752 = vmatprep.subr.mxu0 0.0
  %3753 = vmatpush1.msra.mxu0 %v3706
  %3754 = vmatprep.subr.mxu0 0.0
  %3755 = vmatpush2.msra.mxu0 0.0
  %3756 = vmatprep.subr.mxu0 0.0
  %3757 = vmatpush2.msra.mxu0 0.0
  %3758 = vmatprep.subr.mxu0 0.0
  %3759 = vmatpush2.msra.mxu0 0.0
  %3760 = vmatprep.subr.mxu0 0.0
  %3761 = vmatpush2.msra.mxu0 0.0
  %3762 = vmatprep.subr.mxu0 0.0
  %3763 = vmatpush2.msra.mxu0 0.0
  %3764 = vmatprep.subr.mxu0 0.0
  %3765 = vmatpush2.msra.mxu0 0.0
  %3766 = vmatprep.subr.mxu0 0.0
  %3767 = vmatpush2.msra.mxu0 0.0
  %3768 = vmatprep.subr.mxu0 0.0
  %3769 = vmatpush2.msra.mxu0 0.0
  %3770 = vmatprep.subr.mxu0 0.0
  %3771 = vmatpush2.msra.mxu0 0.0
  %3772 = vmatprep.subr.mxu0 0.0
  %3773 = vmatpush2.msra.mxu0 0.0
  %3774 = vmatprep.subr.mxu0 0.0
  %3775 = vmatpush2.msra.mxu0 0.0
  %3776 = vmatprep.subr.mxu0 0.0
  %3777 = vmatpush2.msra.mxu0 0.0
  %3778 = vmatprep.subr.mxu0 0.0
  %3779 = vmatpush2.msra.mxu0 0.0
  %3780 = vmatprep.subr.mxu0 0.0
  %3781 = vmatpush2.msra.mxu0 0.0
  %3782 = vmatprep.subr.mxu0 0.0
  %3783 = vmatpush2.msra.mxu0 0.0
  %3784 = vmatprep.subr.mxu0 0.0
  %3785 = vmatpush2.msra.mxu0 0.0
  %3786 = vmatprep.mubr.f32.mxu0 0.0
  %3787 = vmatmul.mubr.f32.gmra.mxu0 %v3689
  %v3788 = vpop.f32.mrf.mxu0
  %v3789 = vadd.f32 0.0, %v3788
  %v3790 = vpop.f32.mrf.mxu0
  %3791 = vmatprep.mubr.f32.mxu0 0.0
  %3792 = vmatmul.mubr.f32.gmra.mxu0 %v3690
  %v3793 = vpop.f32.mrf.mxu0
  %v3794 = vadd.f32 0.0, %v3793
  %v3795 = vpop.f32.mrf.mxu0
  %3796 = vmatprep.mubr.f32.mxu0 0.0
  %3797 = vmatmul.mubr.f32.gmra.mxu0 %v3691
  %v3798 = vpop.f32.mrf.mxu0
  %v3799 = vadd.f32 0.0, %v3798
  %v3800 = vpop.f32.mrf.mxu0
  %3801 = vmatprep.mubr.f32.mxu0 0.0
  %3802 = vmatmul.mubr.f32.gmra.mxu0 %v3692
  %v3803 = vpop.f32.mrf.mxu0
  %v3804 = vadd.f32 0.0, %v3803
  %v3805 = vpop.f32.mrf.mxu0
  %3806 = vmatprep.mubr.f32.mxu0 0.0
  %3807 = vmatmul.mubr.f32.gmra.mxu0 %v3693
  %v3808 = vpop.f32.mrf.mxu0
  %v3809 = vadd.f32 0.0, %v3808
  %v3810 = vpop.f32.mrf.mxu0
  %3811 = vmatprep.mubr.f32.mxu0 0.0
  %3812 = vmatmul.mubr.f32.gmra.mxu0 %v3694
  %v3813 = vpop.f32.mrf.mxu0
  %v3814 = vadd.f32 0.0, %v3813
  %v3815 = vpop.f32.mrf.mxu0
  %3816 = vmatprep.mubr.f32.mxu0 0.0
  %3817 = vmatmul.mubr.f32.gmra.mxu0 %v3695
  %v3818 = vpop.f32.mrf.mxu0
  %v3819 = vadd.f32 0.0, %v3818
  %v3820 = vpop.f32.mrf.mxu0
  %3821 = vmatprep.mubr.f32.mxu0 0.0
  %3822 = vmatmul.mubr.f32.gmra.mxu0 %v3696
  %v3823 = vpop.f32.mrf.mxu0
  %v3824 = vadd.f32 0.0, %v3823
  %v3825 = vpop.f32.mrf.mxu0
  %3826 = vmatprep.mubr.f32.mxu0 0.0
  %3827 = vmatmul.mubr.f32.gmra.mxu0 %v3697
  %v3828 = vpop.f32.mrf.mxu0
  %v3829 = vadd.f32 0.0, %v3828
  %v3830 = vpop.f32.mrf.mxu0
  %3831 = vmatprep.mubr.f32.mxu0 0.0
  %3832 = vmatmul.mubr.f32.gmra.mxu0 %v3698
  %v3833 = vpop.f32.mrf.mxu0
  %v3834 = vadd.f32 0.0, %v3833
  %v3835 = vpop.f32.mrf.mxu0
  %3836 = vmatprep.mubr.f32.mxu0 0.0
  %3837 = vmatmul.mubr.f32.gmra.mxu0 %v3699
  %v3838 = vpop.f32.mrf.mxu0
  %v3839 = vadd.f32 0.0, %v3838
  %v3840 = vpop.f32.mrf.mxu0
  %3841 = vmatprep.mubr.f32.mxu0 0.0
  %3842 = vmatmul.mubr.f32.gmra.mxu0 %v3700
  %v3843 = vpop.f32.mrf.mxu0
  %v3844 = vadd.f32 0.0, %v3843
  %v3845 = vpop.f32.mrf.mxu0
  %3846 = vmatprep.mubr.f32.mxu0 0.0
  %3847 = vmatmul.mubr.f32.gmra.mxu0 %v3701
  %v3848 = vpop.f32.mrf.mxu0
  %v3849 = vadd.f32 0.0, %v3848
  %v3850 = vpop.f32.mrf.mxu0
  %3851 = vmatprep.mubr.f32.mxu0 0.0
  %3852 = vmatmul.mubr.f32.gmra.mxu0 %v3702
  %v3853 = vpop.f32.mrf.mxu0
  %v3854 = vadd.f32 0.0, %v3853
  %v3855 = vpop.f32.mrf.mxu0
  %3856 = vmatprep.mubr.f32.mxu0 0.0
  %3857 = vmatmul.mubr.f32.gmra.mxu0 %v3703
  %v3858 = vpop.f32.mrf.mxu0
  %v3859 = vadd.f32 0.0, %v3858
  %v3860 = vpop.f32.mrf.mxu0
  %3861 = vmatprep.mubr.f32.mxu0 0.0
  %3862 = vmatmul.mubr.f32.gmra.mxu0 %v3704
  %v3863 = vpop.f32.mrf.mxu0
  %v3864 = vadd.f32 0.0, %v3863
  %v3865 = vpop.f32.mrf.mxu0
  %3866 = vdwg.mxu0
  %3867 = vmatprep.subr.mxu0 0.0
  %3868 = vmatpush1.msra.mxu0 %v3688
  %3869 = vmatprep.subr.mxu0 0.0
  %3870 = vmatpush1.msra.mxu0 %v3687
  %3871 = vmatprep.subr.mxu0 0.0
  %3872 = vmatpush1.msra.mxu0 %v3686
  %3873 = vmatprep.subr.mxu0 0.0
  %3874 = vmatpush1.msra.mxu0 %v3685
  %3875 = vmatprep.subr.mxu0 0.0
  %3876 = vmatpush1.msra.mxu0 %v3684
  %3877 = vmatprep.subr.mxu0 0.0
  %3878 = vmatpush1.msra.mxu0 %v3683
  %3879 = vmatprep.subr.mxu0 0.0
  %3880 = vmatpush1.msra.mxu0 %v3682
  %3881 = vmatprep.subr.mxu0 0.0
  %3882 = vmatpush1.msra.mxu0 %v3681
  %3883 = vmatprep.subr.mxu0 0.0
  %3884 = vmatpush1.msra.mxu0 %v3680
  %3885 = vmatprep.subr.mxu0 0.0
  %3886 = vmatpush1.msra.mxu0 %v3679
  %3887 = vmatprep.subr.mxu0 0.0
  %3888 = vmatpush1.msra.mxu0 %v3678
  %3889 = vmatprep.subr.mxu0 0.0
  %3890 = vmatpush1.msra.mxu0 %v3677
  %3891 = vmatprep.subr.mxu0 0.0
  %3892 = vmatpush1.msra.mxu0 %v3676
  %3893 = vmatprep.subr.mxu0 0.0
  %3894 = vmatpush1.msra.mxu0 %v3675
  %3895 = vmatprep.subr.mxu0 0.0
  %3896 = vmatpush1.msra.mxu0 %v3674
  %3897 = vmatprep.subr.mxu0 0.0
  %3898 = vmatpush1.msra.mxu0 %v3673
  %3899 = vmatprep.subr.mxu0 0.0
  %3900 = vmatpush2.msra.mxu0 0.0
  %3901 = vmatprep.subr.mxu0 0.0
  %3902 = vmatpush2.msra.mxu0 0.0
  %3903 = vmatprep.subr.mxu0 0.0
  %3904 = vmatpush2.msra.mxu0 0.0
  %3905 = vmatprep.subr.mxu0 0.0
  %3906 = vmatpush2.msra.mxu0 0.0
  %3907 = vmatprep.subr.mxu0 0.0
  %3908 = vmatpush2.msra.mxu0 0.0
  %3909 = vmatprep.subr.mxu0 0.0
  %3910 = vmatpush2.msra.mxu0 0.0
  %3911 = vmatprep.subr.mxu0 0.0
  %3912 = vmatpush2.msra.mxu0 0.0
  %3913 = vmatprep.subr.mxu0 0.0
  %3914 = vmatpush2.msra.mxu0 0.0
  %3915 = vmatprep.subr.mxu0 0.0
  %3916 = vmatpush2.msra.mxu0 0.0
  %3917 = vmatprep.subr.mxu0 0.0
  %3918 = vmatpush2.msra.mxu0 0.0
  %3919 = vmatprep.subr.mxu0 0.0
  %3920 = vmatpush2.msra.mxu0 0.0
  %3921 = vmatprep.subr.mxu0 0.0
  %3922 = vmatpush2.msra.mxu0 0.0
  %3923 = vmatprep.subr.mxu0 0.0
  %3924 = vmatpush2.msra.mxu0 0.0
  %3925 = vmatprep.subr.mxu0 0.0
  %3926 = vmatpush2.msra.mxu0 0.0
  %3927 = vmatprep.subr.mxu0 0.0
  %3928 = vmatpush2.msra.mxu0 0.0
  %3929 = vmatprep.subr.mxu0 0.0
  %3930 = vmatpush2.msra.mxu0 0.0
  %3931 = vmatprep.mubr.f32.mxu0 0.0
  %3932 = vmatmul.mubr.f32.gmra.mxu0 %v3656
  %v3933 = vpop.f32.mrf.mxu0
  %v3934 = vadd.f32 %v3789, %v3933
  %v3935 = vpop.f32.mrf.mxu0
  %3936 = vmatprep.mubr.f32.mxu0 0.0
  %3937 = vmatmul.mubr.f32.gmra.mxu0 %v3657
  %v3938 = vpop.f32.mrf.mxu0
  %v3939 = vadd.f32 %v3794, %v3938
  %v3940 = vpop.f32.mrf.mxu0
  %3941 = vmatprep.mubr.f32.mxu0 0.0
  %3942 = vmatmul.mubr.f32.gmra.mxu0 %v3658
  %v3943 = vpop.f32.mrf.mxu0
  %v3944 = vadd.f32 %v3799, %v3943
  %v3945 = vpop.f32.mrf.mxu0
  %3946 = vmatprep.mubr.f32.mxu0 0.0
  %3947 = vmatmul.mubr.f32.gmra.mxu0 %v3659
  %v3948 = vpop.f32.mrf.mxu0
  %v3949 = vadd.f32 %v3804, %v3948
  %v3950 = vpop.f32.mrf.mxu0
  %3951 = vmatprep.mubr.f32.mxu0 0.0
  %3952 = vmatmul.mubr.f32.gmra.mxu0 %v3660
  %v3953 = vpop.f32.mrf.mxu0
  %v3954 = vadd.f32 %v3809, %v3953
  %v3955 = vpop.f32.mrf.mxu0
  %3956 = vmatprep.mubr.f32.mxu0 0.0
  %3957 = vmatmul.mubr.f32.gmra.mxu0 %v3661
  %v3958 = vpop.f32.mrf.mxu0
  %v3959 = vadd.f32 %v3814, %v3958
  %v3960 = vpop.f32.mrf.mxu0
  %3961 = vmatprep.mubr.f32.mxu0 0.0
  %3962 = vmatmul.mubr.f32.gmra.mxu0 %v3662
  %v3963 = vpop.f32.mrf.mxu0
  %v3964 = vadd.f32 %v3819, %v3963
  %v3965 = vpop.f32.mrf.mxu0
  %3966 = vmatprep.mubr.f32.mxu0 0.0
  %3967 = vmatmul.mubr.f32.gmra.mxu0 %v3663
  %v3968 = vpop.f32.mrf.mxu0
  %v3969 = vadd.f32 %v3824, %v3968
  %v3970 = vpop.f32.mrf.mxu0
  %3971 = vmatprep.mubr.f32.mxu0 0.0
  %3972 = vmatmul.mubr.f32.gmra.mxu0 %v3664
  %v3973 = vpop.f32.mrf.mxu0
  %v3974 = vadd.f32 %v3829, %v3973
  %v3975 = vpop.f32.mrf.mxu0
  %3976 = vmatprep.mubr.f32.mxu0 0.0
  %3977 = vmatmul.mubr.f32.gmra.mxu0 %v3665
  %v3978 = vpop.f32.mrf.mxu0
  %v3979 = vadd.f32 %v3834, %v3978
  %v3980 = vpop.f32.mrf.mxu0
  %3981 = vmatprep.mubr.f32.mxu0 0.0
  %3982 = vmatmul.mubr.f32.gmra.mxu0 %v3666
  %v3983 = vpop.f32.mrf.mxu0
  %v3984 = vadd.f32 %v3839, %v3983
  %v3985 = vpop.f32.mrf.mxu0
  %3986 = vmatprep.mubr.f32.mxu0 0.0
  %3987 = vmatmul.mubr.f32.gmra.mxu0 %v3667
  %v3988 = vpop.f32.mrf.mxu0
  %v3989 = vadd.f32 %v3844, %v3988
  %v3990 = vpop.f32.mrf.mxu0
  %3991 = vmatprep.mubr.f32.mxu0 0.0
  %3992 = vmatmul.mubr.f32.gmra.mxu0 %v3668
  %v3993 = vpop.f32.mrf.mxu0
  %v3994 = vadd.f32 %v3849, %v3993
  %v3995 = vpop.f32.mrf.mxu0
  %3996 = vmatprep.mubr.f32.mxu0 0.0
  %3997 = vmatmul.mubr.f32.gmra.mxu0 %v3669
  %v3998 = vpop.f32.mrf.mxu0
  %v3999 = vadd.f32 %v3854, %v3998
  %v4000 = vpop.f32.mrf.mxu0
  %4001 = vmatprep.mubr.f32.mxu0 0.0
  %4002 = vmatmul.mubr.f32.gmra.mxu0 %v3670
  %v4003 = vpop.f32.mrf.mxu0
  %v4004 = vadd.f32 %v3859, %v4003
  %v4005 = vpop.f32.mrf.mxu0
  %4006 = vmatprep.mubr.f32.mxu0 0.0
  %4007 = vmatmul.mubr.f32.gmra.mxu0 %v3671
  %v4008 = vpop.f32.mrf.mxu0
  %v4009 = vadd.f32 %v3864, %v4008
  %v4010 = vpop.f32.mrf.mxu0
  %4011 = vdwg.mxu0
  %v4012 = vld [vmem:[#allocation2 + $0x2] sm:$0xff]
  %v4013 = vld [vmem:[#allocation2 + $0x12] sm:$0xff]
  %v4014 = vld [vmem:[#allocation2 + $0x22] sm:$0xff]
  %v4015 = vld [vmem:[#allocation2 + $0x32] sm:$0xff]
  %v4016 = vld [vmem:[#allocation2 + $0x42] sm:$0xff]
  %v4017 = vld [vmem:[#allocation2 + $0x52] sm:$0xff]
  %v4018 = vld [vmem:[#allocation2 + $0x62] sm:$0xff]
  %v4019 = vld [vmem:[#allocation2 + $0x72] sm:$0xff]
  %v4020 = vld [vmem:[#allocation2 + $0xa2] sm:$0xff]
  %v4021 = vld [vmem:[#allocation2 + $0xb2] sm:$0xff]
  %v4022 = vld [vmem:[#allocation2 + $0xc2] sm:$0xff]
  %v4023 = vld [vmem:[#allocation2 + $0xd2] sm:$0xff]
  %v4024 = vld [vmem:[#allocation2 + $0xe2] sm:$0xff]
  %v4025 = vld [vmem:[#allocation2 + $0xf2] sm:$0xff]
  %v4026 = vld [vmem:[#allocation2 + $0x102] sm:$0xff]
  %v4027 = vld [vmem:[#allocation2 + $0x112] sm:$0xff]
  %s4028 = scalar_lea.vmem %s2, 1408
  %v4029 = vld [vmem:[%s4028] sm:$0xff]
  %v4030 = vld [vmem:[%s4028 + $0x8] sm:$0xff]
  %v4031 = vld [vmem:[%s4028 + $0x10] sm:$0xff]
  %v4032 = vld [vmem:[%s4028 + $0x18] sm:$0xff]
  %v4033 = vld [vmem:[%s4028 + $0x20] sm:$0xff]
  %v4034 = vld [vmem:[%s4028 + $0x28] sm:$0xff]
  %v4035 = vld [vmem:[%s4028 + $0x30] sm:$0xff]
  %v4036 = vld [vmem:[%s4028 + $0x38] sm:$0xff]
  %v4037 = vld [vmem:[%s4028 + $0x40] sm:$0xff]
  %v4038 = vld [vmem:[%s4028 + $0x48] sm:$0xff]
  %v4039 = vld [vmem:[%s4028 + $0x50] sm:$0xff]
  %v4040 = vld [vmem:[%s4028 + $0x58] sm:$0xff]
  %v4041 = vld [vmem:[%s4028 + $0x60] sm:$0xff]
  %v4042 = vld [vmem:[%s4028 + $0x68] sm:$0xff]
  %v4043 = vld [vmem:[%s4028 + $0x70] sm:$0xff]
  %v4044 = vld [vmem:[%s4028 + $0x78] sm:$0xff]
  %4045 = vmatprep.subr.mxu0 0.0
  %4046 = vmatpush1.msra.mxu0 %v4044
  %4047 = vmatprep.subr.mxu0 0.0
  %4048 = vmatpush1.msra.mxu0 %v4043
  %4049 = vmatprep.subr.mxu0 0.0
  %4050 = vmatpush1.msra.mxu0 %v4042
  %4051 = vmatprep.subr.mxu0 0.0
  %4052 = vmatpush1.msra.mxu0 %v4041
  %4053 = vmatprep.subr.mxu0 0.0
  %4054 = vmatpush1.msra.mxu0 %v4040
  %4055 = vmatprep.subr.mxu0 0.0
  %4056 = vmatpush1.msra.mxu0 %v4039
  %4057 = vmatprep.subr.mxu0 0.0
  %4058 = vmatpush1.msra.mxu0 %v4038
  %4059 = vmatprep.subr.mxu0 0.0
  %4060 = vmatpush1.msra.mxu0 %v4037
  %4061 = vmatprep.subr.mxu0 0.0
  %4062 = vmatpush1.msra.mxu0 %v4036
  %4063 = vmatprep.subr.mxu0 0.0
  %4064 = vmatpush1.msra.mxu0 %v4035
  %4065 = vmatprep.subr.mxu0 0.0
  %4066 = vmatpush1.msra.mxu0 %v4034
  %4067 = vmatprep.subr.mxu0 0.0
  %4068 = vmatpush1.msra.mxu0 %v4033
  %4069 = vmatprep.subr.mxu0 0.0
  %4070 = vmatpush1.msra.mxu0 %v4032
  %4071 = vmatprep.subr.mxu0 0.0
  %4072 = vmatpush1.msra.mxu0 %v4031
  %4073 = vmatprep.subr.mxu0 0.0
  %4074 = vmatpush1.msra.mxu0 %v4030
  %4075 = vmatprep.subr.mxu0 0.0
  %4076 = vmatpush1.msra.mxu0 %v4029
  %4077 = vmatprep.subr.mxu0 0.0
  %4078 = vmatpush2.msra.mxu0 0.0
  %4079 = vmatprep.subr.mxu0 0.0
  %4080 = vmatpush2.msra.mxu0 0.0
  %4081 = vmatprep.subr.mxu0 0.0
  %4082 = vmatpush2.msra.mxu0 0.0
  %4083 = vmatprep.subr.mxu0 0.0
  %4084 = vmatpush2.msra.mxu0 0.0
  %4085 = vmatprep.subr.mxu0 0.0
  %4086 = vmatpush2.msra.mxu0 0.0
  %4087 = vmatprep.subr.mxu0 0.0
  %4088 = vmatpush2.msra.mxu0 0.0
  %4089 = vmatprep.subr.mxu0 0.0
  %4090 = vmatpush2.msra.mxu0 0.0
  %4091 = vmatprep.subr.mxu0 0.0
  %4092 = vmatpush2.msra.mxu0 0.0
  %4093 = vmatprep.subr.mxu0 0.0
  %4094 = vmatpush2.msra.mxu0 0.0
  %4095 = vmatprep.subr.mxu0 0.0
  %4096 = vmatpush2.msra.mxu0 0.0
  %4097 = vmatprep.subr.mxu0 0.0
  %4098 = vmatpush2.msra.mxu0 0.0
  %4099 = vmatprep.subr.mxu0 0.0
  %4100 = vmatpush2.msra.mxu0 0.0
  %4101 = vmatprep.subr.mxu0 0.0
  %4102 = vmatpush2.msra.mxu0 0.0
  %4103 = vmatprep.subr.mxu0 0.0
  %4104 = vmatpush2.msra.mxu0 0.0
  %4105 = vmatprep.subr.mxu0 0.0
  %4106 = vmatpush2.msra.mxu0 0.0
  %4107 = vmatprep.subr.mxu0 0.0
  %4108 = vmatpush2.msra.mxu0 0.0
  %4109 = vmatprep.mubr.f32.mxu0 0.0
  %4110 = vmatmul.mubr.f32.gmra.mxu0 %v4012
  %v4111 = vpop.f32.mrf.mxu0
  %v4112 = vadd.f32 0.0, %v4111
  %v4113 = vpop.f32.mrf.mxu0
  %4114 = vmatprep.mubr.f32.mxu0 0.0
  %4115 = vmatmul.mubr.f32.gmra.mxu0 %v4013
  %v4116 = vpop.f32.mrf.mxu0
  %v4117 = vadd.f32 0.0, %v4116
  %v4118 = vpop.f32.mrf.mxu0
  %4119 = vmatprep.mubr.f32.mxu0 0.0
  %4120 = vmatmul.mubr.f32.gmra.mxu0 %v4014
  %v4121 = vpop.f32.mrf.mxu0
  %v4122 = vadd.f32 0.0, %v4121
  %v4123 = vpop.f32.mrf.mxu0
  %4124 = vmatprep.mubr.f32.mxu0 0.0
  %4125 = vmatmul.mubr.f32.gmra.mxu0 %v4015
  %v4126 = vpop.f32.mrf.mxu0
  %v4127 = vadd.f32 0.0, %v4126
  %v4128 = vpop.f32.mrf.mxu0
  %4129 = vmatprep.mubr.f32.mxu0 0.0
  %4130 = vmatmul.mubr.f32.gmra.mxu0 %v4016
  %v4131 = vpop.f32.mrf.mxu0
  %v4132 = vadd.f32 0.0, %v4131
  %v4133 = vpop.f32.mrf.mxu0
  %4134 = vmatprep.mubr.f32.mxu0 0.0
  %4135 = vmatmul.mubr.f32.gmra.mxu0 %v4017
  %v4136 = vpop.f32.mrf.mxu0
  %v4137 = vadd.f32 0.0, %v4136
  %v4138 = vpop.f32.mrf.mxu0
  %4139 = vmatprep.mubr.f32.mxu0 0.0
  %4140 = vmatmul.mubr.f32.gmra.mxu0 %v4018
  %v4141 = vpop.f32.mrf.mxu0
  %v4142 = vadd.f32 0.0, %v4141
  %v4143 = vpop.f32.mrf.mxu0
  %4144 = vmatprep.mubr.f32.mxu0 0.0
  %4145 = vmatmul.mubr.f32.gmra.mxu0 %v4019
  %v4146 = vpop.f32.mrf.mxu0
  %v4147 = vadd.f32 0.0, %v4146
  %v4148 = vpop.f32.mrf.mxu0
  %4149 = vmatprep.mubr.f32.mxu0 0.0
  %4150 = vmatmul.mubr.f32.gmra.mxu0 %v4020
  %v4151 = vpop.f32.mrf.mxu0
  %v4152 = vadd.f32 0.0, %v4151
  %v4153 = vpop.f32.mrf.mxu0
  %4154 = vmatprep.mubr.f32.mxu0 0.0
  %4155 = vmatmul.mubr.f32.gmra.mxu0 %v4021
  %v4156 = vpop.f32.mrf.mxu0
  %v4157 = vadd.f32 0.0, %v4156
  %v4158 = vpop.f32.mrf.mxu0
  %4159 = vmatprep.mubr.f32.mxu0 0.0
  %4160 = vmatmul.mubr.f32.gmra.mxu0 %v4022
  %v4161 = vpop.f32.mrf.mxu0
  %v4162 = vadd.f32 0.0, %v4161
  %v4163 = vpop.f32.mrf.mxu0
  %4164 = vmatprep.mubr.f32.mxu0 0.0
  %4165 = vmatmul.mubr.f32.gmra.mxu0 %v4023
  %v4166 = vpop.f32.mrf.mxu0
  %v4167 = vadd.f32 0.0, %v4166
  %v4168 = vpop.f32.mrf.mxu0
  %4169 = vmatprep.mubr.f32.mxu0 0.0
  %4170 = vmatmul.mubr.f32.gmra.mxu0 %v4024
  %v4171 = vpop.f32.mrf.mxu0
  %v4172 = vadd.f32 0.0, %v4171
  %v4173 = vpop.f32.mrf.mxu0
  %4174 = vmatprep.mubr.f32.mxu0 0.0
  %4175 = vmatmul.mubr.f32.gmra.mxu0 %v4025
  %v4176 = vpop.f32.mrf.mxu0
  %v4177 = vadd.f32 0.0, %v4176
  %v4178 = vpop.f32.mrf.mxu0
  %4179 = vmatprep.mubr.f32.mxu0 0.0
  %4180 = vmatmul.mubr.f32.gmra.mxu0 %v4026
  %v4181 = vpop.f32.mrf.mxu0
  %v4182 = vadd.f32 0.0, %v4181
  %v4183 = vpop.f32.mrf.mxu0
  %4184 = vmatprep.mubr.f32.mxu0 0.0
  %4185 = vmatmul.mubr.f32.gmra.mxu0 %v4027
  %v4186 = vpop.f32.mrf.mxu0
  %v4187 = vadd.f32 0.0, %v4186
  %v4188 = vpop.f32.mrf.mxu0
  %4189 = vdwg.mxu0
  %v4190 = vadd.f32 %v3934, %v4112
  %v4191 = vadd.f32 %v3939, %v4117
  %v4192 = vadd.f32 %v3944, %v4122
  %v4193 = vadd.f32 %v3949, %v4127
  %v4194 = vadd.f32 %v3954, %v4132
  %v4195 = vadd.f32 %v3959, %v4137
  %v4196 = vadd.f32 %v3964, %v4142
  %v4197 = vadd.f32 %v3969, %v4147
  %v4198 = vadd.f32 %v3974, %v4152
  %v4199 = vadd.f32 %v3979, %v4157
  %v4200 = vadd.f32 %v3984, %v4162
  %v4201 = vadd.f32 %v3989, %v4167
  %v4202 = vadd.f32 %v3994, %v4172
  %v4203 = vadd.f32 %v3999, %v4177
  %v4204 = vadd.f32 %v4004, %v4182
  %v4205 = vadd.f32 %v4009, %v4187
  %v4206 = vld [vmem:[%s1872] sm:$0xff]
  %v4207 = vld [vmem:[%s1872 + $0x10] sm:$0xff]
  %v4208 = vld [vmem:[%s1872 + $0x20] sm:$0xff]
  %v4209 = vld [vmem:[%s1872 + $0x30] sm:$0xff]
  %v4210 = vld [vmem:[%s1872 + $0x40] sm:$0xff]
  %v4211 = vld [vmem:[%s1872 + $0x50] sm:$0xff]
  %v4212 = vld [vmem:[%s1872 + $0x60] sm:$0xff]
  %v4213 = vld [vmem:[%s1872 + $0x70] sm:$0xff]
  %v4214 = vld [vmem:[%s1872 + $0xa0] sm:$0xff]
  %v4215 = vld [vmem:[%s1872 + $0xb0] sm:$0xff]
  %v4216 = vld [vmem:[%s1872 + $0xc0] sm:$0xff]
  %v4217 = vld [vmem:[%s1872 + $0xd0] sm:$0xff]
  %v4218 = vld [vmem:[%s1872 + $0xe0] sm:$0xff]
  %v4219 = vld [vmem:[%s1872 + $0xf0] sm:$0xff]
  %v4220 = vld [vmem:[%s1872 + $0x100] sm:$0xff]
  %v4221 = vld [vmem:[%s1872 + $0x110] sm:$0xff]
  %s4222 = scalar_lea.vmem %s2, 1536
  %v4223 = vld [vmem:[%s4222] sm:$0xff]
  %v4224 = vld [vmem:[%s4222 + $0x8] sm:$0xff]
  %v4225 = vld [vmem:[%s4222 + $0x10] sm:$0xff]
  %v4226 = vld [vmem:[%s4222 + $0x18] sm:$0xff]
  %v4227 = vld [vmem:[%s4222 + $0x20] sm:$0xff]
  %v4228 = vld [vmem:[%s4222 + $0x28] sm:$0xff]
  %v4229 = vld [vmem:[%s4222 + $0x30] sm:$0xff]
  %v4230 = vld [vmem:[%s4222 + $0x38] sm:$0xff]
  %v4231 = vld [vmem:[%s4222 + $0x40] sm:$0xff]
  %v4232 = vld [vmem:[%s4222 + $0x48] sm:$0xff]
  %v4233 = vld [vmem:[%s4222 + $0x50] sm:$0xff]
  %v4234 = vld [vmem:[%s4222 + $0x58] sm:$0xff]
  %v4235 = vld [vmem:[%s4222 + $0x60] sm:$0xff]
  %v4236 = vld [vmem:[%s4222 + $0x68] sm:$0xff]
  %v4237 = vld [vmem:[%s4222 + $0x70] sm:$0xff]
  %v4238 = vld [vmem:[%s4222 + $0x78] sm:$0xff]
  %4239 = vmatprep.subr.mxu0 0.0
  %4240 = vmatpush1.msra.mxu0 %v4238
  %4241 = vmatprep.subr.mxu0 0.0
  %4242 = vmatpush1.msra.mxu0 %v4237
  %4243 = vmatprep.subr.mxu0 0.0
  %4244 = vmatpush1.msra.mxu0 %v4236
  %4245 = vmatprep.subr.mxu0 0.0
  %4246 = vmatpush1.msra.mxu0 %v4235
  %4247 = vmatprep.subr.mxu0 0.0
  %4248 = vmatpush1.msra.mxu0 %v4234
  %4249 = vmatprep.subr.mxu0 0.0
  %4250 = vmatpush1.msra.mxu0 %v4233
  %4251 = vmatprep.subr.mxu0 0.0
  %4252 = vmatpush1.msra.mxu0 %v4232
  %4253 = vmatprep.subr.mxu0 0.0
  %4254 = vmatpush1.msra.mxu0 %v4231
  %4255 = vmatprep.subr.mxu0 0.0
  %4256 = vmatpush1.msra.mxu0 %v4230
  %4257 = vmatprep.subr.mxu0 0.0
  %4258 = vmatpush1.msra.mxu0 %v4229
  %4259 = vmatprep.subr.mxu0 0.0
  %4260 = vmatpush1.msra.mxu0 %v4228
  %4261 = vmatprep.subr.mxu0 0.0
  %4262 = vmatpush1.msra.mxu0 %v4227
  %4263 = vmatprep.subr.mxu0 0.0
  %4264 = vmatpush1.msra.mxu0 %v4226
  %4265 = vmatprep.subr.mxu0 0.0
  %4266 = vmatpush1.msra.mxu0 %v4225
  %4267 = vmatprep.subr.mxu0 0.0
  %4268 = vmatpush1.msra.mxu0 %v4224
  %4269 = vmatprep.subr.mxu0 0.0
  %4270 = vmatpush1.msra.mxu0 %v4223
  %4271 = vmatprep.subr.mxu0 0.0
  %4272 = vmatpush2.msra.mxu0 0.0
  %4273 = vmatprep.subr.mxu0 0.0
  %4274 = vmatpush2.msra.mxu0 0.0
  %4275 = vmatprep.subr.mxu0 0.0
  %4276 = vmatpush2.msra.mxu0 0.0
  %4277 = vmatprep.subr.mxu0 0.0
  %4278 = vmatpush2.msra.mxu0 0.0
  %4279 = vmatprep.subr.mxu0 0.0
  %4280 = vmatpush2.msra.mxu0 0.0
  %4281 = vmatprep.subr.mxu0 0.0
  %4282 = vmatpush2.msra.mxu0 0.0
  %4283 = vmatprep.subr.mxu0 0.0
  %4284 = vmatpush2.msra.mxu0 0.0
  %4285 = vmatprep.subr.mxu0 0.0
  %4286 = vmatpush2.msra.mxu0 0.0
  %4287 = vmatprep.subr.mxu0 0.0
  %4288 = vmatpush2.msra.mxu0 0.0
  %4289 = vmatprep.subr.mxu0 0.0
  %4290 = vmatpush2.msra.mxu0 0.0
  %4291 = vmatprep.subr.mxu0 0.0
  %4292 = vmatpush2.msra.mxu0 0.0
  %4293 = vmatprep.subr.mxu0 0.0
  %4294 = vmatpush2.msra.mxu0 0.0
  %4295 = vmatprep.subr.mxu0 0.0
  %4296 = vmatpush2.msra.mxu0 0.0
  %4297 = vmatprep.subr.mxu0 0.0
  %4298 = vmatpush2.msra.mxu0 0.0
  %4299 = vmatprep.subr.mxu0 0.0
  %4300 = vmatpush2.msra.mxu0 0.0
  %4301 = vmatprep.subr.mxu0 0.0
  %4302 = vmatpush2.msra.mxu0 0.0
  %4303 = vmatprep.mubr.f32.mxu0 0.0
  %4304 = vmatmul.mubr.f32.gmra.mxu0 %v4206
  %v4305 = vpop.f32.mrf.mxu0
  %v4306 = vadd.f32 0.0, %v4305
  %v4307 = vpop.f32.mrf.mxu0
  %4308 = vmatprep.mubr.f32.mxu0 0.0
  %4309 = vmatmul.mubr.f32.gmra.mxu0 %v4207
  %v4310 = vpop.f32.mrf.mxu0
  %v4311 = vadd.f32 0.0, %v4310
  %v4312 = vpop.f32.mrf.mxu0
  %4313 = vmatprep.mubr.f32.mxu0 0.0
  %4314 = vmatmul.mubr.f32.gmra.mxu0 %v4208
  %v4315 = vpop.f32.mrf.mxu0
  %v4316 = vadd.f32 0.0, %v4315
  %v4317 = vpop.f32.mrf.mxu0
  %4318 = vmatprep.mubr.f32.mxu0 0.0
  %4319 = vmatmul.mubr.f32.gmra.mxu0 %v4209
  %v4320 = vpop.f32.mrf.mxu0
  %v4321 = vadd.f32 0.0, %v4320
  %v4322 = vpop.f32.mrf.mxu0
  %4323 = vmatprep.mubr.f32.mxu0 0.0
  %4324 = vmatmul.mubr.f32.gmra.mxu0 %v4210
  %v4325 = vpop.f32.mrf.mxu0
  %v4326 = vadd.f32 0.0, %v4325
  %v4327 = vpop.f32.mrf.mxu0
  %4328 = vmatprep.mubr.f32.mxu0 0.0
  %4329 = vmatmul.mubr.f32.gmra.mxu0 %v4211
  %v4330 = vpop.f32.mrf.mxu0
  %v4331 = vadd.f32 0.0, %v4330
  %v4332 = vpop.f32.mrf.mxu0
  %4333 = vmatprep.mubr.f32.mxu0 0.0
  %4334 = vmatmul.mubr.f32.gmra.mxu0 %v4212
  %v4335 = vpop.f32.mrf.mxu0
  %v4336 = vadd.f32 0.0, %v4335
  %v4337 = vpop.f32.mrf.mxu0
  %4338 = vmatprep.mubr.f32.mxu0 0.0
  %4339 = vmatmul.mubr.f32.gmra.mxu0 %v4213
  %v4340 = vpop.f32.mrf.mxu0
  %v4341 = vadd.f32 0.0, %v4340
  %v4342 = vpop.f32.mrf.mxu0
  %4343 = vmatprep.mubr.f32.mxu0 0.0
  %4344 = vmatmul.mubr.f32.gmra.mxu0 %v4214
  %v4345 = vpop.f32.mrf.mxu0
  %v4346 = vadd.f32 0.0, %v4345
  %v4347 = vpop.f32.mrf.mxu0
  %4348 = vmatprep.mubr.f32.mxu0 0.0
  %4349 = vmatmul.mubr.f32.gmra.mxu0 %v4215
  %v4350 = vpop.f32.mrf.mxu0
  %v4351 = vadd.f32 0.0, %v4350
  %v4352 = vpop.f32.mrf.mxu0
  %4353 = vmatprep.mubr.f32.mxu0 0.0
  %4354 = vmatmul.mubr.f32.gmra.mxu0 %v4216
  %v4355 = vpop.f32.mrf.mxu0
  %v4356 = vadd.f32 0.0, %v4355
  %v4357 = vpop.f32.mrf.mxu0
  %4358 = vmatprep.mubr.f32.mxu0 0.0
  %4359 = vmatmul.mubr.f32.gmra.mxu0 %v4217
  %v4360 = vpop.f32.mrf.mxu0
  %v4361 = vadd.f32 0.0, %v4360
  %v4362 = vpop.f32.mrf.mxu0
  %4363 = vmatprep.mubr.f32.mxu0 0.0
  %4364 = vmatmul.mubr.f32.gmra.mxu0 %v4218
  %v4365 = vpop.f32.mrf.mxu0
  %v4366 = vadd.f32 0.0, %v4365
  %v4367 = vpop.f32.mrf.mxu0
  %4368 = vmatprep.mubr.f32.mxu0 0.0
  %4369 = vmatmul.mubr.f32.gmra.mxu0 %v4219
  %v4370 = vpop.f32.mrf.mxu0
  %v4371 = vadd.f32 0.0, %v4370
  %v4372 = vpop.f32.mrf.mxu0
  %4373 = vmatprep.mubr.f32.mxu0 0.0
  %4374 = vmatmul.mubr.f32.gmra.mxu0 %v4220
  %v4375 = vpop.f32.mrf.mxu0
  %v4376 = vadd.f32 0.0, %v4375
  %v4377 = vpop.f32.mrf.mxu0
  %4378 = vmatprep.mubr.f32.mxu0 0.0
  %4379 = vmatmul.mubr.f32.gmra.mxu0 %v4221
  %v4380 = vpop.f32.mrf.mxu0
  %v4381 = vadd.f32 0.0, %v4380
  %v4382 = vpop.f32.mrf.mxu0
  %4383 = vdwg.mxu0
  %v4384 = vadd.f32 %v4190, %v4306
  %v4385 = vadd.f32 %v4191, %v4311
  %v4386 = vadd.f32 %v4192, %v4316
  %v4387 = vadd.f32 %v4193, %v4321
  %v4388 = vadd.f32 %v4194, %v4326
  %v4389 = vadd.f32 %v4195, %v4331
  %v4390 = vadd.f32 %v4196, %v4336
  %v4391 = vadd.f32 %v4197, %v4341
  %v4392 = vadd.f32 %v4198, %v4346
  %v4393 = vadd.f32 %v4199, %v4351
  %v4394 = vadd.f32 %v4200, %v4356
  %v4395 = vadd.f32 %v4201, %v4361
  %v4396 = vadd.f32 %v4202, %v4366
  %v4397 = vadd.f32 %v4203, %v4371
  %v4398 = vadd.f32 %v4204, %v4376
  %v4399 = vadd.f32 %v4205, %v4381
  %v4400 = vld [vmem:[%s1872 + $0x1] sm:$0xff]
  %v4401 = vld [vmem:[%s1872 + $0x11] sm:$0xff]
  %v4402 = vld [vmem:[%s1872 + $0x21] sm:$0xff]
  %v4403 = vld [vmem:[%s1872 + $0x31] sm:$0xff]
  %v4404 = vld [vmem:[%s1872 + $0x41] sm:$0xff]
  %v4405 = vld [vmem:[%s1872 + $0x51] sm:$0xff]
  %v4406 = vld [vmem:[%s1872 + $0x61] sm:$0xff]
  %v4407 = vld [vmem:[%s1872 + $0x71] sm:$0xff]
  %v4408 = vld [vmem:[%s1872 + $0xa1] sm:$0xff]
  %v4409 = vld [vmem:[%s1872 + $0xb1] sm:$0xff]
  %v4410 = vld [vmem:[%s1872 + $0xc1] sm:$0xff]
  %v4411 = vld [vmem:[%s1872 + $0xd1] sm:$0xff]
  %v4412 = vld [vmem:[%s1872 + $0xe1] sm:$0xff]
  %v4413 = vld [vmem:[%s1872 + $0xf1] sm:$0xff]
  %v4414 = vld [vmem:[%s1872 + $0x101] sm:$0xff]
  %v4415 = vld [vmem:[%s1872 + $0x111] sm:$0xff]
  %s4416 = scalar_lea.vmem %s2, 1664
  %v4417 = vld [vmem:[%s4416] sm:$0xff]
  %v4418 = vld [vmem:[%s4416 + $0x8] sm:$0xff]
  %v4419 = vld [vmem:[%s4416 + $0x10] sm:$0xff]
  %v4420 = vld [vmem:[%s4416 + $0x18] sm:$0xff]
  %v4421 = vld [vmem:[%s4416 + $0x20] sm:$0xff]
  %v4422 = vld [vmem:[%s4416 + $0x28] sm:$0xff]
  %v4423 = vld [vmem:[%s4416 + $0x30] sm:$0xff]
  %v4424 = vld [vmem:[%s4416 + $0x38] sm:$0xff]
  %v4425 = vld [vmem:[%s4416 + $0x40] sm:$0xff]
  %v4426 = vld [vmem:[%s4416 + $0x48] sm:$0xff]
  %v4427 = vld [vmem:[%s4416 + $0x50] sm:$0xff]
  %v4428 = vld [vmem:[%s4416 + $0x58] sm:$0xff]
  %v4429 = vld [vmem:[%s4416 + $0x60] sm:$0xff]
  %v4430 = vld [vmem:[%s4416 + $0x68] sm:$0xff]
  %v4431 = vld [vmem:[%s4416 + $0x70] sm:$0xff]
  %v4432 = vld [vmem:[%s4416 + $0x78] sm:$0xff]
  %4433 = vmatprep.subr.mxu0 0.0
  %4434 = vmatpush1.msra.mxu0 %v4432
  %4435 = vmatprep.subr.mxu0 0.0
  %4436 = vmatpush1.msra.mxu0 %v4431
  %4437 = vmatprep.subr.mxu0 0.0
  %4438 = vmatpush1.msra.mxu0 %v4430
  %4439 = vmatprep.subr.mxu0 0.0
  %4440 = vmatpush1.msra.mxu0 %v4429
  %4441 = vmatprep.subr.mxu0 0.0
  %4442 = vmatpush1.msra.mxu0 %v4428
  %4443 = vmatprep.subr.mxu0 0.0
  %4444 = vmatpush1.msra.mxu0 %v4427
  %4445 = vmatprep.subr.mxu0 0.0
  %4446 = vmatpush1.msra.mxu0 %v4426
  %4447 = vmatprep.subr.mxu0 0.0
  %4448 = vmatpush1.msra.mxu0 %v4425
  %4449 = vmatprep.subr.mxu0 0.0
  %4450 = vmatpush1.msra.mxu0 %v4424
  %4451 = vmatprep.subr.mxu0 0.0
  %4452 = vmatpush1.msra.mxu0 %v4423
  %4453 = vmatprep.subr.mxu0 0.0
  %4454 = vmatpush1.msra.mxu0 %v4422
  %4455 = vmatprep.subr.mxu0 0.0
  %4456 = vmatpush1.msra.mxu0 %v4421
  %4457 = vmatprep.subr.mxu0 0.0
  %4458 = vmatpush1.msra.mxu0 %v4420
  %4459 = vmatprep.subr.mxu0 0.0
  %4460 = vmatpush1.msra.mxu0 %v4419
  %4461 = vmatprep.subr.mxu0 0.0
  %4462 = vmatpush1.msra.mxu0 %v4418
  %4463 = vmatprep.subr.mxu0 0.0
  %4464 = vmatpush1.msra.mxu0 %v4417
  %4465 = vmatprep.subr.mxu0 0.0
  %4466 = vmatpush2.msra.mxu0 0.0
  %4467 = vmatprep.subr.mxu0 0.0
  %4468 = vmatpush2.msra.mxu0 0.0
  %4469 = vmatprep.subr.mxu0 0.0
  %4470 = vmatpush2.msra.mxu0 0.0
  %4471 = vmatprep.subr.mxu0 0.0
  %4472 = vmatpush2.msra.mxu0 0.0
  %4473 = vmatprep.subr.mxu0 0.0
  %4474 = vmatpush2.msra.mxu0 0.0
  %4475 = vmatprep.subr.mxu0 0.0
  %4476 = vmatpush2.msra.mxu0 0.0
  %4477 = vmatprep.subr.mxu0 0.0
  %4478 = vmatpush2.msra.mxu0 0.0
  %4479 = vmatprep.subr.mxu0 0.0
  %4480 = vmatpush2.msra.mxu0 0.0
  %4481 = vmatprep.subr.mxu0 0.0
  %4482 = vmatpush2.msra.mxu0 0.0
  %4483 = vmatprep.subr.mxu0 0.0
  %4484 = vmatpush2.msra.mxu0 0.0
  %4485 = vmatprep.subr.mxu0 0.0
  %4486 = vmatpush2.msra.mxu0 0.0
  %4487 = vmatprep.subr.mxu0 0.0
  %4488 = vmatpush2.msra.mxu0 0.0
  %4489 = vmatprep.subr.mxu0 0.0
  %4490 = vmatpush2.msra.mxu0 0.0
  %4491 = vmatprep.subr.mxu0 0.0
  %4492 = vmatpush2.msra.mxu0 0.0
  %4493 = vmatprep.subr.mxu0 0.0
  %4494 = vmatpush2.msra.mxu0 0.0
  %4495 = vmatprep.subr.mxu0 0.0
  %4496 = vmatpush2.msra.mxu0 0.0
  %4497 = vmatprep.mubr.f32.mxu0 0.0
  %4498 = vmatmul.mubr.f32.gmra.mxu0 %v4400
  %v4499 = vpop.f32.mrf.mxu0
  %v4500 = vadd.f32 0.0, %v4499
  %v4501 = vpop.f32.mrf.mxu0
  %4502 = vmatprep.mubr.f32.mxu0 0.0
  %4503 = vmatmul.mubr.f32.gmra.mxu0 %v4401
  %v4504 = vpop.f32.mrf.mxu0
  %v4505 = vadd.f32 0.0, %v4504
  %v4506 = vpop.f32.mrf.mxu0
  %4507 = vmatprep.mubr.f32.mxu0 0.0
  %4508 = vmatmul.mubr.f32.gmra.mxu0 %v4402
  %v4509 = vpop.f32.mrf.mxu0
  %v4510 = vadd.f32 0.0, %v4509
  %v4511 = vpop.f32.mrf.mxu0
  %4512 = vmatprep.mubr.f32.mxu0 0.0
  %4513 = vmatmul.mubr.f32.gmra.mxu0 %v4403
  %v4514 = vpop.f32.mrf.mxu0
  %v4515 = vadd.f32 0.0, %v4514
  %v4516 = vpop.f32.mrf.mxu0
  %4517 = vmatprep.mubr.f32.mxu0 0.0
  %4518 = vmatmul.mubr.f32.gmra.mxu0 %v4404
  %v4519 = vpop.f32.mrf.mxu0
  %v4520 = vadd.f32 0.0, %v4519
  %v4521 = vpop.f32.mrf.mxu0
  %4522 = vmatprep.mubr.f32.mxu0 0.0
  %4523 = vmatmul.mubr.f32.gmra.mxu0 %v4405
  %v4524 = vpop.f32.mrf.mxu0
  %v4525 = vadd.f32 0.0, %v4524
  %v4526 = vpop.f32.mrf.mxu0
  %4527 = vmatprep.mubr.f32.mxu0 0.0
  %4528 = vmatmul.mubr.f32.gmra.mxu0 %v4406
  %v4529 = vpop.f32.mrf.mxu0
  %v4530 = vadd.f32 0.0, %v4529
  %v4531 = vpop.f32.mrf.mxu0
  %4532 = vmatprep.mubr.f32.mxu0 0.0
  %4533 = vmatmul.mubr.f32.gmra.mxu0 %v4407
  %v4534 = vpop.f32.mrf.mxu0
  %v4535 = vadd.f32 0.0, %v4534
  %v4536 = vpop.f32.mrf.mxu0
  %4537 = vmatprep.mubr.f32.mxu0 0.0
  %4538 = vmatmul.mubr.f32.gmra.mxu0 %v4408
  %v4539 = vpop.f32.mrf.mxu0
  %v4540 = vadd.f32 0.0, %v4539
  %v4541 = vpop.f32.mrf.mxu0
  %4542 = vmatprep.mubr.f32.mxu0 0.0
  %4543 = vmatmul.mubr.f32.gmra.mxu0 %v4409
  %v4544 = vpop.f32.mrf.mxu0
  %v4545 = vadd.f32 0.0, %v4544
  %v4546 = vpop.f32.mrf.mxu0
  %4547 = vmatprep.mubr.f32.mxu0 0.0
  %4548 = vmatmul.mubr.f32.gmra.mxu0 %v4410
  %v4549 = vpop.f32.mrf.mxu0
  %v4550 = vadd.f32 0.0, %v4549
  %v4551 = vpop.f32.mrf.mxu0
  %4552 = vmatprep.mubr.f32.mxu0 0.0
  %4553 = vmatmul.mubr.f32.gmra.mxu0 %v4411
  %v4554 = vpop.f32.mrf.mxu0
  %v4555 = vadd.f32 0.0, %v4554
  %v4556 = vpop.f32.mrf.mxu0
  %4557 = vmatprep.mubr.f32.mxu0 0.0
  %4558 = vmatmul.mubr.f32.gmra.mxu0 %v4412
  %v4559 = vpop.f32.mrf.mxu0
  %v4560 = vadd.f32 0.0, %v4559
  %v4561 = vpop.f32.mrf.mxu0
  %4562 = vmatprep.mubr.f32.mxu0 0.0
  %4563 = vmatmul.mubr.f32.gmra.mxu0 %v4413
  %v4564 = vpop.f32.mrf.mxu0
  %v4565 = vadd.f32 0.0, %v4564
  %v4566 = vpop.f32.mrf.mxu0
  %4567 = vmatprep.mubr.f32.mxu0 0.0
  %4568 = vmatmul.mubr.f32.gmra.mxu0 %v4414
  %v4569 = vpop.f32.mrf.mxu0
  %v4570 = vadd.f32 0.0, %v4569
  %v4571 = vpop.f32.mrf.mxu0
  %4572 = vmatprep.mubr.f32.mxu0 0.0
  %4573 = vmatmul.mubr.f32.gmra.mxu0 %v4415
  %v4574 = vpop.f32.mrf.mxu0
  %v4575 = vadd.f32 0.0, %v4574
  %v4576 = vpop.f32.mrf.mxu0
  %4577 = vdwg.mxu0
  %v4578 = vadd.f32 %v4384, %v4500
  %v4579 = vadd.f32 %v4385, %v4505
  %v4580 = vadd.f32 %v4386, %v4510
  %v4581 = vadd.f32 %v4387, %v4515
  %v4582 = vadd.f32 %v4388, %v4520
  %v4583 = vadd.f32 %v4389, %v4525
  %v4584 = vadd.f32 %v4390, %v4530
  %v4585 = vadd.f32 %v4391, %v4535
  %v4586 = vadd.f32 %v4392, %v4540
  %v4587 = vadd.f32 %v4393, %v4545
  %v4588 = vadd.f32 %v4394, %v4550
  %v4589 = vadd.f32 %v4395, %v4555
  %v4590 = vadd.f32 %v4396, %v4560
  %v4591 = vadd.f32 %v4397, %v4565
  %v4592 = vadd.f32 %v4398, %v4570
  %v4593 = vadd.f32 %v4399, %v4575
  %v4594 = vld [vmem:[%s1872 + $0x2] sm:$0xff]
  %v4595 = vld [vmem:[%s1872 + $0x12] sm:$0xff]
  %v4596 = vld [vmem:[%s1872 + $0x22] sm:$0xff]
  %v4597 = vld [vmem:[%s1872 + $0x32] sm:$0xff]
  %v4598 = vld [vmem:[%s1872 + $0x42] sm:$0xff]
  %v4599 = vld [vmem:[%s1872 + $0x52] sm:$0xff]
  %v4600 = vld [vmem:[%s1872 + $0x62] sm:$0xff]
  %v4601 = vld [vmem:[%s1872 + $0x72] sm:$0xff]
  %v4602 = vld [vmem:[%s1872 + $0xa2] sm:$0xff]
  %v4603 = vld [vmem:[%s1872 + $0xb2] sm:$0xff]
  %v4604 = vld [vmem:[%s1872 + $0xc2] sm:$0xff]
  %v4605 = vld [vmem:[%s1872 + $0xd2] sm:$0xff]
  %v4606 = vld [vmem:[%s1872 + $0xe2] sm:$0xff]
  %v4607 = vld [vmem:[%s1872 + $0xf2] sm:$0xff]
  %v4608 = vld [vmem:[%s1872 + $0x102] sm:$0xff]
  %v4609 = vld [vmem:[%s1872 + $0x112] sm:$0xff]
  %s4610 = scalar_lea.vmem %s2, 1792
  %v4611 = vld [vmem:[%s4610] sm:$0xff]
  %v4612 = vld [vmem:[%s4610 + $0x8] sm:$0xff]
  %v4613 = vld [vmem:[%s4610 + $0x10] sm:$0xff]
  %v4614 = vld [vmem:[%s4610 + $0x18] sm:$0xff]
  %v4615 = vld [vmem:[%s4610 + $0x20] sm:$0xff]
  %v4616 = vld [vmem:[%s4610 + $0x28] sm:$0xff]
  %v4617 = vld [vmem:[%s4610 + $0x30] sm:$0xff]
  %v4618 = vld [vmem:[%s4610 + $0x38] sm:$0xff]
  %v4619 = vld [vmem:[%s4610 + $0x40] sm:$0xff]
  %v4620 = vld [vmem:[%s4610 + $0x48] sm:$0xff]
  %v4621 = vld [vmem:[%s4610 + $0x50] sm:$0xff]
  %v4622 = vld [vmem:[%s4610 + $0x58] sm:$0xff]
  %v4623 = vld [vmem:[%s4610 + $0x60] sm:$0xff]
  %v4624 = vld [vmem:[%s4610 + $0x68] sm:$0xff]
  %v4625 = vld [vmem:[%s4610 + $0x70] sm:$0xff]
  %v4626 = vld [vmem:[%s4610 + $0x78] sm:$0xff]
  %4627 = vmatprep.subr.mxu0 0.0
  %4628 = vmatpush1.msra.mxu0 %v4626
  %4629 = vmatprep.subr.mxu0 0.0
  %4630 = vmatpush1.msra.mxu0 %v4625
  %4631 = vmatprep.subr.mxu0 0.0
  %4632 = vmatpush1.msra.mxu0 %v4624
  %4633 = vmatprep.subr.mxu0 0.0
  %4634 = vmatpush1.msra.mxu0 %v4623
  %4635 = vmatprep.subr.mxu0 0.0
  %4636 = vmatpush1.msra.mxu0 %v4622
  %4637 = vmatprep.subr.mxu0 0.0
  %4638 = vmatpush1.msra.mxu0 %v4621
  %4639 = vmatprep.subr.mxu0 0.0
  %4640 = vmatpush1.msra.mxu0 %v4620
  %4641 = vmatprep.subr.mxu0 0.0
  %4642 = vmatpush1.msra.mxu0 %v4619
  %4643 = vmatprep.subr.mxu0 0.0
  %4644 = vmatpush1.msra.mxu0 %v4618
  %4645 = vmatprep.subr.mxu0 0.0
  %4646 = vmatpush1.msra.mxu0 %v4617
  %4647 = vmatprep.subr.mxu0 0.0
  %4648 = vmatpush1.msra.mxu0 %v4616
  %4649 = vmatprep.subr.mxu0 0.0
  %4650 = vmatpush1.msra.mxu0 %v4615
  %4651 = vmatprep.subr.mxu0 0.0
  %4652 = vmatpush1.msra.mxu0 %v4614
  %4653 = vmatprep.subr.mxu0 0.0
  %4654 = vmatpush1.msra.mxu0 %v4613
  %4655 = vmatprep.subr.mxu0 0.0
  %4656 = vmatpush1.msra.mxu0 %v4612
  %4657 = vmatprep.subr.mxu0 0.0
  %4658 = vmatpush1.msra.mxu0 %v4611
  %4659 = vmatprep.subr.mxu0 0.0
  %4660 = vmatpush2.msra.mxu0 0.0
  %4661 = vmatprep.subr.mxu0 0.0
  %4662 = vmatpush2.msra.mxu0 0.0
  %4663 = vmatprep.subr.mxu0 0.0
  %4664 = vmatpush2.msra.mxu0 0.0
  %4665 = vmatprep.subr.mxu0 0.0
  %4666 = vmatpush2.msra.mxu0 0.0
  %4667 = vmatprep.subr.mxu0 0.0
  %4668 = vmatpush2.msra.mxu0 0.0
  %4669 = vmatprep.subr.mxu0 0.0
  %4670 = vmatpush2.msra.mxu0 0.0
  %4671 = vmatprep.subr.mxu0 0.0
  %4672 = vmatpush2.msra.mxu0 0.0
  %4673 = vmatprep.subr.mxu0 0.0
  %4674 = vmatpush2.msra.mxu0 0.0
  %4675 = vmatprep.subr.mxu0 0.0
  %4676 = vmatpush2.msra.mxu0 0.0
  %4677 = vmatprep.subr.mxu0 0.0
  %4678 = vmatpush2.msra.mxu0 0.0
  %4679 = vmatprep.subr.mxu0 0.0
  %4680 = vmatpush2.msra.mxu0 0.0
  %4681 = vmatprep.subr.mxu0 0.0
  %4682 = vmatpush2.msra.mxu0 0.0
  %4683 = vmatprep.subr.mxu0 0.0
  %4684 = vmatpush2.msra.mxu0 0.0
  %4685 = vmatprep.subr.mxu0 0.0
  %4686 = vmatpush2.msra.mxu0 0.0
  %4687 = vmatprep.subr.mxu0 0.0
  %4688 = vmatpush2.msra.mxu0 0.0
  %4689 = vmatprep.subr.mxu0 0.0
  %4690 = vmatpush2.msra.mxu0 0.0
  %4691 = vmatprep.mubr.f32.mxu0 0.0
  %4692 = vmatmul.mubr.f32.gmra.mxu0 %v4594
  %v4693 = vpop.f32.mrf.mxu0
  %v4694 = vadd.f32 0.0, %v4693
  %v4695 = vpop.f32.mrf.mxu0
  %4696 = vmatprep.mubr.f32.mxu0 0.0
  %4697 = vmatmul.mubr.f32.gmra.mxu0 %v4595
  %v4698 = vpop.f32.mrf.mxu0
  %v4699 = vadd.f32 0.0, %v4698
  %v4700 = vpop.f32.mrf.mxu0
  %4701 = vmatprep.mubr.f32.mxu0 0.0
  %4702 = vmatmul.mubr.f32.gmra.mxu0 %v4596
  %v4703 = vpop.f32.mrf.mxu0
  %v4704 = vadd.f32 0.0, %v4703
  %v4705 = vpop.f32.mrf.mxu0
  %4706 = vmatprep.mubr.f32.mxu0 0.0
  %4707 = vmatmul.mubr.f32.gmra.mxu0 %v4597
  %v4708 = vpop.f32.mrf.mxu0
  %v4709 = vadd.f32 0.0, %v4708
  %v4710 = vpop.f32.mrf.mxu0
  %4711 = vmatprep.mubr.f32.mxu0 0.0
  %4712 = vmatmul.mubr.f32.gmra.mxu0 %v4598
  %v4713 = vpop.f32.mrf.mxu0
  %v4714 = vadd.f32 0.0, %v4713
  %v4715 = vpop.f32.mrf.mxu0
  %4716 = vmatprep.mubr.f32.mxu0 0.0
  %4717 = vmatmul.mubr.f32.gmra.mxu0 %v4599
  %v4718 = vpop.f32.mrf.mxu0
  %v4719 = vadd.f32 0.0, %v4718
  %v4720 = vpop.f32.mrf.mxu0
  %4721 = vmatprep.mubr.f32.mxu0 0.0
  %4722 = vmatmul.mubr.f32.gmra.mxu0 %v4600
  %v4723 = vpop.f32.mrf.mxu0
  %v4724 = vadd.f32 0.0, %v4723
  %v4725 = vpop.f32.mrf.mxu0
  %4726 = vmatprep.mubr.f32.mxu0 0.0
  %4727 = vmatmul.mubr.f32.gmra.mxu0 %v4601
  %v4728 = vpop.f32.mrf.mxu0
  %v4729 = vadd.f32 0.0, %v4728
  %v4730 = vpop.f32.mrf.mxu0
  %4731 = vmatprep.mubr.f32.mxu0 0.0
  %4732 = vmatmul.mubr.f32.gmra.mxu0 %v4602
  %v4733 = vpop.f32.mrf.mxu0
  %v4734 = vadd.f32 0.0, %v4733
  %v4735 = vpop.f32.mrf.mxu0
  %4736 = vmatprep.mubr.f32.mxu0 0.0
  %4737 = vmatmul.mubr.f32.gmra.mxu0 %v4603
  %v4738 = vpop.f32.mrf.mxu0
  %v4739 = vadd.f32 0.0, %v4738
  %v4740 = vpop.f32.mrf.mxu0
  %4741 = vmatprep.mubr.f32.mxu0 0.0
  %4742 = vmatmul.mubr.f32.gmra.mxu0 %v4604
  %v4743 = vpop.f32.mrf.mxu0
  %v4744 = vadd.f32 0.0, %v4743
  %v4745 = vpop.f32.mrf.mxu0
  %4746 = vmatprep.mubr.f32.mxu0 0.0
  %4747 = vmatmul.mubr.f32.gmra.mxu0 %v4605
  %v4748 = vpop.f32.mrf.mxu0
  %v4749 = vadd.f32 0.0, %v4748
  %v4750 = vpop.f32.mrf.mxu0
  %4751 = vmatprep.mubr.f32.mxu0 0.0
  %4752 = vmatmul.mubr.f32.gmra.mxu0 %v4606
  %v4753 = vpop.f32.mrf.mxu0
  %v4754 = vadd.f32 0.0, %v4753
  %v4755 = vpop.f32.mrf.mxu0
  %4756 = vmatprep.mubr.f32.mxu0 0.0
  %4757 = vmatmul.mubr.f32.gmra.mxu0 %v4607
  %v4758 = vpop.f32.mrf.mxu0
  %v4759 = vadd.f32 0.0, %v4758
  %v4760 = vpop.f32.mrf.mxu0
  %4761 = vmatprep.mubr.f32.mxu0 0.0
  %4762 = vmatmul.mubr.f32.gmra.mxu0 %v4608
  %v4763 = vpop.f32.mrf.mxu0
  %v4764 = vadd.f32 0.0, %v4763
  %v4765 = vpop.f32.mrf.mxu0
  %4766 = vmatprep.mubr.f32.mxu0 0.0
  %4767 = vmatmul.mubr.f32.gmra.mxu0 %v4609
  %v4768 = vpop.f32.mrf.mxu0
  %v4769 = vadd.f32 0.0, %v4768
  %v4770 = vpop.f32.mrf.mxu0
  %4771 = vdwg.mxu0
  %v4772 = vadd.f32 %v4578, %v4694
  %v4773 = vadd.f32 %v4579, %v4699
  %v4774 = vadd.f32 %v4580, %v4704
  %v4775 = vadd.f32 %v4581, %v4709
  %v4776 = vadd.f32 %v4582, %v4714
  %v4777 = vadd.f32 %v4583, %v4719
  %v4778 = vadd.f32 %v4584, %v4724
  %v4779 = vadd.f32 %v4585, %v4729
  %v4780 = vadd.f32 %v4586, %v4734
  %v4781 = vadd.f32 %v4587, %v4739
  %v4782 = vadd.f32 %v4588, %v4744
  %v4783 = vadd.f32 %v4589, %v4749
  %v4784 = vadd.f32 %v4590, %v4754
  %v4785 = vadd.f32 %v4591, %v4759
  %v4786 = vadd.f32 %v4592, %v4764
  %v4787 = vadd.f32 %v4593, %v4769
  %v4788 = vld [vmem:[%s3020] sm:$0xff]
  %v4789 = vld [vmem:[%s3020 + $0x10] sm:$0xff]
  %v4790 = vld [vmem:[%s3020 + $0x20] sm:$0xff]
  %v4791 = vld [vmem:[%s3020 + $0x30] sm:$0xff]
  %v4792 = vld [vmem:[%s3020 + $0x40] sm:$0xff]
  %v4793 = vld [vmem:[%s3020 + $0x50] sm:$0xff]
  %v4794 = vld [vmem:[%s3020 + $0x60] sm:$0xff]
  %v4795 = vld [vmem:[%s3020 + $0x70] sm:$0xff]
  %v4796 = vld [vmem:[%s3020 + $0xa0] sm:$0xff]
  %v4797 = vld [vmem:[%s3020 + $0xb0] sm:$0xff]
  %v4798 = vld [vmem:[%s3020 + $0xc0] sm:$0xff]
  %v4799 = vld [vmem:[%s3020 + $0xd0] sm:$0xff]
  %v4800 = vld [vmem:[%s3020 + $0xe0] sm:$0xff]
  %v4801 = vld [vmem:[%s3020 + $0xf0] sm:$0xff]
  %v4802 = vld [vmem:[%s3020 + $0x100] sm:$0xff]
  %v4803 = vld [vmem:[%s3020 + $0x110] sm:$0xff]
  %s4804 = scalar_lea.vmem %s2, 1920
  %v4805 = vld [vmem:[%s4804] sm:$0xff]
  %v4806 = vld [vmem:[%s4804 + $0x8] sm:$0xff]
  %v4807 = vld [vmem:[%s4804 + $0x10] sm:$0xff]
  %v4808 = vld [vmem:[%s4804 + $0x18] sm:$0xff]
  %v4809 = vld [vmem:[%s4804 + $0x20] sm:$0xff]
  %v4810 = vld [vmem:[%s4804 + $0x28] sm:$0xff]
  %v4811 = vld [vmem:[%s4804 + $0x30] sm:$0xff]
  %v4812 = vld [vmem:[%s4804 + $0x38] sm:$0xff]
  %v4813 = vld [vmem:[%s4804 + $0x40] sm:$0xff]
  %v4814 = vld [vmem:[%s4804 + $0x48] sm:$0xff]
  %v4815 = vld [vmem:[%s4804 + $0x50] sm:$0xff]
  %v4816 = vld [vmem:[%s4804 + $0x58] sm:$0xff]
  %v4817 = vld [vmem:[%s4804 + $0x60] sm:$0xff]
  %v4818 = vld [vmem:[%s4804 + $0x68] sm:$0xff]
  %v4819 = vld [vmem:[%s4804 + $0x70] sm:$0xff]
  %v4820 = vld [vmem:[%s4804 + $0x78] sm:$0xff]
  %4821 = vmatprep.subr.mxu0 0.0
  %4822 = vmatpush1.msra.mxu0 %v4820
  %4823 = vmatprep.subr.mxu0 0.0
  %4824 = vmatpush1.msra.mxu0 %v4819
  %4825 = vmatprep.subr.mxu0 0.0
  %4826 = vmatpush1.msra.mxu0 %v4818
  %4827 = vmatprep.subr.mxu0 0.0
  %4828 = vmatpush1.msra.mxu0 %v4817
  %4829 = vmatprep.subr.mxu0 0.0
  %4830 = vmatpush1.msra.mxu0 %v4816
  %4831 = vmatprep.subr.mxu0 0.0
  %4832 = vmatpush1.msra.mxu0 %v4815
  %4833 = vmatprep.subr.mxu0 0.0
  %4834 = vmatpush1.msra.mxu0 %v4814
  %4835 = vmatprep.subr.mxu0 0.0
  %4836 = vmatpush1.msra.mxu0 %v4813
  %4837 = vmatprep.subr.mxu0 0.0
  %4838 = vmatpush1.msra.mxu0 %v4812
  %4839 = vmatprep.subr.mxu0 0.0
  %4840 = vmatpush1.msra.mxu0 %v4811
  %4841 = vmatprep.subr.mxu0 0.0
  %4842 = vmatpush1.msra.mxu0 %v4810
  %4843 = vmatprep.subr.mxu0 0.0
  %4844 = vmatpush1.msra.mxu0 %v4809
  %4845 = vmatprep.subr.mxu0 0.0
  %4846 = vmatpush1.msra.mxu0 %v4808
  %4847 = vmatprep.subr.mxu0 0.0
  %4848 = vmatpush1.msra.mxu0 %v4807
  %4849 = vmatprep.subr.mxu0 0.0
  %4850 = vmatpush1.msra.mxu0 %v4806
  %4851 = vmatprep.subr.mxu0 0.0
  %4852 = vmatpush1.msra.mxu0 %v4805
  %4853 = vmatprep.subr.mxu0 0.0
  %4854 = vmatpush2.msra.mxu0 0.0
  %4855 = vmatprep.subr.mxu0 0.0
  %4856 = vmatpush2.msra.mxu0 0.0
  %4857 = vmatprep.subr.mxu0 0.0
  %4858 = vmatpush2.msra.mxu0 0.0
  %4859 = vmatprep.subr.mxu0 0.0
  %4860 = vmatpush2.msra.mxu0 0.0
  %4861 = vmatprep.subr.mxu0 0.0
  %4862 = vmatpush2.msra.mxu0 0.0
  %4863 = vmatprep.subr.mxu0 0.0
  %4864 = vmatpush2.msra.mxu0 0.0
  %4865 = vmatprep.subr.mxu0 0.0
  %4866 = vmatpush2.msra.mxu0 0.0
  %4867 = vmatprep.subr.mxu0 0.0
  %4868 = vmatpush2.msra.mxu0 0.0
  %4869 = vmatprep.subr.mxu0 0.0
  %4870 = vmatpush2.msra.mxu0 0.0
  %4871 = vmatprep.subr.mxu0 0.0
  %4872 = vmatpush2.msra.mxu0 0.0
  %4873 = vmatprep.subr.mxu0 0.0
  %4874 = vmatpush2.msra.mxu0 0.0
  %4875 = vmatprep.subr.mxu0 0.0
  %4876 = vmatpush2.msra.mxu0 0.0
  %4877 = vmatprep.subr.mxu0 0.0
  %4878 = vmatpush2.msra.mxu0 0.0
  %4879 = vmatprep.subr.mxu0 0.0
  %4880 = vmatpush2.msra.mxu0 0.0
  %4881 = vmatprep.subr.mxu0 0.0
  %4882 = vmatpush2.msra.mxu0 0.0
  %4883 = vmatprep.subr.mxu0 0.0
  %4884 = vmatpush2.msra.mxu0 0.0
  %4885 = vmatprep.mubr.f32.mxu0 0.0
  %4886 = vmatmul.mubr.f32.gmra.mxu0 %v4788
  %v4887 = vpop.f32.mrf.mxu0
  %v4888 = vadd.f32 0.0, %v4887
  %v4889 = vpop.f32.mrf.mxu0
  %4890 = vmatprep.mubr.f32.mxu0 0.0
  %4891 = vmatmul.mubr.f32.gmra.mxu0 %v4789
  %v4892 = vpop.f32.mrf.mxu0
  %v4893 = vadd.f32 0.0, %v4892
  %v4894 = vpop.f32.mrf.mxu0
  %4895 = vmatprep.mubr.f32.mxu0 0.0
  %4896 = vmatmul.mubr.f32.gmra.mxu0 %v4790
  %v4897 = vpop.f32.mrf.mxu0
  %v4898 = vadd.f32 0.0, %v4897
  %v4899 = vpop.f32.mrf.mxu0
  %4900 = vmatprep.mubr.f32.mxu0 0.0
  %4901 = vmatmul.mubr.f32.gmra.mxu0 %v4791
  %v4902 = vpop.f32.mrf.mxu0
  %v4903 = vadd.f32 0.0, %v4902
  %v4904 = vpop.f32.mrf.mxu0
  %4905 = vmatprep.mubr.f32.mxu0 0.0
  %4906 = vmatmul.mubr.f32.gmra.mxu0 %v4792
  %v4907 = vpop.f32.mrf.mxu0
  %v4908 = vadd.f32 0.0, %v4907
  %v4909 = vpop.f32.mrf.mxu0
  %4910 = vmatprep.mubr.f32.mxu0 0.0
  %4911 = vmatmul.mubr.f32.gmra.mxu0 %v4793
  %v4912 = vpop.f32.mrf.mxu0
  %v4913 = vadd.f32 0.0, %v4912
  %v4914 = vpop.f32.mrf.mxu0
  %4915 = vmatprep.mubr.f32.mxu0 0.0
  %4916 = vmatmul.mubr.f32.gmra.mxu0 %v4794
  %v4917 = vpop.f32.mrf.mxu0
  %v4918 = vadd.f32 0.0, %v4917
  %v4919 = vpop.f32.mrf.mxu0
  %4920 = vmatprep.mubr.f32.mxu0 0.0
  %4921 = vmatmul.mubr.f32.gmra.mxu0 %v4795
  %v4922 = vpop.f32.mrf.mxu0
  %v4923 = vadd.f32 0.0, %v4922
  %v4924 = vpop.f32.mrf.mxu0
  %4925 = vmatprep.mubr.f32.mxu0 0.0
  %4926 = vmatmul.mubr.f32.gmra.mxu0 %v4796
  %v4927 = vpop.f32.mrf.mxu0
  %v4928 = vadd.f32 0.0, %v4927
  %v4929 = vpop.f32.mrf.mxu0
  %4930 = vmatprep.mubr.f32.mxu0 0.0
  %4931 = vmatmul.mubr.f32.gmra.mxu0 %v4797
  %v4932 = vpop.f32.mrf.mxu0
  %v4933 = vadd.f32 0.0, %v4932
  %v4934 = vpop.f32.mrf.mxu0
  %4935 = vmatprep.mubr.f32.mxu0 0.0
  %4936 = vmatmul.mubr.f32.gmra.mxu0 %v4798
  %v4937 = vpop.f32.mrf.mxu0
  %v4938 = vadd.f32 0.0, %v4937
  %v4939 = vpop.f32.mrf.mxu0
  %4940 = vmatprep.mubr.f32.mxu0 0.0
  %4941 = vmatmul.mubr.f32.gmra.mxu0 %v4799
  %v4942 = vpop.f32.mrf.mxu0
  %v4943 = vadd.f32 0.0, %v4942
  %v4944 = vpop.f32.mrf.mxu0
  %4945 = vmatprep.mubr.f32.mxu0 0.0
  %4946 = vmatmul.mubr.f32.gmra.mxu0 %v4800
  %v4947 = vpop.f32.mrf.mxu0
  %v4948 = vadd.f32 0.0, %v4947
  %v4949 = vpop.f32.mrf.mxu0
  %4950 = vmatprep.mubr.f32.mxu0 0.0
  %4951 = vmatmul.mubr.f32.gmra.mxu0 %v4801
  %v4952 = vpop.f32.mrf.mxu0
  %v4953 = vadd.f32 0.0, %v4952
  %v4954 = vpop.f32.mrf.mxu0
  %4955 = vmatprep.mubr.f32.mxu0 0.0
  %4956 = vmatmul.mubr.f32.gmra.mxu0 %v4802
  %v4957 = vpop.f32.mrf.mxu0
  %v4958 = vadd.f32 0.0, %v4957
  %v4959 = vpop.f32.mrf.mxu0
  %4960 = vmatprep.mubr.f32.mxu0 0.0
  %4961 = vmatmul.mubr.f32.gmra.mxu0 %v4803
  %v4962 = vpop.f32.mrf.mxu0
  %v4963 = vadd.f32 0.0, %v4962
  %v4964 = vpop.f32.mrf.mxu0
  %4965 = vdwg.mxu0
  %v4966 = vadd.f32 %v4772, %v4888
  %v4967 = vadd.f32 %v4773, %v4893
  %v4968 = vadd.f32 %v4774, %v4898
  %v4969 = vadd.f32 %v4775, %v4903
  %v4970 = vadd.f32 %v4776, %v4908
  %v4971 = vadd.f32 %v4777, %v4913
  %v4972 = vadd.f32 %v4778, %v4918
  %v4973 = vadd.f32 %v4779, %v4923
  %v4974 = vadd.f32 %v4780, %v4928
  %v4975 = vadd.f32 %v4781, %v4933
  %v4976 = vadd.f32 %v4782, %v4938
  %v4977 = vadd.f32 %v4783, %v4943
  %v4978 = vadd.f32 %v4784, %v4948
  %v4979 = vadd.f32 %v4785, %v4953
  %v4980 = vadd.f32 %v4786, %v4958
  %v4981 = vadd.f32 %v4787, %v4963
  %v4982 = vld [vmem:[%s3020 + $0x1] sm:$0xff]
  %v4983 = vld [vmem:[%s3020 + $0x11] sm:$0xff]
  %v4984 = vld [vmem:[%s3020 + $0x21] sm:$0xff]
  %v4985 = vld [vmem:[%s3020 + $0x31] sm:$0xff]
  %v4986 = vld [vmem:[%s3020 + $0x41] sm:$0xff]
  %v4987 = vld [vmem:[%s3020 + $0x51] sm:$0xff]
  %v4988 = vld [vmem:[%s3020 + $0x61] sm:$0xff]
  %v4989 = vld [vmem:[%s3020 + $0x71] sm:$0xff]
  %v4990 = vld [vmem:[%s3020 + $0xa1] sm:$0xff]
  %v4991 = vld [vmem:[%s3020 + $0xb1] sm:$0xff]
  %v4992 = vld [vmem:[%s3020 + $0xc1] sm:$0xff]
  %v4993 = vld [vmem:[%s3020 + $0xd1] sm:$0xff]
  %v4994 = vld [vmem:[%s3020 + $0xe1] sm:$0xff]
  %v4995 = vld [vmem:[%s3020 + $0xf1] sm:$0xff]
  %v4996 = vld [vmem:[%s3020 + $0x101] sm:$0xff]
  %v4997 = vld [vmem:[%s3020 + $0x111] sm:$0xff]
  %s4998 = scalar_lea.vmem %s2, 2048
  %v4999 = vld [vmem:[%s4998] sm:$0xff]
  %v5000 = vld [vmem:[%s4998 + $0x8] sm:$0xff]
  %v5001 = vld [vmem:[%s4998 + $0x10] sm:$0xff]
  %v5002 = vld [vmem:[%s4998 + $0x18] sm:$0xff]
  %v5003 = vld [vmem:[%s4998 + $0x20] sm:$0xff]
  %v5004 = vld [vmem:[%s4998 + $0x28] sm:$0xff]
  %v5005 = vld [vmem:[%s4998 + $0x30] sm:$0xff]
  %v5006 = vld [vmem:[%s4998 + $0x38] sm:$0xff]
  %v5007 = vld [vmem:[%s4998 + $0x40] sm:$0xff]
  %v5008 = vld [vmem:[%s4998 + $0x48] sm:$0xff]
  %v5009 = vld [vmem:[%s4998 + $0x50] sm:$0xff]
  %v5010 = vld [vmem:[%s4998 + $0x58] sm:$0xff]
  %v5011 = vld [vmem:[%s4998 + $0x60] sm:$0xff]
  %v5012 = vld [vmem:[%s4998 + $0x68] sm:$0xff]
  %v5013 = vld [vmem:[%s4998 + $0x70] sm:$0xff]
  %v5014 = vld [vmem:[%s4998 + $0x78] sm:$0xff]
  %5015 = vmatprep.subr.mxu0 0.0
  %5016 = vmatpush1.msra.mxu0 %v5014
  %5017 = vmatprep.subr.mxu0 0.0
  %5018 = vmatpush1.msra.mxu0 %v5013
  %5019 = vmatprep.subr.mxu0 0.0
  %5020 = vmatpush1.msra.mxu0 %v5012
  %5021 = vmatprep.subr.mxu0 0.0
  %5022 = vmatpush1.msra.mxu0 %v5011
  %5023 = vmatprep.subr.mxu0 0.0
  %5024 = vmatpush1.msra.mxu0 %v5010
  %5025 = vmatprep.subr.mxu0 0.0
  %5026 = vmatpush1.msra.mxu0 %v5009
  %5027 = vmatprep.subr.mxu0 0.0
  %5028 = vmatpush1.msra.mxu0 %v5008
  %5029 = vmatprep.subr.mxu0 0.0
  %5030 = vmatpush1.msra.mxu0 %v5007
  %5031 = vmatprep.subr.mxu0 0.0
  %5032 = vmatpush1.msra.mxu0 %v5006
  %5033 = vmatprep.subr.mxu0 0.0
  %5034 = vmatpush1.msra.mxu0 %v5005
  %5035 = vmatprep.subr.mxu0 0.0
  %5036 = vmatpush1.msra.mxu0 %v5004
  %5037 = vmatprep.subr.mxu0 0.0
  %5038 = vmatpush1.msra.mxu0 %v5003
  %5039 = vmatprep.subr.mxu0 0.0
  %5040 = vmatpush1.msra.mxu0 %v5002
  %5041 = vmatprep.subr.mxu0 0.0
  %5042 = vmatpush1.msra.mxu0 %v5001
  %5043 = vmatprep.subr.mxu0 0.0
  %5044 = vmatpush1.msra.mxu0 %v5000
  %5045 = vmatprep.subr.mxu0 0.0
  %5046 = vmatpush1.msra.mxu0 %v4999
  %5047 = vmatprep.subr.mxu0 0.0
  %5048 = vmatpush2.msra.mxu0 0.0
  %5049 = vmatprep.subr.mxu0 0.0
  %5050 = vmatpush2.msra.mxu0 0.0
  %5051 = vmatprep.subr.mxu0 0.0
  %5052 = vmatpush2.msra.mxu0 0.0
  %5053 = vmatprep.subr.mxu0 0.0
  %5054 = vmatpush2.msra.mxu0 0.0
  %5055 = vmatprep.subr.mxu0 0.0
  %5056 = vmatpush2.msra.mxu0 0.0
  %5057 = vmatprep.subr.mxu0 0.0
  %5058 = vmatpush2.msra.mxu0 0.0
  %5059 = vmatprep.subr.mxu0 0.0
  %5060 = vmatpush2.msra.mxu0 0.0
  %5061 = vmatprep.subr.mxu0 0.0
  %5062 = vmatpush2.msra.mxu0 0.0
  %5063 = vmatprep.subr.mxu0 0.0
  %5064 = vmatpush2.msra.mxu0 0.0
  %5065 = vmatprep.subr.mxu0 0.0
  %5066 = vmatpush2.msra.mxu0 0.0
  %5067 = vmatprep.subr.mxu0 0.0
  %5068 = vmatpush2.msra.mxu0 0.0
  %5069 = vmatprep.subr.mxu0 0.0
  %5070 = vmatpush2.msra.mxu0 0.0
  %5071 = vmatprep.subr.mxu0 0.0
  %5072 = vmatpush2.msra.mxu0 0.0
  %5073 = vmatprep.subr.mxu0 0.0
  %5074 = vmatpush2.msra.mxu0 0.0
  %5075 = vmatprep.subr.mxu0 0.0
  %5076 = vmatpush2.msra.mxu0 0.0
  %5077 = vmatprep.subr.mxu0 0.0
  %5078 = vmatpush2.msra.mxu0 0.0
  %5079 = vmatprep.mubr.f32.mxu0 0.0
  %5080 = vmatmul.mubr.f32.gmra.mxu0 %v4982
  %v5081 = vpop.f32.mrf.mxu0
  %v5082 = vadd.f32 0.0, %v5081
  %v5083 = vpop.f32.mrf.mxu0
  %5084 = vmatprep.mubr.f32.mxu0 0.0
  %5085 = vmatmul.mubr.f32.gmra.mxu0 %v4983
  %v5086 = vpop.f32.mrf.mxu0
  %v5087 = vadd.f32 0.0, %v5086
  %v5088 = vpop.f32.mrf.mxu0
  %5089 = vmatprep.mubr.f32.mxu0 0.0
  %5090 = vmatmul.mubr.f32.gmra.mxu0 %v4984
  %v5091 = vpop.f32.mrf.mxu0
  %v5092 = vadd.f32 0.0, %v5091
  %v5093 = vpop.f32.mrf.mxu0
  %5094 = vmatprep.mubr.f32.mxu0 0.0
  %5095 = vmatmul.mubr.f32.gmra.mxu0 %v4985
  %v5096 = vpop.f32.mrf.mxu0
  %v5097 = vadd.f32 0.0, %v5096
  %v5098 = vpop.f32.mrf.mxu0
  %5099 = vmatprep.mubr.f32.mxu0 0.0
  %5100 = vmatmul.mubr.f32.gmra.mxu0 %v4986
  %v5101 = vpop.f32.mrf.mxu0
  %v5102 = vadd.f32 0.0, %v5101
  %v5103 = vpop.f32.mrf.mxu0
  %5104 = vmatprep.mubr.f32.mxu0 0.0
  %5105 = vmatmul.mubr.f32.gmra.mxu0 %v4987
  %v5106 = vpop.f32.mrf.mxu0
  %v5107 = vadd.f32 0.0, %v5106
  %v5108 = vpop.f32.mrf.mxu0
  %5109 = vmatprep.mubr.f32.mxu0 0.0
  %5110 = vmatmul.mubr.f32.gmra.mxu0 %v4988
  %v5111 = vpop.f32.mrf.mxu0
  %v5112 = vadd.f32 0.0, %v5111
  %v5113 = vpop.f32.mrf.mxu0
  %5114 = vmatprep.mubr.f32.mxu0 0.0
  %5115 = vmatmul.mubr.f32.gmra.mxu0 %v4989
  %v5116 = vpop.f32.mrf.mxu0
  %v5117 = vadd.f32 0.0, %v5116
  %v5118 = vpop.f32.mrf.mxu0
  %5119 = vmatprep.mubr.f32.mxu0 0.0
  %5120 = vmatmul.mubr.f32.gmra.mxu0 %v4990
  %v5121 = vpop.f32.mrf.mxu0
  %v5122 = vadd.f32 0.0, %v5121
  %v5123 = vpop.f32.mrf.mxu0
  %5124 = vmatprep.mubr.f32.mxu0 0.0
  %5125 = vmatmul.mubr.f32.gmra.mxu0 %v4991
  %v5126 = vpop.f32.mrf.mxu0
  %v5127 = vadd.f32 0.0, %v5126
  %v5128 = vpop.f32.mrf.mxu0
  %5129 = vmatprep.mubr.f32.mxu0 0.0
  %5130 = vmatmul.mubr.f32.gmra.mxu0 %v4992
  %v5131 = vpop.f32.mrf.mxu0
  %v5132 = vadd.f32 0.0, %v5131
  %v5133 = vpop.f32.mrf.mxu0
  %5134 = vmatprep.mubr.f32.mxu0 0.0
  %5135 = vmatmul.mubr.f32.gmra.mxu0 %v4993
  %v5136 = vpop.f32.mrf.mxu0
  %v5137 = vadd.f32 0.0, %v5136
  %v5138 = vpop.f32.mrf.mxu0
  %5139 = vmatprep.mubr.f32.mxu0 0.0
  %5140 = vmatmul.mubr.f32.gmra.mxu0 %v4994
  %v5141 = vpop.f32.mrf.mxu0
  %v5142 = vadd.f32 0.0, %v5141
  %v5143 = vpop.f32.mrf.mxu0
  %5144 = vmatprep.mubr.f32.mxu0 0.0
  %5145 = vmatmul.mubr.f32.gmra.mxu0 %v4995
  %v5146 = vpop.f32.mrf.mxu0
  %v5147 = vadd.f32 0.0, %v5146
  %v5148 = vpop.f32.mrf.mxu0
  %5149 = vmatprep.mubr.f32.mxu0 0.0
  %5150 = vmatmul.mubr.f32.gmra.mxu0 %v4996
  %v5151 = vpop.f32.mrf.mxu0
  %v5152 = vadd.f32 0.0, %v5151
  %v5153 = vpop.f32.mrf.mxu0
  %5154 = vmatprep.mubr.f32.mxu0 0.0
  %5155 = vmatmul.mubr.f32.gmra.mxu0 %v4997
  %v5156 = vpop.f32.mrf.mxu0
  %v5157 = vadd.f32 0.0, %v5156
  %v5158 = vpop.f32.mrf.mxu0
  %5159 = vdwg.mxu0
  %v5160 = vadd.f32 %v4966, %v5082
  %v5161 = vadd.f32 %v4967, %v5087
  %v5162 = vadd.f32 %v4968, %v5092
  %v5163 = vadd.f32 %v4969, %v5097
  %v5164 = vadd.f32 %v4970, %v5102
  %v5165 = vadd.f32 %v4971, %v5107
  %v5166 = vadd.f32 %v4972, %v5112
  %v5167 = vadd.f32 %v4973, %v5117
  %v5168 = vadd.f32 %v4974, %v5122
  %v5169 = vadd.f32 %v4975, %v5127
  %v5170 = vadd.f32 %v4976, %v5132
  %v5171 = vadd.f32 %v4977, %v5137
  %v5172 = vadd.f32 %v4978, %v5142
  %v5173 = vadd.f32 %v4979, %v5147
  %v5174 = vadd.f32 %v4980, %v5152
  %v5175 = vadd.f32 %v4981, %v5157
  %v5176 = vld [vmem:[%s3020 + $0x2] sm:$0xff]
  %v5177 = vld [vmem:[%s3020 + $0x12] sm:$0xff]
  %v5178 = vld [vmem:[%s3020 + $0x22] sm:$0xff]
  %v5179 = vld [vmem:[%s3020 + $0x32] sm:$0xff]
  %v5180 = vld [vmem:[%s3020 + $0x42] sm:$0xff]
  %v5181 = vld [vmem:[%s3020 + $0x52] sm:$0xff]
  %v5182 = vld [vmem:[%s3020 + $0x62] sm:$0xff]
  %v5183 = vld [vmem:[%s3020 + $0x72] sm:$0xff]
  %v5184 = vld [vmem:[%s3020 + $0xa2] sm:$0xff]
  %v5185 = vld [vmem:[%s3020 + $0xb2] sm:$0xff]
  %v5186 = vld [vmem:[%s3020 + $0xc2] sm:$0xff]
  %v5187 = vld [vmem:[%s3020 + $0xd2] sm:$0xff]
  %v5188 = vld [vmem:[%s3020 + $0xe2] sm:$0xff]
  %v5189 = vld [vmem:[%s3020 + $0xf2] sm:$0xff]
  %v5190 = vld [vmem:[%s3020 + $0x102] sm:$0xff]
  %v5191 = vld [vmem:[%s3020 + $0x112] sm:$0xff]
  %s5192 = scalar_lea.vmem %s2, 2176
  %v5193 = vld [vmem:[%s5192] sm:$0xff]
  %v5194 = vld [vmem:[%s5192 + $0x8] sm:$0xff]
  %v5195 = vld [vmem:[%s5192 + $0x10] sm:$0xff]
  %v5196 = vld [vmem:[%s5192 + $0x18] sm:$0xff]
  %v5197 = vld [vmem:[%s5192 + $0x20] sm:$0xff]
  %v5198 = vld [vmem:[%s5192 + $0x28] sm:$0xff]
  %v5199 = vld [vmem:[%s5192 + $0x30] sm:$0xff]
  %v5200 = vld [vmem:[%s5192 + $0x38] sm:$0xff]
  %v5201 = vld [vmem:[%s5192 + $0x40] sm:$0xff]
  %v5202 = vld [vmem:[%s5192 + $0x48] sm:$0xff]
  %v5203 = vld [vmem:[%s5192 + $0x50] sm:$0xff]
  %v5204 = vld [vmem:[%s5192 + $0x58] sm:$0xff]
  %v5205 = vld [vmem:[%s5192 + $0x60] sm:$0xff]
  %v5206 = vld [vmem:[%s5192 + $0x68] sm:$0xff]
  %v5207 = vld [vmem:[%s5192 + $0x70] sm:$0xff]
  %v5208 = vld [vmem:[%s5192 + $0x78] sm:$0xff]
  %5209 = vmatprep.subr.mxu0 0.0
  %5210 = vmatpush1.msra.mxu0 %v5208
  %5211 = vmatprep.subr.mxu0 0.0
  %5212 = vmatpush1.msra.mxu0 %v5207
  %5213 = vmatprep.subr.mxu0 0.0
  %5214 = vmatpush1.msra.mxu0 %v5206
  %5215 = vmatprep.subr.mxu0 0.0
  %5216 = vmatpush1.msra.mxu0 %v5205
  %5217 = vmatprep.subr.mxu0 0.0
  %5218 = vmatpush1.msra.mxu0 %v5204
  %5219 = vmatprep.subr.mxu0 0.0
  %5220 = vmatpush1.msra.mxu0 %v5203
  %5221 = vmatprep.subr.mxu0 0.0
  %5222 = vmatpush1.msra.mxu0 %v5202
  %5223 = vmatprep.subr.mxu0 0.0
  %5224 = vmatpush1.msra.mxu0 %v5201
  %5225 = vmatprep.subr.mxu0 0.0
  %5226 = vmatpush1.msra.mxu0 %v5200
  %5227 = vmatprep.subr.mxu0 0.0
  %5228 = vmatpush1.msra.mxu0 %v5199
  %5229 = vmatprep.subr.mxu0 0.0
  %5230 = vmatpush1.msra.mxu0 %v5198
  %5231 = vmatprep.subr.mxu0 0.0
  %5232 = vmatpush1.msra.mxu0 %v5197
  %5233 = vmatprep.subr.mxu0 0.0
  %5234 = vmatpush1.msra.mxu0 %v5196
  %5235 = vmatprep.subr.mxu0 0.0
  %5236 = vmatpush1.msra.mxu0 %v5195
  %5237 = vmatprep.subr.mxu0 0.0
  %5238 = vmatpush1.msra.mxu0 %v5194
  %5239 = vmatprep.subr.mxu0 0.0
  %5240 = vmatpush1.msra.mxu0 %v5193
  %5241 = vmatprep.subr.mxu0 0.0
  %5242 = vmatpush2.msra.mxu0 0.0
  %5243 = vmatprep.subr.mxu0 0.0
  %5244 = vmatpush2.msra.mxu0 0.0
  %5245 = vmatprep.subr.mxu0 0.0
  %5246 = vmatpush2.msra.mxu0 0.0
  %5247 = vmatprep.subr.mxu0 0.0
  %5248 = vmatpush2.msra.mxu0 0.0
  %5249 = vmatprep.subr.mxu0 0.0
  %5250 = vmatpush2.msra.mxu0 0.0
  %5251 = vmatprep.subr.mxu0 0.0
  %5252 = vmatpush2.msra.mxu0 0.0
  %5253 = vmatprep.subr.mxu0 0.0
  %5254 = vmatpush2.msra.mxu0 0.0
  %5255 = vmatprep.subr.mxu0 0.0
  %5256 = vmatpush2.msra.mxu0 0.0
  %5257 = vmatprep.subr.mxu0 0.0
  %5258 = vmatpush2.msra.mxu0 0.0
  %5259 = vmatprep.subr.mxu0 0.0
  %5260 = vmatpush2.msra.mxu0 0.0
  %5261 = vmatprep.subr.mxu0 0.0
  %5262 = vmatpush2.msra.mxu0 0.0
  %5263 = vmatprep.subr.mxu0 0.0
  %5264 = vmatpush2.msra.mxu0 0.0
  %5265 = vmatprep.subr.mxu0 0.0
  %5266 = vmatpush2.msra.mxu0 0.0
  %5267 = vmatprep.subr.mxu0 0.0
  %5268 = vmatpush2.msra.mxu0 0.0
  %5269 = vmatprep.subr.mxu0 0.0
  %5270 = vmatpush2.msra.mxu0 0.0
  %5271 = vmatprep.subr.mxu0 0.0
  %5272 = vmatpush2.msra.mxu0 0.0
  %5273 = vmatprep.mubr.f32.mxu0 0.0
  %5274 = vmatmul.mubr.f32.gmra.mxu0 %v5176
  %v5275 = vpop.f32.mrf.mxu0
  %v5276 = vadd.f32 0.0, %v5275
  %v5277 = vpop.f32.mrf.mxu0
  %5278 = vmatprep.mubr.f32.mxu0 0.0
  %5279 = vmatmul.mubr.f32.gmra.mxu0 %v5177
  %v5280 = vpop.f32.mrf.mxu0
  %v5281 = vadd.f32 0.0, %v5280
  %v5282 = vpop.f32.mrf.mxu0
  %5283 = vmatprep.mubr.f32.mxu0 0.0
  %5284 = vmatmul.mubr.f32.gmra.mxu0 %v5178
  %v5285 = vpop.f32.mrf.mxu0
  %v5286 = vadd.f32 0.0, %v5285
  %v5287 = vpop.f32.mrf.mxu0
  %5288 = vmatprep.mubr.f32.mxu0 0.0
  %5289 = vmatmul.mubr.f32.gmra.mxu0 %v5179
  %v5290 = vpop.f32.mrf.mxu0
  %v5291 = vadd.f32 0.0, %v5290
  %v5292 = vpop.f32.mrf.mxu0
  %5293 = vmatprep.mubr.f32.mxu0 0.0
  %5294 = vmatmul.mubr.f32.gmra.mxu0 %v5180
  %v5295 = vpop.f32.mrf.mxu0
  %v5296 = vadd.f32 0.0, %v5295
  %v5297 = vpop.f32.mrf.mxu0
  %5298 = vmatprep.mubr.f32.mxu0 0.0
  %5299 = vmatmul.mubr.f32.gmra.mxu0 %v5181
  %v5300 = vpop.f32.mrf.mxu0
  %v5301 = vadd.f32 0.0, %v5300
  %v5302 = vpop.f32.mrf.mxu0
  %5303 = vmatprep.mubr.f32.mxu0 0.0
  %5304 = vmatmul.mubr.f32.gmra.mxu0 %v5182
  %v5305 = vpop.f32.mrf.mxu0
  %v5306 = vadd.f32 0.0, %v5305
  %v5307 = vpop.f32.mrf.mxu0
  %5308 = vmatprep.mubr.f32.mxu0 0.0
  %5309 = vmatmul.mubr.f32.gmra.mxu0 %v5183
  %v5310 = vpop.f32.mrf.mxu0
  %v5311 = vadd.f32 0.0, %v5310
  %v5312 = vpop.f32.mrf.mxu0
  %5313 = vmatprep.mubr.f32.mxu0 0.0
  %5314 = vmatmul.mubr.f32.gmra.mxu0 %v5184
  %v5315 = vpop.f32.mrf.mxu0
  %v5316 = vadd.f32 0.0, %v5315
  %v5317 = vpop.f32.mrf.mxu0
  %5318 = vmatprep.mubr.f32.mxu0 0.0
  %5319 = vmatmul.mubr.f32.gmra.mxu0 %v5185
  %v5320 = vpop.f32.mrf.mxu0
  %v5321 = vadd.f32 0.0, %v5320
  %v5322 = vpop.f32.mrf.mxu0
  %5323 = vmatprep.mubr.f32.mxu0 0.0
  %5324 = vmatmul.mubr.f32.gmra.mxu0 %v5186
  %v5325 = vpop.f32.mrf.mxu0
  %v5326 = vadd.f32 0.0, %v5325
  %v5327 = vpop.f32.mrf.mxu0
  %5328 = vmatprep.mubr.f32.mxu0 0.0
  %5329 = vmatmul.mubr.f32.gmra.mxu0 %v5187
  %v5330 = vpop.f32.mrf.mxu0
  %v5331 = vadd.f32 0.0, %v5330
  %v5332 = vpop.f32.mrf.mxu0
  %5333 = vmatprep.mubr.f32.mxu0 0.0
  %5334 = vmatmul.mubr.f32.gmra.mxu0 %v5188
  %v5335 = vpop.f32.mrf.mxu0
  %v5336 = vadd.f32 0.0, %v5335
  %v5337 = vpop.f32.mrf.mxu0
  %5338 = vmatprep.mubr.f32.mxu0 0.0
  %5339 = vmatmul.mubr.f32.gmra.mxu0 %v5189
  %v5340 = vpop.f32.mrf.mxu0
  %v5341 = vadd.f32 0.0, %v5340
  %v5342 = vpop.f32.mrf.mxu0
  %5343 = vmatprep.mubr.f32.mxu0 0.0
  %5344 = vmatmul.mubr.f32.gmra.mxu0 %v5190
  %v5345 = vpop.f32.mrf.mxu0
  %v5346 = vadd.f32 0.0, %v5345
  %v5347 = vpop.f32.mrf.mxu0
  %5348 = vmatprep.mubr.f32.mxu0 0.0
  %5349 = vmatmul.mubr.f32.gmra.mxu0 %v5191
  %v5350 = vpop.f32.mrf.mxu0
  %v5351 = vadd.f32 0.0, %v5350
  %v5352 = vpop.f32.mrf.mxu0
  %5353 = vdwg.mxu0
  %v5354 = vadd.f32 %v5160, %v5276
  %v5355 = vadd.f32 %v5161, %v5281
  %v5356 = vadd.f32 %v5162, %v5286
  %v5357 = vadd.f32 %v5163, %v5291
  %v5358 = vadd.f32 %v5164, %v5296
  %v5359 = vadd.f32 %v5165, %v5301
  %v5360 = vadd.f32 %v5166, %v5306
  %v5361 = vadd.f32 %v5167, %v5311
  %v5362 = vadd.f32 %v5168, %v5316
  %v5363 = vadd.f32 %v5169, %v5321
  %v5364 = vadd.f32 %v5170, %v5326
  %v5365 = vadd.f32 %v5171, %v5331
  %v5366 = vadd.f32 %v5172, %v5336
  %v5367 = vadd.f32 %v5173, %v5341
  %v5368 = vadd.f32 %v5174, %v5346
  %v5369 = vadd.f32 %v5175, %v5351
  %v5370 = vld [vmem:[%s3 + $0x3] sm:$0x1]
  %v5371 = vlaneseq
  %v5372 = vshrl.u32 %v5371, 7
  %v5373 = vsub.s32 0, %v5372
  %v5374 = vrot.slane %v5370, %v5373
  %v5375 = vadd.f32 %v5354, %v5374
  %v5376 = vadd.f32 %v5355, %v5374
  %v5377 = vadd.f32 %v5356, %v5374
  %v5378 = vadd.f32 %v5357, %v5374
  %v5379 = vadd.f32 %v5358, %v5374
  %v5380 = vadd.f32 %v5359, %v5374
  %v5381 = vadd.f32 %v5360, %v5374
  %v5382 = vadd.f32 %v5361, %v5374
  %v5383 = vadd.f32 %v5362, %v5374
  %v5384 = vadd.f32 %v5363, %v5374
  %v5385 = vadd.f32 %v5364, %v5374
  %v5386 = vadd.f32 %v5365, %v5374
  %v5387 = vadd.f32 %v5366, %v5374
  %v5388 = vadd.f32 %v5367, %v5374
  %v5389 = vadd.f32 %v5368, %v5374
  %v5390 = vadd.f32 %v5369, %v5374
  %v5391 = vmax.f32 %v5375, 0.0
  %v5392 = vmax.f32 %v5376, 0.0
  %v5393 = vmax.f32 %v5377, 0.0
  %v5394 = vmax.f32 %v5378, 0.0
  %v5395 = vmax.f32 %v5379, 0.0
  %v5396 = vmax.f32 %v5380, 0.0
  %v5397 = vmax.f32 %v5381, 0.0
  %v5398 = vmax.f32 %v5382, 0.0
  %v5399 = vmax.f32 %v5383, 0.0
  %v5400 = vmax.f32 %v5384, 0.0
  %v5401 = vmax.f32 %v5385, 0.0
  %v5402 = vmax.f32 %v5386, 0.0
  %v5403 = vmax.f32 %v5387, 0.0
  %v5404 = vmax.f32 %v5388, 0.0
  %v5405 = vmax.f32 %v5389, 0.0
  %v5406 = vmax.f32 %v5390, 0.0
  %v5407 = vadd.f32 %v5391, %v1816
  %v5408 = vadd.f32 %v5392, %v1817
  %v5409 = vadd.f32 %v5393, %v1818
  %v5410 = vadd.f32 %v5394, %v1819
  %v5411 = vadd.f32 %v5395, %v1820
  %v5412 = vadd.f32 %v5396, %v1821
  %v5413 = vadd.f32 %v5397, %v1822
  %v5414 = vadd.f32 %v5398, %v1823
  %v5415 = vadd.f32 %v5399, %v1824
  %v5416 = vadd.f32 %v5400, %v1825
  %v5417 = vadd.f32 %v5401, %v1826
  %v5418 = vadd.f32 %v5402, %v1827
  %v5419 = vadd.f32 %v5403, %v1828
  %v5420 = vadd.f32 %v5404, %v1829
  %v5421 = vadd.f32 %v5405, %v1830
  %v5422 = vadd.f32 %v5406, %v1831
  %5423 = vst [vmem:[%s4] sm:$0xff] %v5407
  %5424 = vst [vmem:[%s4 + $0x8] sm:$0xff] %v5408
  %5425 = vst [vmem:[%s4 + $0x10] sm:$0xff] %v5409
  %5426 = vst [vmem:[%s4 + $0x18] sm:$0xff] %v5410
  %5427 = vst [vmem:[%s4 + $0x20] sm:$0xff] %v5411
  %5428 = vst [vmem:[%s4 + $0x28] sm:$0xff] %v5412
  %5429 = vst [vmem:[%s4 + $0x30] sm:$0xff] %v5413
  %5430 = vst [vmem:[%s4 + $0x38] sm:$0xff] %v5414
  %5431 = vst [vmem:[%s4 + $0x40] sm:$0xff] %v5415
  %5432 = vst [vmem:[%s4 + $0x48] sm:$0xff] %v5416
  %5433 = vst [vmem:[%s4 + $0x50] sm:$0xff] %v5417
  %5434 = vst [vmem:[%s4 + $0x58] sm:$0xff] %v5418
  %5435 = vst [vmem:[%s4 + $0x60] sm:$0xff] %v5419
  %5436 = vst [vmem:[%s4 + $0x68] sm:$0xff] %v5420
  %5437 = vst [vmem:[%s4 + $0x70] sm:$0xff] %v5421
  %5438 = vst [vmem:[%s4 + $0x78] sm:$0xff] %v5422
  // Predicated region
  $region18: #{make_layer_forward.1} parent=0 // pred_check
    _
  $region19: #{make_layer_forward.1} parent=0 // pred_check_branch
    %5440 = sbr.rel (0) target = $region21
  $region20: #{make_layer_forward.1} parent=0 // pred_region
    _
  $region21: #{make_layer_forward.1} parent=0 // pred_fallthru
    _
  // Predicated region
  $region22: #{make_layer_forward.1} parent=0 // pred_check
    _
  $region23: #{make_layer_forward.1} parent=0 // pred_check_branch
    %5442 = sbr.rel (0) target = $region25
  $region24: #{make_layer_forward.1} parent=0 // pred_region
    _
  $region25: #{make_layer_forward.1} parent=0 // pred_fallthru
    _

</llo_original>
